<compile_context>
chip_gen: v7x
topology: tpu7x:2x2x1
jax: 0.10.0
libtpu: 0.0.40
codegen_flags: <defaults>
</compile_context>

<pallas_src>
import jax
import jax.numpy as jnp
from jax.experimental import pallas as pl
from jax.experimental.pallas import tpu as pltpu

BN_EPS = 1e-5
MXU_DTYPE = jnp.float32    # jnp.bfloat16 => ~2-3x MXU rate (needs looser tol)
SLAB_DTYPE = jnp.float32   # jnp.bfloat16 => ~2x less inter-stage HBM traffic


# --------------------------------- wrapper ---------------------------------

def basic_block_forward(x_nchw, params):
    """x_nchw: (B, C, H, W) float32 (PyTorch layout).  Returns (B, C, H, W)."""
    w1, b1, g1, be1, w2, b2, g2, be2 = params   # b1/b2 cancelled exactly by BN
    B, Cin, H, W = x_nchw.shape
    Cout = w1.shape[-1]
    # TODO(synk): stride>1 / downsample branch of BasicBlock not implemented.
    assert Cin == Cout, "downsample=None requires inplanes == planes"
    HW = H * W
    PADW = W + 1                    # flat-index halo: |dh*W + dw| <= W + 1
    inv_hw = 1.0 / HW
    inv_n = 1.0 / (B * HW)

    # Tap-major transposed im2col weights: column index = (kh*3 + kw)*Cin + ci.
    w1t = w1.reshape(9 * Cin, Cout).T            # (Cout, 9*Cin)
    w2t = w2.reshape(9 * Cout, Cout).T
    g1c, be1c = g1.reshape(Cout, 1), be1.reshape(Cout, 1)
    g2c, be2c = g2.reshape(Cout, 1), be2.reshape(Cout, 1)
    x_flat = x_nchw.reshape(B, Cin, HW)          # free metadata reshape

    # ----------------------- in-kernel building blocks -----------------------

    def _emit_conv3x3(src, w_ref, xpad_ref, patch_ref):
        """src: (C, H*W) channel-major image -> (Cout, H*W) f32 3x3 conv."""
        C = src.shape[0]
        # Zero-bordered flat image in scratch (borders rewritten each step so
        # the kernel stays correct under megacore partitioning of the grid).
        xpad_ref[:, 0:PADW] = jnp.zeros((C, PADW), jnp.float32)
        xpad_ref[:, PADW + HW:2 * PADW + HW] = jnp.zeros((C, PADW), jnp.float32)
        xpad_ref[:, PADW:PADW + HW] = src.astype(jnp.float32)
        colv = jax.lax.broadcasted_iota(jnp.int32, (1, HW), 1) % W
        t = 0
        for dh in (-1, 0, 1):
            for dw in (-1, 0, 1):
                d = dh * W + dw
                v = xpad_ref[:, PADW + d:PADW + d + HW]      # (C, HW)
                # Column (w) wrap-around of the flat shift is masked; the row
                # (h) out-of-range taps already read the zero border.
                if dw != 0:
                    valid = jnp.logical_and(colv + dw >= 0, colv + dw < W)
                    v = jnp.where(valid, v, 0.0)
                patch_ref[t * C:(t + 1) * C, :] = v
                t += 1
        return jnp.dot(w_ref[...].astype(MXU_DTYPE),
                       patch_ref[...].astype(MXU_DTYPE),
                       precision=jax.lax.Precision.HIGHEST,
                       preferred_element_type=jnp.float32)   # (Cout, HW)

    def _emit_stats(y, st_ref):
        """Per-image BN partials from the f32 accumulator: [sum, sum((y-m)^2)]."""
        s = jnp.sum(y, axis=1, keepdims=True)                # (C, 1)
        d = y - s * inv_hw
        st_ref[0, :, 0:1] = s
        st_ref[0, :, 1:2] = jnp.sum(d * d, axis=1, keepdims=True)

    def _fold_bn(stats, gamma, beta):
        """Global training-mode BN fold from per-image partials (Chan et al.)."""
        s_i = stats[:, :, 0:1]                               # (B, C, 1) sums
        ss_i = stats[:, :, 1:2]                              # (B, C, 1) centered ssq
        mean = jnp.sum(s_i, axis=0) * inv_n                  # (C, 1) global mean
        m_i = s_i * inv_hw
        var = (jnp.sum(ss_i, axis=0)
               + HW * jnp.sum((m_i - mean) ** 2, axis=0)) * inv_n
        var = jnp.maximum(var, 0.0)                          # biased (training) var
        scale = gamma * jax.lax.rsqrt(var + BN_EPS)          # (C, 1)
        shift = beta - mean * scale
        return scale, shift

    # -------------------------------- kernels --------------------------------

    def conv1_kernel(x_ref, w_ref, y_ref, st_ref, xpad_ref, patch_ref):
        y = _emit_conv3x3(x_ref[0], w_ref, xpad_ref, patch_ref)
        _emit_stats(y, st_ref)
        y_ref[0] = y.astype(y_ref.dtype)

    def stage2_kernel(st1_ref, g_ref, be_ref, y1_ref, w_ref,
                      y2_ref, st2_ref, xpad_ref, patch_ref):
        scale, shift = _fold_bn(st1_ref[...], g_ref[...], be_ref[...])
        a = jnp.maximum(y1_ref[0].astype(jnp.float32) * scale + shift, 0.0)
        y = _emit_conv3x3(a, w_ref, xpad_ref, patch_ref)
        _emit_stats(y, st2_ref)
        y2_ref[0] = y.astype(y2_ref.dtype)

    def stage3_kernel(st2_ref, g_ref, be_ref, y2_ref, x_ref, out_ref):
        scale, shift = _fold_bn(st2_ref[...], g_ref[...], be_ref[...])
        out = y2_ref[0].astype(jnp.float32) * scale + shift + x_ref[0]
        out_ref[0] = jnp.maximum(out, 0.0).astype(out_ref.dtype)

    # ------------------------------ pallas calls ------------------------------

    parallel = pltpu.CompilerParams(dimension_semantics=("parallel",))

    def img_spec(chans):
        return pl.BlockSpec((1, chans, HW), lambda b: (b, 0, 0))

    def full2d(r, c):
        return pl.BlockSpec((r, c), lambda b: (0, 0))

    stats_out = pl.BlockSpec((1, Cout, 2), lambda b: (b, 0, 0))
    stats_in = pl.BlockSpec((B, Cout, 2), lambda b: (0, 0, 0))
    conv_scratch = [pltpu.VMEM((Cout, HW + 2 * PADW), jnp.float32),
                    pltpu.VMEM((9 * Cout, HW), jnp.float32)]

    # --- stage 1: conv1 + per-image BN1 partials -----------------------------
    y1, st1 = pl.pallas_call(
        conv1_kernel,
        out_shape=(jax.ShapeDtypeStruct((B, Cout, HW), SLAB_DTYPE),
                   jax.ShapeDtypeStruct((B, Cout, 2), jnp.float32)),
        grid_spec=pltpu.PrefetchScalarGridSpec(
            num_scalar_prefetch=0, grid=(B,),
            in_specs=[img_spec(Cin), full2d(Cout, 9 * Cin)],
            out_specs=[img_spec(Cout), stats_out],
            scratch_shapes=conv_scratch),
        compiler_params=parallel,
    )(x_flat, w1t)

    # --- stage 2: fold BN1 -> ReLU -> conv2 + per-image BN2 partials ---------
    y2, st2 = pl.pallas_call(
        stage2_kernel,
        out_shape=(jax.ShapeDtypeStruct((B, Cout, HW), SLAB_DTYPE),
                   jax.ShapeDtypeStruct((B, Cout, 2), jnp.float32)),
        grid_spec=pltpu.PrefetchScalarGridSpec(
            num_scalar_prefetch=0, grid=(B,),
            in_specs=[stats_in, full2d(Cout, 1), full2d(Cout, 1),
                      img_spec(Cout), full2d(Cout, 9 * Cout)],
            out_specs=[img_spec(Cout), stats_out],
            scratch_shapes=conv_scratch),
        compiler_params=parallel,
    )(st1, g1c, be1c, y1, w2t)

    # --- stage 3: fold BN2 + residual add + ReLU (lane-dense elementwise) ----
    out_flat = pl.pallas_call(
        stage3_kernel,
        out_shape=jax.ShapeDtypeStruct((B, Cout, HW), jnp.float32),
        grid_spec=pltpu.PrefetchScalarGridSpec(
            num_scalar_prefetch=0, grid=(B,),
            in_specs=[stats_in, full2d(Cout, 1), full2d(Cout, 1),
                      img_spec(Cout), img_spec(Cin)],
            out_specs=img_spec(Cout)),
        compiler_params=parallel,
    )(st2, g2c, be2c, y2, x_flat)

    return out_flat.reshape(B, Cout, H, W)


# ------------------------------ reference path ------------------------------

def ref_forward(x_nchw, params):
    """Pure-JAX reference with identical semantics (conv bias included)."""
    w1, b1, g1, be1, w2, b2, g2, be2 = params

    def conv(x, w, b):
        w4 = w.reshape(3, 3, w.shape[1], w.shape[2])        # HWIO
        y = jax.lax.conv_general_dilated(
            x, w4, window_strides=(1, 1), padding="SAME",
            dimension_numbers=("NCHW", "HWIO", "NCHW"),
            precision=jax.lax.Precision.HIGHEST)
        return y + b.reshape(1, -1, 1, 1)

    def bn(x, g, be):
        m = jnp.mean(x, axis=(0, 2, 3), keepdims=True)
        v = jnp.mean((x - m) ** 2, axis=(0, 2, 3), keepdims=True)
        return (x - m) * jax.lax.rsqrt(v + BN_EPS) * g.reshape(1, -1, 1, 1) \
            + be.reshape(1, -1, 1, 1)

    h = jax.nn.relu(bn(conv(x_nchw, w1, b1), g1, be1))
    h = bn(conv(h, w2, b2), g2, be2)
    return jax.nn.relu(h + x_nchw)


def make_params(key, cin, cout):
    """Deterministic synthetic params matching BasicBlock's shapes."""
    ks = jax.random.split(key, 8)
    w1 = (0.1 * jax.random.normal(ks[0], (3, 3, cin, cout), jnp.float32)
          ).reshape(9, cin, cout)
    b1 = 0.1 * jax.random.normal(ks[1], (1, cout), jnp.float32)
    g1 = 1.0 + 0.1 * jax.random.normal(ks[2], (1, cout), jnp.float32)
    be1 = 0.1 * jax.random.normal(ks[3], (1, cout), jnp.float32)
    w2 = (0.1 * jax.random.normal(ks[4], (3, 3, cout, cout), jnp.float32)
          ).reshape(9, cout, cout)
    b2 = 0.1 * jax.random.normal(ks[5], (1, cout), jnp.float32)
    g2 = 1.0 + 0.1 * jax.random.normal(ks[6], (1, cout), jnp.float32)
    be2 = 0.1 * jax.random.normal(ks[7], (1, cout), jnp.float32)
    return (w1, b1, g1, be1, w2, b2, g2, be2)


if __name__ == "__main__":
    key = jax.random.PRNGKey(0)
    kx, kp = jax.random.split(key)

    B, C, H, W = 2, 4, 16, 16       # inplanes == planes, stride=1, no downsample
    x_nchw = jax.random.normal(kx, (B, C, H, W), jnp.float32)   # PyTorch layout
    params = make_params(kp, C, C)

    fwd = jax.jit(basic_block_forward)
    out = jax.block_until_ready(fwd(x_nchw, params))
    ref = jax.block_until_ready(ref_forward(x_nchw, params))

    assert out.shape == (B, C, H, W)
    err = float(jnp.max(jnp.abs(out - ref)))
    assert jnp.allclose(out, ref, atol=2e-3, rtol=2e-3), f"max abs err = {err}"

    print("KERNEL_OK")
</pallas_src>

<mosaic_0001>
module attributes {stable_mosaic.version = 11 : i64} {
  func.func @stage3_kernel(%arg0: i32, %arg1: memref<2x4x2xf32, #tpu.memory_space<vmem>>, %arg2: memref<4x1xf32, #tpu.memory_space<vmem>>, %arg3: memref<4x1xf32, #tpu.memory_space<vmem>>, %arg4: memref<1x4x256xf32, #tpu.memory_space<vmem>>, %arg5: memref<1x4x256xf32, #tpu.memory_space<vmem>>, %arg6: memref<1x4x256xf32, #tpu.memory_space<vmem>>) attributes {dimension_semantics = [#tpu.dimension_semantics<parallel>], iteration_bounds = array<i64: 2>, scalar_prefetch = 0 : i64, scratch_operands = 0 : i64, tpu.core_type = #tpu.core_type<tc>, window_params = [{pipeline_mode = #tpu.pipeline_mode<synchronous>, transform_indices = @transform_0, window_bounds = array<i64: 2, 4, 2>}, {pipeline_mode = #tpu.pipeline_mode<synchronous>, transform_indices = @transform_1, window_bounds = array<i64: 4, 1>}, {pipeline_mode = #tpu.pipeline_mode<synchronous>, transform_indices = @transform_2, window_bounds = array<i64: 4, 1>}, {transform_indices = @transform_3, window_bounds = array<i64: 1, 4, 256>}, {transform_indices = @transform_4, window_bounds = array<i64: 1, 4, 256>}, {transform_indices = @transform_5, window_bounds = array<i64: 1, 4, 256>}]} {
    %c0 = arith.constant 0 : index
    %c0_0 = arith.constant 0 : index
    %c0_1 = arith.constant 0 : index
    %0 = vector.load %arg1[%c0, %c0_0, %c0_1] : memref<2x4x2xf32, #tpu.memory_space<vmem>>, vector<2x4x2xf32>
    %c0_2 = arith.constant 0 : index
    %c0_3 = arith.constant 0 : index
    %1 = vector.load %arg2[%c0_2, %c0_3] : memref<4x1xf32, #tpu.memory_space<vmem>>, vector<4x1xf32>
    %c0_4 = arith.constant 0 : index
    %c0_5 = arith.constant 0 : index
    %2 = vector.load %arg3[%c0_4, %c0_5] : memref<4x1xf32, #tpu.memory_space<vmem>>, vector<4x1xf32>
    %3 = vector.extract_strided_slice %0 {offsets = [0, 0, 0], sizes = [2, 4, 1], strides = [1, 1, 1]} : vector<2x4x2xf32> to vector<2x4x1xf32>
    %4 = vector.extract_strided_slice %0 {offsets = [0, 0, 1], sizes = [2, 4, 1], strides = [1, 1, 1]} : vector<2x4x2xf32> to vector<2x4x1xf32>
    %cst = arith.constant dense<0.000000e+00> : vector<4x1xf32>
    %5 = vector.multi_reduction <add>, %3, %cst [0] : vector<2x4x1xf32> to vector<4x1xf32>
    %cst_6 = arith.constant 0.001953125 : f32
    %6 = vector.broadcast %cst_6 : f32 to vector<4x1xf32>
    %7 = arith.mulf %5, %6 : vector<4x1xf32>
    %cst_7 = arith.constant 3.906250e-03 : f32
    %8 = vector.broadcast %cst_7 : f32 to vector<2x4x1xf32>
    %9 = arith.mulf %3, %8 : vector<2x4x1xf32>
    %cst_8 = arith.constant dense<0.000000e+00> : vector<4x1xf32>
    %10 = vector.multi_reduction <add>, %4, %cst_8 [0] : vector<2x4x1xf32> to vector<4x1xf32>
    %11 = vector.shape_cast %7 : vector<4x1xf32> to vector<1x4x1xf32>
    %12 = vector.broadcast %11 : vector<1x4x1xf32> to vector<2x4x1xf32>
    %13 = arith.subf %9, %12 : vector<2x4x1xf32>
    %14 = arith.mulf %13, %13 : vector<2x4x1xf32>
    %cst_9 = arith.constant dense<0.000000e+00> : vector<4x1xf32>
    %15 = vector.multi_reduction <add>, %14, %cst_9 [0] : vector<2x4x1xf32> to vector<4x1xf32>
    %cst_10 = arith.constant 2.560000e+02 : f32
    %16 = vector.broadcast %cst_10 : f32 to vector<4x1xf32>
    %17 = arith.mulf %16, %15 : vector<4x1xf32>
    %18 = arith.addf %10, %17 : vector<4x1xf32>
    %cst_11 = arith.constant 0.001953125 : f32
    %19 = vector.broadcast %cst_11 : f32 to vector<4x1xf32>
    %20 = arith.mulf %18, %19 : vector<4x1xf32>
    %cst_12 = arith.constant 0.000000e+00 : f32
    %21 = vector.broadcast %cst_12 : f32 to vector<4x1xf32>
    %22 = arith.maximumf %20, %21 : vector<4x1xf32>
    %cst_13 = arith.constant 9.99999974E-6 : f32
    %23 = vector.broadcast %cst_13 : f32 to vector<4x1xf32>
    %24 = arith.addf %22, %23 : vector<4x1xf32>
    %25 = math.rsqrt %24 : vector<4x1xf32>
    %26 = arith.mulf %1, %25 : vector<4x1xf32>
    %27 = arith.mulf %7, %26 : vector<4x1xf32>
    %28 = arith.subf %2, %27 : vector<4x1xf32>
    %c0_14 = arith.constant 0 : index
    %c0_15 = arith.constant 0 : index
    %c0_16 = arith.constant 0 : index
    %29 = vector.load %arg4[%c0_14, %c0_15, %c0_16] : memref<1x4x256xf32, #tpu.memory_space<vmem>>, vector<1x4x256xf32>
    %30 = vector.shape_cast %29 : vector<1x4x256xf32> to vector<4x256xf32>
    %31 = vector.broadcast %26 : vector<4x1xf32> to vector<4x256xf32>
    %32 = arith.mulf %30, %31 : vector<4x256xf32>
    %33 = vector.broadcast %28 : vector<4x1xf32> to vector<4x256xf32>
    %34 = arith.addf %32, %33 : vector<4x256xf32>
    %c0_17 = arith.constant 0 : index
    %c0_18 = arith.constant 0 : index
    %c0_19 = arith.constant 0 : index
    %35 = vector.load %arg5[%c0_17, %c0_18, %c0_19] : memref<1x4x256xf32, #tpu.memory_space<vmem>>, vector<1x4x256xf32>
    %36 = vector.shape_cast %35 : vector<1x4x256xf32> to vector<4x256xf32>
    %37 = arith.addf %34, %36 : vector<4x256xf32>
    %cst_20 = arith.constant 0.000000e+00 : f32
    %38 = vector.broadcast %cst_20 : f32 to vector<4x256xf32>
    %39 = arith.maximumf %37, %38 : vector<4x256xf32>
    %c0_21 = arith.constant 0 : index
    %c0_22 = arith.constant 0 : index
    %c0_23 = arith.constant 0 : index
    %40 = vector.load %arg6[%c0_21, %c0_22, %c0_23] : memref<1x4x256xf32, #tpu.memory_space<vmem>>, vector<1x4x256xf32>
    %41 = vector.shape_cast %40 : vector<1x4x256xf32> to vector<4x256xf32>
    %42 = vector.shape_cast %39 : vector<4x256xf32> to vector<1x4x256xf32>
    tpu.vector_store %arg6[%c0_21, %c0_22, %c0_23], %42 {strides = array<i32>} : memref<1x4x256xf32, #tpu.memory_space<vmem>>, vector<1x4x256xf32>,
    return
  }
  func.func @transform_0(%arg0: i32) -> (i32, i32, i32) {
    %c0_i32 = arith.constant 0 : i32
    %c0_i32_0 = arith.constant 0 : i32
    %c0_i32_1 = arith.constant 0 : i32
    %c0_i32_2 = arith.constant 0 : i32
    return %c0_i32, %c0_i32_0, %c0_i32_1 : i32, i32, i32
  }
  func.func @transform_1(%arg0: i32) -> (i32, i32) {
    %c0_i32 = arith.constant 0 : i32
    %c0_i32_0 = arith.constant 0 : i32
    %c0_i32_1 = arith.constant 0 : i32
    return %c0_i32, %c0_i32_0 : i32, i32
  }
  func.func @transform_2(%arg0: i32) -> (i32, i32) {
    %c0_i32 = arith.constant 0 : i32
    %c0_i32_0 = arith.constant 0 : i32
    %c0_i32_1 = arith.constant 0 : i32
    return %c0_i32, %c0_i32_0 : i32, i32
  }
  func.func @transform_3(%arg0: i32) -> (i32, i32, i32) {
    %c0_i32 = arith.constant 0 : i32
    %c0_i32_0 = arith.constant 0 : i32
    %c0_i32_1 = arith.constant 0 : i32
    return %arg0, %c0_i32, %c0_i32_0 : i32, i32, i32
  }
  func.func @transform_4(%arg0: i32) -> (i32, i32, i32) {
    %c0_i32 = arith.constant 0 : i32
    %c0_i32_0 = arith.constant 0 : i32
    %c0_i32_1 = arith.constant 0 : i32
    return %arg0, %c0_i32, %c0_i32_0 : i32, i32, i32
  }
  func.func @transform_5(%arg0: i32) -> (i32, i32, i32) {
    %c0_i32 = arith.constant 0 : i32
    %c0_i32_0 = arith.constant 0 : i32
    %c0_i32_1 = arith.constant 0 : i32
    return %arg0, %c0_i32, %c0_i32_0 : i32, i32, i32
  }
}

module attributes {stable_mosaic.version = 11 : i64} {
  func.func @conv1_kernel(%arg0: i32, %arg1: memref<1x4x256xf32, #tpu.memory_space<vmem>>, %arg2: memref<4x36xf32, #tpu.memory_space<vmem>>, %arg3: memref<1x4x256xf32, #tpu.memory_space<vmem>>, %arg4: memref<1x4x2xf32, #tpu.memory_space<vmem>>, %arg5: memref<4x290xf32, #tpu.memory_space<vmem>>, %arg6: memref<36x256xf32, #tpu.memory_space<vmem>>) attributes {dimension_semantics = [#tpu.dimension_semantics<parallel>], iteration_bounds = array<i64: 2>, scalar_prefetch = 0 : i64, scratch_operands = 2 : i64, tpu.core_type = #tpu.core_type<tc>, window_params = [{transform_indices = @transform_0, window_bounds = array<i64: 1, 4, 256>}, {pipeline_mode = #tpu.pipeline_mode<synchronous>, transform_indices = @transform_1, window_bounds = array<i64: 4, 36>}, {transform_indices = @transform_2, window_bounds = array<i64: 1, 4, 256>}, {transform_indices = @transform_3, window_bounds = array<i64: 1, 4, 2>}]} {
    %c0 = arith.constant 0 : index
    %c0_0 = arith.constant 0 : index
    %c0_1 = arith.constant 0 : index
    %0 = vector.load %arg1[%c0, %c0_0, %c0_1] : memref<1x4x256xf32, #tpu.memory_space<vmem>>, vector<1x4x256xf32>
    %1 = vector.shape_cast %0 : vector<1x4x256xf32> to vector<4x256xf32>
    %cst = arith.constant 0.000000e+00 : f32
    %2 = vector.broadcast %cst : f32 to vector<4x17xf32>
    %c0_2 = arith.constant 0 : index
    %c0_3 = arith.constant 0 : index
    %3 = vector.load %arg5[%c0_2, %c0_3] : memref<4x290xf32, #tpu.memory_space<vmem>>, vector<4x17xf32>
    tpu.vector_store %arg5[%c0_2, %c0_3], %2 {strides = array<i32>} : memref<4x290xf32, #tpu.memory_space<vmem>>, vector<4x17xf32>,
    %cst_4 = arith.constant 0.000000e+00 : f32
    %4 = vector.broadcast %cst_4 : f32 to vector<4x17xf32>
    %c0_5 = arith.constant 0 : index
    %c273 = arith.constant 273 : index
    %5 = vector.load %arg5[%c0_5, %c273] : memref<4x290xf32, #tpu.memory_space<vmem>>, vector<4x17xf32>
    tpu.vector_store %arg5[%c0_5, %c273], %4 {strides = array<i32>} : memref<4x290xf32, #tpu.memory_space<vmem>>, vector<4x17xf32>,
    %c0_6 = arith.constant 0 : index
    %c17 = arith.constant 17 : index
    %6 = vector.load %arg5[%c0_6, %c17] : memref<4x290xf32, #tpu.memory_space<vmem>>, vector<4x256xf32>
    tpu.vector_store %arg5[%c0_6, %c17], %1 {strides = array<i32>} : memref<4x290xf32, #tpu.memory_space<vmem>>, vector<4x256xf32>,
    %7 = tpu.iota {dimensions = array<i32: 1>} : vector<1x256xi32>
    %c16_i32 = arith.constant 16 : i32
    %c0_i32 = arith.constant 0 : i32
    %8 = arith.cmpi eq, %c16_i32, %c0_i32 : i32
    %c1_i32 = arith.constant 1 : i32
    %9 = arith.select %8, %c1_i32, %c16_i32 : i32
    %10 = vector.broadcast %9 : i32 to vector<1x256xi32>
    %11 = arith.remsi %7, %10 : vector<1x256xi32>
    %c0_i32_7 = arith.constant 0 : i32
    %12 = vector.broadcast %c0_i32_7 : i32 to vector<1x256xi32>
    %13 = arith.cmpi ne, %11, %12 : vector<1x256xi32>
    %c0_i32_8 = arith.constant 0 : i32
    %14 = vector.broadcast %c0_i32_8 : i32 to vector<1x256xi32>
    %15 = arith.cmpi slt, %11, %14 : vector<1x256xi32>
    %c0_i32_9 = arith.constant 0 : i32
    %16 = arith.cmpi slt, %9, %c0_i32_9 : i32
    %17 = vector.broadcast %16 : i1 to vector<1x256xi1>
    %18 = vector.broadcast %17 : vector<1x256xi1> to vector<1x256xi1>
    %19 = arith.xori %15, %18 : vector<1x256xi1>
    %20 = arith.andi %19, %13 : vector<1x256xi1>
    %21 = vector.broadcast %9 : i32 to vector<1x256xi32>
    %22 = arith.addi %11, %21 : vector<1x256xi32>
    %23 = arith.select %20, %22, %11 : vector<1x256xi1>, vector<1x256xi32>
    %c0_10 = arith.constant 0 : index
    %c0_11 = arith.constant 0 : index
    %24 = vector.load %arg5[%c0_10, %c0_11] : memref<4x290xf32, #tpu.memory_space<vmem>>, vector<4x256xf32>
    %c-1_i32 = arith.constant -1 : i32
    %25 = vector.broadcast %c-1_i32 : i32 to vector<1x256xi32>
    %26 = arith.addi %23, %25 : vector<1x256xi32>
    %c0_i32_12 = arith.constant 0 : i32
    %27 = vector.broadcast %c0_i32_12 : i32 to vector<1x256xi32>
    %28 = arith.cmpi sge, %26, %27 : vector<1x256xi32>
    %c-1_i32_13 = arith.constant -1 : i32
    %29 = vector.broadcast %c-1_i32_13 : i32 to vector<1x256xi32>
    %30 = arith.addi %23, %29 : vector<1x256xi32>
    %c16_i32_14 = arith.constant 16 : i32
    %31 = vector.broadcast %c16_i32_14 : i32 to vector<1x256xi32>
    %32 = arith.cmpi slt, %30, %31 : vector<1x256xi32>
    %33 = arith.andi %28, %32 : vector<1x256xi1>
    %cst_15 = arith.constant 0.000000e+00 : f32
    %34 = vector.shape_cast %33 : vector<1x256xi1> to vector<1x256xi1>
    %35 = vector.broadcast %34 : vector<1x256xi1> to vector<4x256xi1>
    %36 = vector.broadcast %cst_15 : f32 to vector<4x256xf32>
    %37 = arith.select %35, %24, %36 : vector<4x256xi1>, vector<4x256xf32>
    %c0_16 = arith.constant 0 : index
    %c0_17 = arith.constant 0 : index
    %38 = vector.load %arg6[%c0_16, %c0_17] : memref<36x256xf32, #tpu.memory_space<vmem>>, vector<4x256xf32>
    tpu.vector_store %arg6[%c0_16, %c0_17], %37 {strides = array<i32>} : memref<36x256xf32, #tpu.memory_space<vmem>>, vector<4x256xf32>,
    %c0_18 = arith.constant 0 : index
    %c1 = arith.constant 1 : index
    %39 = vector.load %arg5[%c0_18, %c1] : memref<4x290xf32, #tpu.memory_space<vmem>>, vector<4x256xf32>
    %c4 = arith.constant 4 : index
    %c0_19 = arith.constant 0 : index
    %40 = vector.load %arg6[%c4, %c0_19] : memref<36x256xf32, #tpu.memory_space<vmem>>, vector<4x256xf32>
    tpu.vector_store %arg6[%c4, %c0_19], %39 {strides = array<i32>} : memref<36x256xf32, #tpu.memory_space<vmem>>, vector<4x256xf32>,
    %c0_20 = arith.constant 0 : index
    %c2 = arith.constant 2 : index
    %41 = vector.load %arg5[%c0_20, %c2] : memref<4x290xf32, #tpu.memory_space<vmem>>, vector<4x256xf32>
    %c1_i32_21 = arith.constant 1 : i32
    %42 = vector.broadcast %c1_i32_21 : i32 to vector<1x256xi32>
    %43 = arith.addi %23, %42 : vector<1x256xi32>
    %c0_i32_22 = arith.constant 0 : i32
    %44 = vector.broadcast %c0_i32_22 : i32 to vector<1x256xi32>
    %45 = arith.cmpi sge, %43, %44 : vector<1x256xi32>
    %c1_i32_23 = arith.constant 1 : i32
    %46 = vector.broadcast %c1_i32_23 : i32 to vector<1x256xi32>
    %47 = arith.addi %23, %46 : vector<1x256xi32>
    %c16_i32_24 = arith.constant 16 : i32
    %48 = vector.broadcast %c16_i32_24 : i32 to vector<1x256xi32>
    %49 = arith.cmpi slt, %47, %48 : vector<1x256xi32>
    %50 = arith.andi %45, %49 : vector<1x256xi1>
    %cst_25 = arith.constant 0.000000e+00 : f32
    %51 = vector.shape_cast %50 : vector<1x256xi1> to vector<1x256xi1>
    %52 = vector.broadcast %51 : vector<1x256xi1> to vector<4x256xi1>
    %53 = vector.broadcast %cst_25 : f32 to vector<4x256xf32>
    %54 = arith.select %52, %41, %53 : vector<4x256xi1>, vector<4x256xf32>
    %c8 = arith.constant 8 : index
    %c0_26 = arith.constant 0 : index
    %55 = vector.load %arg6[%c8, %c0_26] : memref<36x256xf32, #tpu.memory_space<vmem>>, vector<4x256xf32>
    tpu.vector_store %arg6[%c8, %c0_26], %54 {strides = array<i32>} : memref<36x256xf32, #tpu.memory_space<vmem>>, vector<4x256xf32>,
    %c0_27 = arith.constant 0 : index
    %c16 = arith.constant 16 : index
    %56 = vector.load %arg5[%c0_27, %c16] : memref<4x290xf32, #tpu.memory_space<vmem>>, vector<4x256xf32>
    %c-1_i32_28 = arith.constant -1 : i32
    %57 = vector.broadcast %c-1_i32_28 : i32 to vector<1x256xi32>
    %58 = arith.addi %23, %57 : vector<1x256xi32>
    %c0_i32_29 = arith.constant 0 : i32
    %59 = vector.broadcast %c0_i32_29 : i32 to vector<1x256xi32>
    %60 = arith.cmpi sge, %58, %59 : vector<1x256xi32>
    %c-1_i32_30 = arith.constant -1 : i32
    %61 = vector.broadcast %c-1_i32_30 : i32 to vector<1x256xi32>
    %62 = arith.addi %23, %61 : vector<1x256xi32>
    %c16_i32_31 = arith.constant 16 : i32
    %63 = vector.broadcast %c16_i32_31 : i32 to vector<1x256xi32>
    %64 = arith.cmpi slt, %62, %63 : vector<1x256xi32>
    %65 = arith.andi %60, %64 : vector<1x256xi1>
    %cst_32 = arith.constant 0.000000e+00 : f32
    %66 = vector.shape_cast %65 : vector<1x256xi1> to vector<1x256xi1>
    %67 = vector.broadcast %66 : vector<1x256xi1> to vector<4x256xi1>
    %68 = vector.broadcast %cst_32 : f32 to vector<4x256xf32>
    %69 = arith.select %67, %56, %68 : vector<4x256xi1>, vector<4x256xf32>
    %c12 = arith.constant 12 : index
    %c0_33 = arith.constant 0 : index
    %70 = vector.load %arg6[%c12, %c0_33] : memref<36x256xf32, #tpu.memory_space<vmem>>, vector<4x256xf32>
    tpu.vector_store %arg6[%c12, %c0_33], %69 {strides = array<i32>} : memref<36x256xf32, #tpu.memory_space<vmem>>, vector<4x256xf32>,
    %c0_34 = arith.constant 0 : index
    %c17_35 = arith.constant 17 : index
    %71 = vector.load %arg5[%c0_34, %c17_35] : memref<4x290xf32, #tpu.memory_space<vmem>>, vector<4x256xf32>
    %c16_36 = arith.constant 16 : index
    %c0_37 = arith.constant 0 : index
    %72 = vector.load %arg6[%c16_36, %c0_37] : memref<36x256xf32, #tpu.memory_space<vmem>>, vector<4x256xf32>
    tpu.vector_store %arg6[%c16_36, %c0_37], %71 {strides = array<i32>} : memref<36x256xf32, #tpu.memory_space<vmem>>, vector<4x256xf32>,
    %c0_38 = arith.constant 0 : index
    %c18 = arith.constant 18 : index
    %73 = vector.load %arg5[%c0_38, %c18] : memref<4x290xf32, #tpu.memory_space<vmem>>, vector<4x256xf32>
    %c1_i32_39 = arith.constant 1 : i32
    %74 = vector.broadcast %c1_i32_39 : i32 to vector<1x256xi32>
    %75 = arith.addi %23, %74 : vector<1x256xi32>
    %c0_i32_40 = arith.constant 0 : i32
    %76 = vector.broadcast %c0_i32_40 : i32 to vector<1x256xi32>
    %77 = arith.cmpi sge, %75, %76 : vector<1x256xi32>
    %c1_i32_41 = arith.constant 1 : i32
    %78 = vector.broadcast %c1_i32_41 : i32 to vector<1x256xi32>
    %79 = arith.addi %23, %78 : vector<1x256xi32>
    %c16_i32_42 = arith.constant 16 : i32
    %80 = vector.broadcast %c16_i32_42 : i32 to vector<1x256xi32>
    %81 = arith.cmpi slt, %79, %80 : vector<1x256xi32>
    %82 = arith.andi %77, %81 : vector<1x256xi1>
    %cst_43 = arith.constant 0.000000e+00 : f32
    %83 = vector.shape_cast %82 : vector<1x256xi1> to vector<1x256xi1>
    %84 = vector.broadcast %83 : vector<1x256xi1> to vector<4x256xi1>
    %85 = vector.broadcast %cst_43 : f32 to vector<4x256xf32>
    %86 = arith.select %84, %73, %85 : vector<4x256xi1>, vector<4x256xf32>
    %c20 = arith.constant 20 : index
    %c0_44 = arith.constant 0 : index
    %87 = vector.load %arg6[%c20, %c0_44] : memref<36x256xf32, #tpu.memory_space<vmem>>, vector<4x256xf32>
    tpu.vector_store %arg6[%c20, %c0_44], %86 {strides = array<i32>} : memref<36x256xf32, #tpu.memory_space<vmem>>, vector<4x256xf32>,
    %c0_45 = arith.constant 0 : index
    %c32 = arith.constant 32 : index
    %88 = vector.load %arg5[%c0_45, %c32] : memref<4x290xf32, #tpu.memory_space<vmem>>, vector<4x256xf32>
    %c-1_i32_46 = arith.constant -1 : i32
    %89 = vector.broadcast %c-1_i32_46 : i32 to vector<1x256xi32>
    %90 = arith.addi %23, %89 : vector<1x256xi32>
    %c0_i32_47 = arith.constant 0 : i32
    %91 = vector.broadcast %c0_i32_47 : i32 to vector<1x256xi32>
    %92 = arith.cmpi sge, %90, %91 : vector<1x256xi32>
    %c-1_i32_48 = arith.constant -1 : i32
    %93 = vector.broadcast %c-1_i32_48 : i32 to vector<1x256xi32>
    %94 = arith.addi %23, %93 : vector<1x256xi32>
    %c16_i32_49 = arith.constant 16 : i32
    %95 = vector.broadcast %c16_i32_49 : i32 to vector<1x256xi32>
    %96 = arith.cmpi slt, %94, %95 : vector<1x256xi32>
    %97 = arith.andi %92, %96 : vector<1x256xi1>
    %cst_50 = arith.constant 0.000000e+00 : f32
    %98 = vector.shape_cast %97 : vector<1x256xi1> to vector<1x256xi1>
    %99 = vector.broadcast %98 : vector<1x256xi1> to vector<4x256xi1>
    %100 = vector.broadcast %cst_50 : f32 to vector<4x256xf32>
    %101 = arith.select %99, %88, %100 : vector<4x256xi1>, vector<4x256xf32>
    %c24 = arith.constant 24 : index
    %c0_51 = arith.constant 0 : index
    %102 = vector.load %arg6[%c24, %c0_51] : memref<36x256xf32, #tpu.memory_space<vmem>>, vector<4x256xf32>
    tpu.vector_store %arg6[%c24, %c0_51], %101 {strides = array<i32>} : memref<36x256xf32, #tpu.memory_space<vmem>>, vector<4x256xf32>,
    %c0_52 = arith.constant 0 : index
    %c33 = arith.constant 33 : index
    %103 = vector.load %arg5[%c0_52, %c33] : memref<4x290xf32, #tpu.memory_space<vmem>>, vector<4x256xf32>
    %c28 = arith.constant 28 : index
    %c0_53 = arith.constant 0 : index
    %104 = vector.load %arg6[%c28, %c0_53] : memref<36x256xf32, #tpu.memory_space<vmem>>, vector<4x256xf32>
    tpu.vector_store %arg6[%c28, %c0_53], %103 {strides = array<i32>} : memref<36x256xf32, #tpu.memory_space<vmem>>, vector<4x256xf32>,
    %c0_54 = arith.constant 0 : index
    %c34 = arith.constant 34 : index
    %105 = vector.load %arg5[%c0_54, %c34] : memref<4x290xf32, #tpu.memory_space<vmem>>, vector<4x256xf32>
    %c1_i32_55 = arith.constant 1 : i32
    %106 = vector.broadcast %c1_i32_55 : i32 to vector<1x256xi32>
    %107 = arith.addi %23, %106 : vector<1x256xi32>
    %c0_i32_56 = arith.constant 0 : i32
    %108 = vector.broadcast %c0_i32_56 : i32 to vector<1x256xi32>
    %109 = arith.cmpi sge, %107, %108 : vector<1x256xi32>
    %c1_i32_57 = arith.constant 1 : i32
    %110 = vector.broadcast %c1_i32_57 : i32 to vector<1x256xi32>
    %111 = arith.addi %23, %110 : vector<1x256xi32>
    %c16_i32_58 = arith.constant 16 : i32
    %112 = vector.broadcast %c16_i32_58 : i32 to vector<1x256xi32>
    %113 = arith.cmpi slt, %111, %112 : vector<1x256xi32>
    %114 = arith.andi %109, %113 : vector<1x256xi1>
    %cst_59 = arith.constant 0.000000e+00 : f32
    %115 = vector.shape_cast %114 : vector<1x256xi1> to vector<1x256xi1>
    %116 = vector.broadcast %115 : vector<1x256xi1> to vector<4x256xi1>
    %117 = vector.broadcast %cst_59 : f32 to vector<4x256xf32>
    %118 = arith.select %116, %105, %117 : vector<4x256xi1>, vector<4x256xf32>
    %c32_60 = arith.constant 32 : index
    %c0_61 = arith.constant 0 : index
    %119 = vector.load %arg6[%c32_60, %c0_61] : memref<36x256xf32, #tpu.memory_space<vmem>>, vector<4x256xf32>
    tpu.vector_store %arg6[%c32_60, %c0_61], %118 {strides = array<i32>} : memref<36x256xf32, #tpu.memory_space<vmem>>, vector<4x256xf32>,
    %c0_62 = arith.constant 0 : index
    %c0_63 = arith.constant 0 : index
    %120 = vector.load %arg2[%c0_62, %c0_63] : memref<4x36xf32, #tpu.memory_space<vmem>>, vector<4x36xf32>
    %c0_64 = arith.constant 0 : index
    %c0_65 = arith.constant 0 : index
    %121 = vector.load %arg6[%c0_64, %c0_65] : memref<36x256xf32, #tpu.memory_space<vmem>>, vector<36x256xf32>
    %cst_66 = arith.constant dense<0.000000e+00> : vector<4x256xf32>
    %122 = tpu.matmul %120, %121, %cst_66 {dimension_numbers = #tpu.dot_dimension_numbers<[1], [0], [0], [1], [0, 0, 1, 1], [], []>, precision = #tpu.contract_precision<fp32>} : vector<4x36xf32>, vector<36x256xf32>, vector<4x256xf32> -> vector<4x256xf32>
    %cst_67 = arith.constant dense<0.000000e+00> : vector<4xf32>
    %123 = vector.multi_reduction <add>, %122, %cst_67 [1] : vector<4x256xf32> to vector<4xf32>
    %124 = vector.shape_cast %123 : vector<4xf32> to vector<4x1xf32>
    %cst_68 = arith.constant 3.906250e-03 : f32
    %125 = vector.broadcast %cst_68 : f32 to vector<4x1xf32>
    %126 = arith.mulf %124, %125 : vector<4x1xf32>
    %127 = vector.broadcast %126 : vector<4x1xf32> to vector<4x256xf32>
    %128 = arith.subf %122, %127 : vector<4x256xf32>
    %c0_69 = arith.constant 0 : index
    %c0_70 = arith.constant 0 : index
    %c0_71 = arith.constant 0 : index
    %129 = vector.load %arg4[%c0_69, %c0_70, %c0_71] : memref<1x4x2xf32, #tpu.memory_space<vmem>>, vector<1x4x1xf32>
    %130 = vector.shape_cast %129 : vector<1x4x1xf32> to vector<4x1xf32>
    %131 = vector.shape_cast %124 : vector<4x1xf32> to vector<1x4x1xf32>
    tpu.vector_store %arg4[%c0_69, %c0_70, %c0_71], %131 {strides = array<i32>} : memref<1x4x2xf32, #tpu.memory_space<vmem>>, vector<1x4x1xf32>,
    %132 = arith.mulf %128, %128 : vector<4x256xf32>
    %cst_72 = arith.constant dense<0.000000e+00> : vector<4xf32>
    %133 = vector.multi_reduction <add>, %132, %cst_72 [1] : vector<4x256xf32> to vector<4xf32>
    %134 = vector.shape_cast %133 : vector<4xf32> to vector<4x1xf32>
    %c0_73 = arith.constant 0 : index
    %c0_74 = arith.constant 0 : index
    %c1_75 = arith.constant 1 : index
    %135 = vector.load %arg4[%c0_73, %c0_74, %c1_75] : memref<1x4x2xf32, #tpu.memory_space<vmem>>, vector<1x4x1xf32>
    %136 = vector.shape_cast %135 : vector<1x4x1xf32> to vector<4x1xf32>
    %137 = vector.shape_cast %134 : vector<4x1xf32> to vector<1x4x1xf32>
    tpu.vector_store %arg4[%c0_73, %c0_74, %c1_75], %137 {strides = array<i32>} : memref<1x4x2xf32, #tpu.memory_space<vmem>>, vector<1x4x1xf32>,
    %c0_76 = arith.constant 0 : index
    %c0_77 = arith.constant 0 : index
    %c0_78 = arith.constant 0 : index
    %138 = vector.load %arg3[%c0_76, %c0_77, %c0_78] : memref<1x4x256xf32, #tpu.memory_space<vmem>>, vector<1x4x256xf32>
    %139 = vector.shape_cast %138 : vector<1x4x256xf32> to vector<4x256xf32>
    %140 = vector.shape_cast %122 : vector<4x256xf32> to vector<1x4x256xf32>
    tpu.vector_store %arg3[%c0_76, %c0_77, %c0_78], %140 {strides = array<i32>} : memref<1x4x256xf32, #tpu.memory_space<vmem>>, vector<1x4x256xf32>,
    return
  }
  func.func @transform_0(%arg0: i32) -> (i32, i32, i32) {
    %c0_i32 = arith.constant 0 : i32
    %c0_i32_0 = arith.constant 0 : i32
    %c0_i32_1 = arith.constant 0 : i32
    return %arg0, %c0_i32, %c0_i32_0 : i32, i32, i32
  }
  func.func @transform_1(%arg0: i32) -> (i32, i32) {
    %c0_i32 = arith.constant 0 : i32
    %c0_i32_0 = arith.constant 0 : i32
    %c0_i32_1 = arith.constant 0 : i32
    return %c0_i32, %c0_i32_0 : i32, i32
  }
  func.func @transform_2(%arg0: i32) -> (i32, i32, i32) {
    %c0_i32 = arith.constant 0 : i32
    %c0_i32_0 = arith.constant 0 : i32
    %c0_i32_1 = arith.constant 0 : i32
    return %arg0, %c0_i32, %c0_i32_0 : i32, i32, i32
  }
  func.func @transform_3(%arg0: i32) -> (i32, i32, i32) {
    %c0_i32 = arith.constant 0 : i32
    %c0_i32_0 = arith.constant 0 : i32
    %c0_i32_1 = arith.constant 0 : i32
    return %arg0, %c0_i32, %c0_i32_0 : i32, i32, i32
  }
}

module attributes {stable_mosaic.version = 11 : i64} {
  func.func @stage2_kernel(%arg0: i32, %arg1: memref<2x4x2xf32, #tpu.memory_space<vmem>>, %arg2: memref<4x1xf32, #tpu.memory_space<vmem>>, %arg3: memref<4x1xf32, #tpu.memory_space<vmem>>, %arg4: memref<1x4x256xf32, #tpu.memory_space<vmem>>, %arg5: memref<4x36xf32, #tpu.memory_space<vmem>>, %arg6: memref<1x4x256xf32, #tpu.memory_space<vmem>>, %arg7: memref<1x4x2xf32, #tpu.memory_space<vmem>>, %arg8: memref<4x290xf32, #tpu.memory_space<vmem>>, %arg9: memref<36x256xf32, #tpu.memory_space<vmem>>) attributes {dimension_semantics = [#tpu.dimension_semantics<parallel>], iteration_bounds = array<i64: 2>, scalar_prefetch = 0 : i64, scratch_operands = 2 : i64, tpu.core_type = #tpu.core_type<tc>, window_params = [{pipeline_mode = #tpu.pipeline_mode<synchronous>, transform_indices = @transform_0, window_bounds = array<i64: 2, 4, 2>}, {pipeline_mode = #tpu.pipeline_mode<synchronous>, transform_indices = @transform_1, window_bounds = array<i64: 4, 1>}, {pipeline_mode = #tpu.pipeline_mode<synchronous>, transform_indices = @transform_2, window_bounds = array<i64: 4, 1>}, {transform_indices = @transform_3, window_bounds = array<i64: 1, 4, 256>}, {pipeline_mode = #tpu.pipeline_mode<synchronous>, transform_indices = @transform_4, window_bounds = array<i64: 4, 36>}, {transform_indices = @transform_5, window_bounds = array<i64: 1, 4, 256>}, {transform_indices = @transform_6, window_bounds = array<i64: 1, 4, 2>}]} {
    %c0 = arith.constant 0 : index
    %c0_0 = arith.constant 0 : index
    %c0_1 = arith.constant 0 : index
    %0 = vector.load %arg1[%c0, %c0_0, %c0_1] : memref<2x4x2xf32, #tpu.memory_space<vmem>>, vector<2x4x2xf32>
    %c0_2 = arith.constant 0 : index
    %c0_3 = arith.constant 0 : index
    %1 = vector.load %arg2[%c0_2, %c0_3] : memref<4x1xf32, #tpu.memory_space<vmem>>, vector<4x1xf32>
    %c0_4 = arith.constant 0 : index
    %c0_5 = arith.constant 0 : index
    %2 = vector.load %arg3[%c0_4, %c0_5] : memref<4x1xf32, #tpu.memory_space<vmem>>, vector<4x1xf32>
    %3 = vector.extract_strided_slice %0 {offsets = [0, 0, 0], sizes = [2, 4, 1], strides = [1, 1, 1]} : vector<2x4x2xf32> to vector<2x4x1xf32>
    %4 = vector.extract_strided_slice %0 {offsets = [0, 0, 1], sizes = [2, 4, 1], strides = [1, 1, 1]} : vector<2x4x2xf32> to vector<2x4x1xf32>
    %cst = arith.constant dense<0.000000e+00> : vector<4x1xf32>
    %5 = vector.multi_reduction <add>, %3, %cst [0] : vector<2x4x1xf32> to vector<4x1xf32>
    %cst_6 = arith.constant 0.001953125 : f32
    %6 = vector.broadcast %cst_6 : f32 to vector<4x1xf32>
    %7 = arith.mulf %5, %6 : vector<4x1xf32>
    %cst_7 = arith.constant 3.906250e-03 : f32
    %8 = vector.broadcast %cst_7 : f32 to vector<2x4x1xf32>
    %9 = arith.mulf %3, %8 : vector<2x4x1xf32>
    %cst_8 = arith.constant dense<0.000000e+00> : vector<4x1xf32>
    %10 = vector.multi_reduction <add>, %4, %cst_8 [0] : vector<2x4x1xf32> to vector<4x1xf32>
    %11 = vector.shape_cast %7 : vector<4x1xf32> to vector<1x4x1xf32>
    %12 = vector.broadcast %11 : vector<1x4x1xf32> to vector<2x4x1xf32>
    %13 = arith.subf %9, %12 : vector<2x4x1xf32>
    %14 = arith.mulf %13, %13 : vector<2x4x1xf32>
    %cst_9 = arith.constant dense<0.000000e+00> : vector<4x1xf32>
    %15 = vector.multi_reduction <add>, %14, %cst_9 [0] : vector<2x4x1xf32> to vector<4x1xf32>
    %cst_10 = arith.constant 2.560000e+02 : f32
    %16 = vector.broadcast %cst_10 : f32 to vector<4x1xf32>
    %17 = arith.mulf %16, %15 : vector<4x1xf32>
    %18 = arith.addf %10, %17 : vector<4x1xf32>
    %cst_11 = arith.constant 0.001953125 : f32
    %19 = vector.broadcast %cst_11 : f32 to vector<4x1xf32>
    %20 = arith.mulf %18, %19 : vector<4x1xf32>
    %cst_12 = arith.constant 0.000000e+00 : f32
    %21 = vector.broadcast %cst_12 : f32 to vector<4x1xf32>
    %22 = arith.maximumf %20, %21 : vector<4x1xf32>
    %cst_13 = arith.constant 9.99999974E-6 : f32
    %23 = vector.broadcast %cst_13 : f32 to vector<4x1xf32>
    %24 = arith.addf %22, %23 : vector<4x1xf32>
    %25 = math.rsqrt %24 : vector<4x1xf32>
    %26 = arith.mulf %1, %25 : vector<4x1xf32>
    %27 = arith.mulf %7, %26 : vector<4x1xf32>
    %28 = arith.subf %2, %27 : vector<4x1xf32>
    %c0_14 = arith.constant 0 : index
    %c0_15 = arith.constant 0 : index
    %c0_16 = arith.constant 0 : index
    %29 = vector.load %arg4[%c0_14, %c0_15, %c0_16] : memref<1x4x256xf32, #tpu.memory_space<vmem>>, vector<1x4x256xf32>
    %30 = vector.shape_cast %29 : vector<1x4x256xf32> to vector<4x256xf32>
    %31 = vector.broadcast %26 : vector<4x1xf32> to vector<4x256xf32>
    %32 = arith.mulf %30, %31 : vector<4x256xf32>
    %33 = vector.broadcast %28 : vector<4x1xf32> to vector<4x256xf32>
    %34 = arith.addf %32, %33 : vector<4x256xf32>
    %cst_17 = arith.constant 0.000000e+00 : f32
    %35 = vector.broadcast %cst_17 : f32 to vector<4x256xf32>
    %36 = arith.maximumf %34, %35 : vector<4x256xf32>
    %cst_18 = arith.constant 0.000000e+00 : f32
    %37 = vector.broadcast %cst_18 : f32 to vector<4x17xf32>
    %c0_19 = arith.constant 0 : index
    %c0_20 = arith.constant 0 : index
    %38 = vector.load %arg8[%c0_19, %c0_20] : memref<4x290xf32, #tpu.memory_space<vmem>>, vector<4x17xf32>
    tpu.vector_store %arg8[%c0_19, %c0_20], %37 {strides = array<i32>} : memref<4x290xf32, #tpu.memory_space<vmem>>, vector<4x17xf32>,
    %cst_21 = arith.constant 0.000000e+00 : f32
    %39 = vector.broadcast %cst_21 : f32 to vector<4x17xf32>
    %c0_22 = arith.constant 0 : index
    %c273 = arith.constant 273 : index
    %40 = vector.load %arg8[%c0_22, %c273] : memref<4x290xf32, #tpu.memory_space<vmem>>, vector<4x17xf32>
    tpu.vector_store %arg8[%c0_22, %c273], %39 {strides = array<i32>} : memref<4x290xf32, #tpu.memory_space<vmem>>, vector<4x17xf32>,
    %c0_23 = arith.constant 0 : index
    %c17 = arith.constant 17 : index
    %41 = vector.load %arg8[%c0_23, %c17] : memref<4x290xf32, #tpu.memory_space<vmem>>, vector<4x256xf32>
    tpu.vector_store %arg8[%c0_23, %c17], %36 {strides = array<i32>} : memref<4x290xf32, #tpu.memory_space<vmem>>, vector<4x256xf32>,
    %42 = tpu.iota {dimensions = array<i32: 1>} : vector<1x256xi32>
    %c16_i32 = arith.constant 16 : i32
    %c0_i32 = arith.constant 0 : i32
    %43 = arith.cmpi eq, %c16_i32, %c0_i32 : i32
    %c1_i32 = arith.constant 1 : i32
    %44 = arith.select %43, %c1_i32, %c16_i32 : i32
    %45 = vector.broadcast %44 : i32 to vector<1x256xi32>
    %46 = arith.remsi %42, %45 : vector<1x256xi32>
    %c0_i32_24 = arith.constant 0 : i32
    %47 = vector.broadcast %c0_i32_24 : i32 to vector<1x256xi32>
    %48 = arith.cmpi ne, %46, %47 : vector<1x256xi32>
    %c0_i32_25 = arith.constant 0 : i32
    %49 = vector.broadcast %c0_i32_25 : i32 to vector<1x256xi32>
    %50 = arith.cmpi slt, %46, %49 : vector<1x256xi32>
    %c0_i32_26 = arith.constant 0 : i32
    %51 = arith.cmpi slt, %44, %c0_i32_26 : i32
    %52 = vector.broadcast %51 : i1 to vector<1x256xi1>
    %53 = vector.broadcast %52 : vector<1x256xi1> to vector<1x256xi1>
    %54 = arith.xori %50, %53 : vector<1x256xi1>
    %55 = arith.andi %54, %48 : vector<1x256xi1>
    %56 = vector.broadcast %44 : i32 to vector<1x256xi32>
    %57 = arith.addi %46, %56 : vector<1x256xi32>
    %58 = arith.select %55, %57, %46 : vector<1x256xi1>, vector<1x256xi32>
    %c0_27 = arith.constant 0 : index
    %c0_28 = arith.constant 0 : index
    %59 = vector.load %arg8[%c0_27, %c0_28] : memref<4x290xf32, #tpu.memory_space<vmem>>, vector<4x256xf32>
    %c-1_i32 = arith.constant -1 : i32
    %60 = vector.broadcast %c-1_i32 : i32 to vector<1x256xi32>
    %61 = arith.addi %58, %60 : vector<1x256xi32>
    %c0_i32_29 = arith.constant 0 : i32
    %62 = vector.broadcast %c0_i32_29 : i32 to vector<1x256xi32>
    %63 = arith.cmpi sge, %61, %62 : vector<1x256xi32>
    %c-1_i32_30 = arith.constant -1 : i32
    %64 = vector.broadcast %c-1_i32_30 : i32 to vector<1x256xi32>
    %65 = arith.addi %58, %64 : vector<1x256xi32>
    %c16_i32_31 = arith.constant 16 : i32
    %66 = vector.broadcast %c16_i32_31 : i32 to vector<1x256xi32>
    %67 = arith.cmpi slt, %65, %66 : vector<1x256xi32>
    %68 = arith.andi %63, %67 : vector<1x256xi1>
    %cst_32 = arith.constant 0.000000e+00 : f32
    %69 = vector.shape_cast %68 : vector<1x256xi1> to vector<1x256xi1>
    %70 = vector.broadcast %69 : vector<1x256xi1> to vector<4x256xi1>
    %71 = vector.broadcast %cst_32 : f32 to vector<4x256xf32>
    %72 = arith.select %70, %59, %71 : vector<4x256xi1>, vector<4x256xf32>
    %c0_33 = arith.constant 0 : index
    %c0_34 = arith.constant 0 : index
    %73 = vector.load %arg9[%c0_33, %c0_34] : memref<36x256xf32, #tpu.memory_space<vmem>>, vector<4x256xf32>
    tpu.vector_store %arg9[%c0_33, %c0_34], %72 {strides = array<i32>} : memref<36x256xf32, #tpu.memory_space<vmem>>, vector<4x256xf32>,
    %c0_35 = arith.constant 0 : index
    %c1 = arith.constant 1 : index
    %74 = vector.load %arg8[%c0_35, %c1] : memref<4x290xf32, #tpu.memory_space<vmem>>, vector<4x256xf32>
    %c4 = arith.constant 4 : index
    %c0_36 = arith.constant 0 : index
    %75 = vector.load %arg9[%c4, %c0_36] : memref<36x256xf32, #tpu.memory_space<vmem>>, vector<4x256xf32>
    tpu.vector_store %arg9[%c4, %c0_36], %74 {strides = array<i32>} : memref<36x256xf32, #tpu.memory_space<vmem>>, vector<4x256xf32>,
    %c0_37 = arith.constant 0 : index
    %c2 = arith.constant 2 : index
    %76 = vector.load %arg8[%c0_37, %c2] : memref<4x290xf32, #tpu.memory_space<vmem>>, vector<4x256xf32>
    %c1_i32_38 = arith.constant 1 : i32
    %77 = vector.broadcast %c1_i32_38 : i32 to vector<1x256xi32>
    %78 = arith.addi %58, %77 : vector<1x256xi32>
    %c0_i32_39 = arith.constant 0 : i32
    %79 = vector.broadcast %c0_i32_39 : i32 to vector<1x256xi32>
    %80 = arith.cmpi sge, %78, %79 : vector<1x256xi32>
    %c1_i32_40 = arith.constant 1 : i32
    %81 = vector.broadcast %c1_i32_40 : i32 to vector<1x256xi32>
    %82 = arith.addi %58, %81 : vector<1x256xi32>
    %c16_i32_41 = arith.constant 16 : i32
    %83 = vector.broadcast %c16_i32_41 : i32 to vector<1x256xi32>
    %84 = arith.cmpi slt, %82, %83 : vector<1x256xi32>
    %85 = arith.andi %80, %84 : vector<1x256xi1>
    %cst_42 = arith.constant 0.000000e+00 : f32
    %86 = vector.shape_cast %85 : vector<1x256xi1> to vector<1x256xi1>
    %87 = vector.broadcast %86 : vector<1x256xi1> to vector<4x256xi1>
    %88 = vector.broadcast %cst_42 : f32 to vector<4x256xf32>
    %89 = arith.select %87, %76, %88 : vector<4x256xi1>, vector<4x256xf32>
    %c8 = arith.constant 8 : index
    %c0_43 = arith.constant 0 : index
    %90 = vector.load %arg9[%c8, %c0_43] : memref<36x256xf32, #tpu.memory_space<vmem>>, vector<4x256xf32>
    tpu.vector_store %arg9[%c8, %c0_43], %89 {strides = array<i32>} : memref<36x256xf32, #tpu.memory_space<vmem>>, vector<4x256xf32>,
    %c0_44 = arith.constant 0 : index
    %c16 = arith.constant 16 : index
    %91 = vector.load %arg8[%c0_44, %c16] : memref<4x290xf32, #tpu.memory_space<vmem>>, vector<4x256xf32>
    %c-1_i32_45 = arith.constant -1 : i32
    %92 = vector.broadcast %c-1_i32_45 : i32 to vector<1x256xi32>
    %93 = arith.addi %58, %92 : vector<1x256xi32>
    %c0_i32_46 = arith.constant 0 : i32
    %94 = vector.broadcast %c0_i32_46 : i32 to vector<1x256xi32>
    %95 = arith.cmpi sge, %93, %94 : vector<1x256xi32>
    %c-1_i32_47 = arith.constant -1 : i32
    %96 = vector.broadcast %c-1_i32_47 : i32 to vector<1x256xi32>
    %97 = arith.addi %58, %96 : vector<1x256xi32>
    %c16_i32_48 = arith.constant 16 : i32
    %98 = vector.broadcast %c16_i32_48 : i32 to vector<1x256xi32>
    %99 = arith.cmpi slt, %97, %98 : vector<1x256xi32>
    %100 = arith.andi %95, %99 : vector<1x256xi1>
    %cst_49 = arith.constant 0.000000e+00 : f32
    %101 = vector.shape_cast %100 : vector<1x256xi1> to vector<1x256xi1>
    %102 = vector.broadcast %101 : vector<1x256xi1> to vector<4x256xi1>
    %103 = vector.broadcast %cst_49 : f32 to vector<4x256xf32>
    %104 = arith.select %102, %91, %103 : vector<4x256xi1>, vector<4x256xf32>
    %c12 = arith.constant 12 : index
    %c0_50 = arith.constant 0 : index
    %105 = vector.load %arg9[%c12, %c0_50] : memref<36x256xf32, #tpu.memory_space<vmem>>, vector<4x256xf32>
    tpu.vector_store %arg9[%c12, %c0_50], %104 {strides = array<i32>} : memref<36x256xf32, #tpu.memory_space<vmem>>, vector<4x256xf32>,
    %c0_51 = arith.constant 0 : index
    %c17_52 = arith.constant 17 : index
    %106 = vector.load %arg8[%c0_51, %c17_52] : memref<4x290xf32, #tpu.memory_space<vmem>>, vector<4x256xf32>
    %c16_53 = arith.constant 16 : index
    %c0_54 = arith.constant 0 : index
    %107 = vector.load %arg9[%c16_53, %c0_54] : memref<36x256xf32, #tpu.memory_space<vmem>>, vector<4x256xf32>
    tpu.vector_store %arg9[%c16_53, %c0_54], %106 {strides = array<i32>} : memref<36x256xf32, #tpu.memory_space<vmem>>, vector<4x256xf32>,
    %c0_55 = arith.constant 0 : index
    %c18 = arith.constant 18 : index
    %108 = vector.load %arg8[%c0_55, %c18] : memref<4x290xf32, #tpu.memory_space<vmem>>, vector<4x256xf32>
    %c1_i32_56 = arith.constant 1 : i32
    %109 = vector.broadcast %c1_i32_56 : i32 to vector<1x256xi32>
    %110 = arith.addi %58, %109 : vector<1x256xi32>
    %c0_i32_57 = arith.constant 0 : i32
    %111 = vector.broadcast %c0_i32_57 : i32 to vector<1x256xi32>
    %112 = arith.cmpi sge, %110, %111 : vector<1x256xi32>
    %c1_i32_58 = arith.constant 1 : i32
    %113 = vector.broadcast %c1_i32_58 : i32 to vector<1x256xi32>
    %114 = arith.addi %58, %113 : vector<1x256xi32>
    %c16_i32_59 = arith.constant 16 : i32
    %115 = vector.broadcast %c16_i32_59 : i32 to vector<1x256xi32>
    %116 = arith.cmpi slt, %114, %115 : vector<1x256xi32>
    %117 = arith.andi %112, %116 : vector<1x256xi1>
    %cst_60 = arith.constant 0.000000e+00 : f32
    %118 = vector.shape_cast %117 : vector<1x256xi1> to vector<1x256xi1>
    %119 = vector.broadcast %118 : vector<1x256xi1> to vector<4x256xi1>
    %120 = vector.broadcast %cst_60 : f32 to vector<4x256xf32>
    %121 = arith.select %119, %108, %120 : vector<4x256xi1>, vector<4x256xf32>
    %c20 = arith.constant 20 : index
    %c0_61 = arith.constant 0 : index
    %122 = vector.load %arg9[%c20, %c0_61] : memref<36x256xf32, #tpu.memory_space<vmem>>, vector<4x256xf32>
    tpu.vector_store %arg9[%c20, %c0_61], %121 {strides = array<i32>} : memref<36x256xf32, #tpu.memory_space<vmem>>, vector<4x256xf32>,
    %c0_62 = arith.constant 0 : index
    %c32 = arith.constant 32 : index
    %123 = vector.load %arg8[%c0_62, %c32] : memref<4x290xf32, #tpu.memory_space<vmem>>, vector<4x256xf32>
    %c-1_i32_63 = arith.constant -1 : i32
    %124 = vector.broadcast %c-1_i32_63 : i32 to vector<1x256xi32>
    %125 = arith.addi %58, %124 : vector<1x256xi32>
    %c0_i32_64 = arith.constant 0 : i32
    %126 = vector.broadcast %c0_i32_64 : i32 to vector<1x256xi32>
    %127 = arith.cmpi sge, %125, %126 : vector<1x256xi32>
    %c-1_i32_65 = arith.constant -1 : i32
    %128 = vector.broadcast %c-1_i32_65 : i32 to vector<1x256xi32>
    %129 = arith.addi %58, %128 : vector<1x256xi32>
    %c16_i32_66 = arith.constant 16 : i32
    %130 = vector.broadcast %c16_i32_66 : i32 to vector<1x256xi32>
    %131 = arith.cmpi slt, %129, %130 : vector<1x256xi32>
    %132 = arith.andi %127, %131 : vector<1x256xi1>
    %cst_67 = arith.constant 0.000000e+00 : f32
    %133 = vector.shape_cast %132 : vector<1x256xi1> to vector<1x256xi1>
    %134 = vector.broadcast %133 : vector<1x256xi1> to vector<4x256xi1>
    %135 = vector.broadcast %cst_67 : f32 to vector<4x256xf32>
    %136 = arith.select %134, %123, %135 : vector<4x256xi1>, vector<4x256xf32>
    %c24 = arith.constant 24 : index
    %c0_68 = arith.constant 0 : index
    %137 = vector.load %arg9[%c24, %c0_68] : memref<36x256xf32, #tpu.memory_space<vmem>>, vector<4x256xf32>
    tpu.vector_store %arg9[%c24, %c0_68], %136 {strides = array<i32>} : memref<36x256xf32, #tpu.memory_space<vmem>>, vector<4x256xf32>,
    %c0_69 = arith.constant 0 : index
    %c33 = arith.constant 33 : index
    %138 = vector.load %arg8[%c0_69, %c33] : memref<4x290xf32, #tpu.memory_space<vmem>>, vector<4x256xf32>
    %c28 = arith.constant 28 : index
    %c0_70 = arith.constant 0 : index
    %139 = vector.load %arg9[%c28, %c0_70] : memref<36x256xf32, #tpu.memory_space<vmem>>, vector<4x256xf32>
    tpu.vector_store %arg9[%c28, %c0_70], %138 {strides = array<i32>} : memref<36x256xf32, #tpu.memory_space<vmem>>, vector<4x256xf32>,
    %c0_71 = arith.constant 0 : index
    %c34 = arith.constant 34 : index
    %140 = vector.load %arg8[%c0_71, %c34] : memref<4x290xf32, #tpu.memory_space<vmem>>, vector<4x256xf32>
    %c1_i32_72 = arith.constant 1 : i32
    %141 = vector.broadcast %c1_i32_72 : i32 to vector<1x256xi32>
    %142 = arith.addi %58, %141 : vector<1x256xi32>
    %c0_i32_73 = arith.constant 0 : i32
    %143 = vector.broadcast %c0_i32_73 : i32 to vector<1x256xi32>
    %144 = arith.cmpi sge, %142, %143 : vector<1x256xi32>
    %c1_i32_74 = arith.constant 1 : i32
    %145 = vector.broadcast %c1_i32_74 : i32 to vector<1x256xi32>
    %146 = arith.addi %58, %145 : vector<1x256xi32>
    %c16_i32_75 = arith.constant 16 : i32
    %147 = vector.broadcast %c16_i32_75 : i32 to vector<1x256xi32>
    %148 = arith.cmpi slt, %146, %147 : vector<1x256xi32>
    %149 = arith.andi %144, %148 : vector<1x256xi1>
    %cst_76 = arith.constant 0.000000e+00 : f32
    %150 = vector.shape_cast %149 : vector<1x256xi1> to vector<1x256xi1>
    %151 = vector.broadcast %150 : vector<1x256xi1> to vector<4x256xi1>
    %152 = vector.broadcast %cst_76 : f32 to vector<4x256xf32>
    %153 = arith.select %151, %140, %152 : vector<4x256xi1>, vector<4x256xf32>
    %c32_77 = arith.constant 32 : index
    %c0_78 = arith.constant 0 : index
    %154 = vector.load %arg9[%c32_77, %c0_78] : memref<36x256xf32, #tpu.memory_space<vmem>>, vector<4x256xf32>
    tpu.vector_store %arg9[%c32_77, %c0_78], %153 {strides = array<i32>} : memref<36x256xf32, #tpu.memory_space<vmem>>, vector<4x256xf32>,
    %c0_79 = arith.constant 0 : index
    %c0_80 = arith.constant 0 : index
    %155 = vector.load %arg5[%c0_79, %c0_80] : memref<4x36xf32, #tpu.memory_space<vmem>>, vector<4x36xf32>
    %c0_81 = arith.constant 0 : index
    %c0_82 = arith.constant 0 : index
    %156 = vector.load %arg9[%c0_81, %c0_82] : memref<36x256xf32, #tpu.memory_space<vmem>>, vector<36x256xf32>
    %cst_83 = arith.constant dense<0.000000e+00> : vector<4x256xf32>
    %157 = tpu.matmul %155, %156, %cst_83 {dimension_numbers = #tpu.dot_dimension_numbers<[1], [0], [0], [1], [0, 0, 1, 1], [], []>, precision = #tpu.contract_precision<fp32>} : vector<4x36xf32>, vector<36x256xf32>, vector<4x256xf32> -> vector<4x256xf32>
    %cst_84 = arith.constant dense<0.000000e+00> : vector<4xf32>
    %158 = vector.multi_reduction <add>, %157, %cst_84 [1] : vector<4x256xf32> to vector<4xf32>
    %159 = vector.shape_cast %158 : vector<4xf32> to vector<4x1xf32>
    %cst_85 = arith.constant 3.906250e-03 : f32
    %160 = vector.broadcast %cst_85 : f32 to vector<4x1xf32>
    %161 = arith.mulf %159, %160 : vector<4x1xf32>
    %162 = vector.broadcast %161 : vector<4x1xf32> to vector<4x256xf32>
    %163 = arith.subf %157, %162 : vector<4x256xf32>
    %c0_86 = arith.constant 0 : index
    %c0_87 = arith.constant 0 : index
    %c0_88 = arith.constant 0 : index
    %164 = vector.load %arg7[%c0_86, %c0_87, %c0_88] : memref<1x4x2xf32, #tpu.memory_space<vmem>>, vector<1x4x1xf32>
    %165 = vector.shape_cast %164 : vector<1x4x1xf32> to vector<4x1xf32>
    %166 = vector.shape_cast %159 : vector<4x1xf32> to vector<1x4x1xf32>
    tpu.vector_store %arg7[%c0_86, %c0_87, %c0_88], %166 {strides = array<i32>} : memref<1x4x2xf32, #tpu.memory_space<vmem>>, vector<1x4x1xf32>,
    %167 = arith.mulf %163, %163 : vector<4x256xf32>
    %cst_89 = arith.constant dense<0.000000e+00> : vector<4xf32>
    %168 = vector.multi_reduction <add>, %167, %cst_89 [1] : vector<4x256xf32> to vector<4xf32>
    %169 = vector.shape_cast %168 : vector<4xf32> to vector<4x1xf32>
    %c0_90 = arith.constant 0 : index
    %c0_91 = arith.constant 0 : index
    %c1_92 = arith.constant 1 : index
    %170 = vector.load %arg7[%c0_90, %c0_91, %c1_92] : memref<1x4x2xf32, #tpu.memory_space<vmem>>, vector<1x4x1xf32>
    %171 = vector.shape_cast %170 : vector<1x4x1xf32> to vector<4x1xf32>
    %172 = vector.shape_cast %169 : vector<4x1xf32> to vector<1x4x1xf32>
    tpu.vector_store %arg7[%c0_90, %c0_91, %c1_92], %172 {strides = array<i32>} : memref<1x4x2xf32, #tpu.memory_space<vmem>>, vector<1x4x1xf32>,
    %c0_93 = arith.constant 0 : index
    %c0_94 = arith.constant 0 : index
    %c0_95 = arith.constant 0 : index
    %173 = vector.load %arg6[%c0_93, %c0_94, %c0_95] : memref<1x4x256xf32, #tpu.memory_space<vmem>>, vector<1x4x256xf32>
    %174 = vector.shape_cast %173 : vector<1x4x256xf32> to vector<4x256xf32>
    %175 = vector.shape_cast %157 : vector<4x256xf32> to vector<1x4x256xf32>
    tpu.vector_store %arg6[%c0_93, %c0_94, %c0_95], %175 {strides = array<i32>} : memref<1x4x256xf32, #tpu.memory_space<vmem>>, vector<1x4x256xf32>,
    return
  }
  func.func @transform_0(%arg0: i32) -> (i32, i32, i32) {
    %c0_i32 = arith.constant 0 : i32
    %c0_i32_0 = arith.constant 0 : i32
    %c0_i32_1 = arith.constant 0 : i32
    %c0_i32_2 = arith.constant 0 : i32
    return %c0_i32, %c0_i32_0, %c0_i32_1 : i32, i32, i32
  }
  func.func @transform_1(%arg0: i32) -> (i32, i32) {
    %c0_i32 = arith.constant 0 : i32
    %c0_i32_0 = arith.constant 0 : i32
    %c0_i32_1 = arith.constant 0 : i32
    return %c0_i32, %c0_i32_0 : i32, i32
  }
  func.func @transform_2(%arg0: i32) -> (i32, i32) {
    %c0_i32 = arith.constant 0 : i32
    %c0_i32_0 = arith.constant 0 : i32
    %c0_i32_1 = arith.constant 0 : i32
    return %c0_i32, %c0_i32_0 : i32, i32
  }
  func.func @transform_3(%arg0: i32) -> (i32, i32, i32) {
    %c0_i32 = arith.constant 0 : i32
    %c0_i32_0 = arith.constant 0 : i32
    %c0_i32_1 = arith.constant 0 : i32
    return %arg0, %c0_i32, %c0_i32_0 : i32, i32, i32
  }
  func.func @transform_4(%arg0: i32) -> (i32, i32) {
    %c0_i32 = arith.constant 0 : i32
    %c0_i32_0 = arith.constant 0 : i32
    %c0_i32_1 = arith.constant 0 : i32
    return %c0_i32, %c0_i32_0 : i32, i32
  }
  func.func @transform_5(%arg0: i32) -> (i32, i32, i32) {
    %c0_i32 = arith.constant 0 : i32
    %c0_i32_0 = arith.constant 0 : i32
    %c0_i32_1 = arith.constant 0 : i32
    return %arg0, %c0_i32, %c0_i32_0 : i32, i32, i32
  }
  func.func @transform_6(%arg0: i32) -> (i32, i32, i32) {
    %c0_i32 = arith.constant 0 : i32
    %c0_i32_0 = arith.constant 0 : i32
    %c0_i32_1 = arith.constant 0 : i32
    return %arg0, %c0_i32, %c0_i32_0 : i32, i32, i32
  }
}

</mosaic_0001>

<llo_original>
// kernel: basic_block_forward.5
$region0: #{basic_block_forward.5}
  #allocation0 [shape = 'u32[]', space=smem, size = 0x4, offset = 0x4, fixed_abs, tag = 'smem constant byte address 0x4 - core index']
  #allocation1 [shape = 'u32[144,128]{1,0:T(1,128)}', space=vmem, size = 0x12000, scoped, tag = 'internal scratch']
  %s0 = inlined_call_operand.vmem [shape: f32[2,4,2], index: 0, kind: input, shape index: {}]
  %s1 = inlined_call_operand.vmem [shape: f32[4,1], index: 1, kind: input, shape index: {}]
  %s2 = inlined_call_operand.vmem [shape: f32[4,1], index: 2, kind: input, shape index: {}]
  %s3 = inlined_call_operand.vmem [shape: f32[2,4,256], index: 3, kind: input, shape index: {}]
  %s4 = inlined_call_operand.vmem [shape: f32[2,4,256], index: 4, kind: input, shape index: {}]
  %s5 = inlined_call_operand.vmem [shape: f32[2,4,256], index: 5, kind: output, shape index: {}]
  %s6 = sld [smem:[#allocation0]]
  $region53: #{basic_block_forward.5} parent=0
    _
  %s8 = ssub.s32 1, %s6
  %s9 = scalar_select 0, %s8, %s6
  loop: start=0, step=1, limit=4
  $region2: #{basic_block_forward.5} parent=0 // loop_pre_header
    _
  $region3: #{basic_block_forward.5} parent=0 // loop_header
    %s11 = sphi 0, %s15
    %p12 = scmp.ge.s32.totalorder %s11, 4
    %s19 = sphi 0, %s19
    %s21 = sphi 0, %s19
    %s22 = sphi 0, %s21
    %s36 = sphi 0, %s22
    %s40 = sphi 0, %s40
    %s42 = sphi 0, %s40
    %s43 = sphi 0, %s42
    %s57 = sphi 0, %s43
    %s61 = sphi 0, %s61
    %s63 = sphi 0, %s61
    %s64 = sphi 0, %s63
    %s78 = sphi 0, %s64
    %s84 = sphi 0, %s86
    %s87 = sphi 0, %s84
    %s88 = sphi 0, %s87
    %s104 = sphi 0, %s88
    %s110 = sphi 0, %s112
    %s113 = sphi 0, %s110
    %s114 = sphi 0, %s113
    %s130 = sphi 0, %s114
    %s136 = sphi 0, %s138
    %s139 = sphi 0, %s136
    %s140 = sphi 0, %s139
    %s156 = sphi 0, %s140
  $region4: #{basic_block_forward.5} parent=0 // loop_header_branch
    %14 = sbr.rel (%p12) target = $region8
  $region5: #{basic_block_forward.5} parent=0 // loop_body
    %s16 = ssub.s32 %s11, 1
    %s17 = ssub.s32 %s11, 2
    %s18 = sadd.s32 %s11, 1
    %s20 = sadd.s32 %s19, 1
    %p23 = scmp.eq.s32.totalorder %s11, 1
    %p24 = scmp.ne.s32.totalorder %s19, %s21
    %p25 = scmp.eq.s32.totalorder %s11, 0
    %p26 = por %p24, %p25
    %p27 = scmp.ne.s32.totalorder %s19, %s21
    %p28 = scmp.eq.s32.totalorder %s16, 1
    %p29 = por %p27, %p28
    %p30 = scmp.ne.s32.totalorder %s21, %s22
    %p31 = scmp.eq.s32.totalorder %s16, 0
    %p32 = por %p30, %p31
    %p33 = scmp.ne.s32.totalorder %s21, %s22
    %p34 = scmp.eq.s32.totalorder %s17, 1
    %p35 = por %p33, %p34
    %p37 = scmp.ne.s32.totalorder %s22, %s36
    %p38 = scmp.eq.s32.totalorder %s17, 0
    %p39 = por %p37, %p38
    %s41 = sadd.s32 %s40, 1
    %p44 = scmp.eq.s32.totalorder %s11, 1
    %p45 = scmp.ne.s32.totalorder %s40, %s42
    %p46 = scmp.eq.s32.totalorder %s11, 0
    %p47 = por %p45, %p46
    %p48 = scmp.ne.s32.totalorder %s40, %s42
    %p49 = scmp.eq.s32.totalorder %s16, 1
    %p50 = por %p48, %p49
    %p51 = scmp.ne.s32.totalorder %s42, %s43
    %p52 = scmp.eq.s32.totalorder %s16, 0
    %p53 = por %p51, %p52
    %p54 = scmp.ne.s32.totalorder %s42, %s43
    %p55 = scmp.eq.s32.totalorder %s17, 1
    %p56 = por %p54, %p55
    %p58 = scmp.ne.s32.totalorder %s43, %s57
    %p59 = scmp.eq.s32.totalorder %s17, 0
    %p60 = por %p58, %p59
    %s62 = sadd.s32 %s61, 1
    %p65 = scmp.eq.s32.totalorder %s11, 1
    %p66 = scmp.ne.s32.totalorder %s61, %s63
    %p67 = scmp.eq.s32.totalorder %s11, 0
    %p68 = por %p66, %p67
    %p69 = scmp.ne.s32.totalorder %s61, %s63
    %p70 = scmp.eq.s32.totalorder %s16, 1
    %p71 = por %p69, %p70
    %p72 = scmp.ne.s32.totalorder %s63, %s64
    %p73 = scmp.eq.s32.totalorder %s16, 0
    %p74 = por %p72, %p73
    %p75 = scmp.ne.s32.totalorder %s63, %s64
    %p76 = scmp.eq.s32.totalorder %s17, 1
    %p77 = por %p75, %p76
    %p79 = scmp.ne.s32.totalorder %s64, %s78
    %p80 = scmp.eq.s32.totalorder %s17, 0
    %p81 = por %p79, %p80
    %s82 = ssub.s32 %s11, %s18
    %p83 = scmp.eq.s32.totalorder %s82, 0
    %s85 = sadd.s32 %s84, 1
    %s86 = scalar_select %p83, %s84, %s85
    %p89 = pneg %p83
    %p90 = scmp.eq.s32.totalorder %s11, 1
    %p91 = por %p89, %p90
    %p92 = scmp.ne.s32.totalorder %s84, %s87
    %p93 = scmp.eq.s32.totalorder %s11, 0
    %p94 = por %p92, %p93
    %p95 = scmp.ne.s32.totalorder %s84, %s87
    %p96 = scmp.eq.s32.totalorder %s16, 1
    %p97 = por %p95, %p96
    %p98 = scmp.ne.s32.totalorder %s87, %s88
    %p99 = scmp.eq.s32.totalorder %s16, 0
    %p100 = por %p98, %p99
    %p101 = scmp.ne.s32.totalorder %s87, %s88
    %p102 = scmp.eq.s32.totalorder %s17, 1
    %p103 = por %p101, %p102
    %p105 = scmp.ne.s32.totalorder %s88, %s104
    %p106 = scmp.eq.s32.totalorder %s17, 0
    %p107 = por %p105, %p106
    %s108 = ssub.s32 %s11, %s18
    %p109 = scmp.eq.s32.totalorder %s108, 0
    %s111 = sadd.s32 %s110, 1
    %s112 = scalar_select %p109, %s110, %s111
    %p115 = pneg %p109
    %p116 = scmp.eq.s32.totalorder %s11, 1
    %p117 = por %p115, %p116
    %p118 = scmp.ne.s32.totalorder %s110, %s113
    %p119 = scmp.eq.s32.totalorder %s11, 0
    %p120 = por %p118, %p119
    %p121 = scmp.ne.s32.totalorder %s110, %s113
    %p122 = scmp.eq.s32.totalorder %s16, 1
    %p123 = por %p121, %p122
    %p124 = scmp.ne.s32.totalorder %s113, %s114
    %p125 = scmp.eq.s32.totalorder %s16, 0
    %p126 = por %p124, %p125
    %p127 = scmp.ne.s32.totalorder %s113, %s114
    %p128 = scmp.eq.s32.totalorder %s17, 1
    %p129 = por %p127, %p128
    %p131 = scmp.ne.s32.totalorder %s114, %s130
    %p132 = scmp.eq.s32.totalorder %s17, 0
    %p133 = por %p131, %p132
    %s134 = ssub.s32 %s11, %s18
    %p135 = scmp.eq.s32.totalorder %s134, 0
    %s137 = sadd.s32 %s136, 1
    %s138 = scalar_select %p135, %s136, %s137
    %p141 = pneg %p135
    %p142 = scmp.eq.s32.totalorder %s11, 1
    %p143 = por %p141, %p142
    %p144 = scmp.ne.s32.totalorder %s136, %s139
    %p145 = scmp.eq.s32.totalorder %s11, 0
    %p146 = por %p144, %p145
    %p147 = scmp.ne.s32.totalorder %s136, %s139
    %p148 = scmp.eq.s32.totalorder %s16, 1
    %p149 = por %p147, %p148
    %p150 = scmp.ne.s32.totalorder %s139, %s140
    %p151 = scmp.eq.s32.totalorder %s16, 0
    %p152 = por %p150, %p151
    %p153 = scmp.ne.s32.totalorder %s139, %s140
    %p154 = scmp.eq.s32.totalorder %s17, 1
    %p155 = por %p153, %p154
    %p157 = scmp.ne.s32.totalorder %s140, %s156
    %p158 = scmp.eq.s32.totalorder %s17, 0
    %p159 = por %p157, %p158
    %p160 = scmp.le.s32.totalorder 1, %s11
    %p161 = scmp.lt.s32.totalorder %s11, 3
    %p162 = pnand %p160, %p161
    %p163 = pneg %p162
    // Predicated region
    $region9: #{basic_block_forward.5} parent=5 // pred_check
      _
    $region10: #{basic_block_forward.5} parent=5 // pred_check_branch
      %165 = sbr.rel (%p162) target = $region12
    $region11: #{basic_block_forward.5} parent=5 // pred_region
      %s166 = ssub.s32 %s11, 1
      // Predicated region
      $region13: #{basic_block_forward.5} parent=11 // pred_check
        %p167 = pneg %p32
      $region14: #{basic_block_forward.5} parent=11 // pred_check_branch
        %169 = sbr.rel (%p167) target = $region16
      $region15: #{basic_block_forward.5} parent=11 // pred_region
        _
      $region16: #{basic_block_forward.5} parent=11 // pred_fallthru
        _
      // Predicated region
      $region17: #{basic_block_forward.5} parent=11 // pred_check
        %p170 = pneg %p53
      $region18: #{basic_block_forward.5} parent=11 // pred_check_branch
        %172 = sbr.rel (%p170) target = $region20
      $region19: #{basic_block_forward.5} parent=11 // pred_region
        _
      $region20: #{basic_block_forward.5} parent=11 // pred_fallthru
        _
      // Predicated region
      $region21: #{basic_block_forward.5} parent=11 // pred_check
        %p173 = pneg %p74
      $region22: #{basic_block_forward.5} parent=11 // pred_check_branch
        %175 = sbr.rel (%p173) target = $region24
      $region23: #{basic_block_forward.5} parent=11 // pred_region
        _
      $region24: #{basic_block_forward.5} parent=11 // pred_fallthru
        _
    $region12: #{basic_block_forward.5} parent=5 // pred_fallthru
      _
    %p176 = scmp.lt.s32.totalorder %s11, 2
    // Predicated region
    $region25: #{basic_block_forward.5} parent=5 // pred_check
      %p177 = pneg %p176
    $region26: #{basic_block_forward.5} parent=5 // pred_check_branch
      %179 = sbr.rel (%p177) target = $region28
    $region27: #{basic_block_forward.5} parent=5 // pred_region
      // Predicated region
      $region29: #{basic_block_forward.5} parent=27 // pred_check
        %p180 = pneg %p94
      $region30: #{basic_block_forward.5} parent=27 // pred_check_branch
        %182 = sbr.rel (%p180) target = $region32
      $region31: #{basic_block_forward.5} parent=27 // pred_region
        %p183 = scmp.lt.s32.totalorder %s11, 1
        %s184 = scalar_select %p183, %s11, 1
        %s185 = smul.addr %s184, 2
        %s186 = smul.addr %s185, 4
        %s187 = scalar_lea.vmem %s3, %s186
      $region32: #{basic_block_forward.5} parent=27 // pred_fallthru
        _
      // Predicated region
      $region33: #{basic_block_forward.5} parent=27 // pred_check
        %p188 = pneg %p120
      $region34: #{basic_block_forward.5} parent=27 // pred_check_branch
        %190 = sbr.rel (%p188) target = $region36
      $region35: #{basic_block_forward.5} parent=27 // pred_region
        %p191 = scmp.lt.s32.totalorder %s11, 1
        %s192 = scalar_select %p191, %s11, 1
        %s193 = smul.addr %s192, 2
        %s194 = smul.addr %s193, 4
        %s195 = scalar_lea.vmem %s4, %s194
      $region36: #{basic_block_forward.5} parent=27 // pred_fallthru
        _
    $region28: #{basic_block_forward.5} parent=5 // pred_fallthru
      _
    %p196 = scmp.le.s32.totalorder 1, %s11
    %p197 = scmp.lt.s32.totalorder %s11, 3
    %p198 = pnand %p196, %p197
    %p199 = pneg %p198
    // Predicated region
    $region37: #{basic_block_forward.5} parent=5 // pred_check
      _
    $region38: #{basic_block_forward.5} parent=5 // pred_check_branch
      %201 = sbr.rel (%p198) target = $region40
    $region39: #{basic_block_forward.5} parent=5 // pred_region
      %s202 = ssub.s32 %s11, 1
      %p203 = pneg %p32
      %p204 = pneg %p29
      %p205 = pneg %p53
      %p206 = pneg %p50
      %p207 = pneg %p74
      %p208 = pneg %p71
      %p209 = scmp.lt.s32.totalorder %s16, 1
      %s210 = scalar_select %p209, %s16, 1
      %s211 = smul.addr %s210, 2
      %s212 = smul.addr %s211, 4
      %s213 = scalar_lea.vmem %s3, %s212
      %p214 = pneg %p100
      %p215 = pneg %p97
      %p216 = scmp.lt.s32.totalorder %s16, 1
      %s217 = scalar_select %p216, %s16, 1
      %s218 = smul.addr %s217, 2
      %s219 = smul.addr %s218, 4
      %s220 = scalar_lea.vmem %s4, %s219
      %p221 = pneg %p126
      %p222 = pneg %p123
      %p223 = pneg %p152
      %p224 = pneg %p149
      %p225 = scmp.lt.s32.totalorder %s16, 1
      %s226 = scalar_select %p225, %s16, 1
      %s227 = smul.addr %s226, 2
      %s228 = smul.addr %s227, 4
      %s229 = scalar_lea.vmem %s5, %s228
      %p230 = scmp.lt.s32.totalorder %s16, 1
      %s231 = scalar_select %p230, %s16, 1
      %s232 = smul.addr %s231, 2
      %s233 = smul.addr %s232, 4
      %s234 = scalar_lea.vmem %s3, %s233
      %p235 = scmp.lt.s32.totalorder %s16, 1
      %s236 = scalar_select %p235, %s16, 1
      %s237 = smul.addr %s236, 2
      %s238 = smul.addr %s237, 4
      %s239 = scalar_lea.vmem %s4, %s238
      %p240 = scmp.lt.s32.totalorder %s16, 1
      %s241 = scalar_select %p240, %s16, 1
      %s242 = smul.addr %s241, 2
      %s243 = smul.addr %s242, 4
      %s244 = scalar_lea.vmem %s5, %s243
      %v245 = vld [vmem:[%s0] sm:$0xf]
      %v246 = vld [vmem:[%s0 + $0x4] sm:$0xf]
      %v247 = vld [vmem:[%s1] sm:$0xf]
      %v248 = vld [vmem:[%s2] sm:$0xf]
      %vm249 = vcmask 3072
      %v250 = vsel %vm249, %v245, 0.0
      %v251 = vsel %vm249, %v246, 0.0
      %v252 = vadd.f32 %v250, %v251
      %v253 = vmul.f32 %v252, 0.001953125
      %v254 = vmul.f32 %v245, 0.00390625
      %v255 = vmul.f32 %v246, 0.00390625
      %vm256 = vcmask 11272
      %v257 = vsel %vm256, %v245, 0.0
      %v258 = vsel %vm256, %v246, 0.0
      %v259 = vadd.f32 %v257, %v258
      %v260 = vsub.f32 %v254, %v253
      %v261 = vsub.f32 %v255, %v253
      %v262 = vmul.f32 %v260, %v260
      %v263 = vmul.f32 %v261, %v261
      %v264 = vsel %vm249, %v262, 0.0
      %v265 = vsel %vm249, %v263, 0.0
      %v266 = vadd.f32 %v264, %v265
      %v267 = vmul.f32 %v266, 256.0
      %269 = vrot.lane.b32.xlu0 %v267, 1
      %v270 = vpop.permute.xlu0 %269
      %v272 = vadd.f32 %v259, %v270
      %v273 = vmul.f32 %v272, 0.001953125
      %v274 = vmax.f32 %v273, 0.0
      %v275 = vadd.f32 %v274, 1e-05
      %v276 = vrsqrt.pop %v275
      %278 = vrot.lane.b32.xlu0 %v276, 127
      %v279 = vpop.permute.xlu0 %278
      %v281 = vmul.f32 %v247, %v279
      %v282 = vmul.f32 %v253, %v281
      %v283 = vsub.f32 %v248, %v282
      %v284 = vld [vmem:[%s234] sm:$0xff]
      %286 = vset.pattern.permute.xlu0 0
      %287 = vperm.xlu0 %286, %v281
      %v288 = vpop.permute.xlu0 %287
      %v290 = vunpack.c.l.s4 839922192
      %v291 = vunpack.c.0.s8 %v290
      %v292 = vlaneseq
      %v293 = vshrl.u32 %v292, 7
      %v294 = vsub.s32 %v291, %v293
      %v295 = vrot.slane %v288, %v294
      %v297 = vmul.f32 %v284, %v295
      %299 = vset.pattern.permute.xlu0 0
      %300 = vperm.xlu0 %299, %v283
      %v301 = vpop.permute.xlu0 %300
      %v303 = vunpack.c.l.s4 839922192
      %v304 = vunpack.c.0.s8 %v303
      %v305 = vlaneseq
      %v306 = vshrl.u32 %v305, 7
      %v307 = vsub.s32 %v304, %v306
      %v308 = vrot.slane %v301, %v307
      %v310 = vadd.f32 %v297, %v308
      %v311 = vld [vmem:[%s239] sm:$0xff]
      %v312 = vadd.f32 %v310, %v311
      %v313 = vmax.f32 %v312, 0.0
      %314 = vst [vmem:[%s244] sm:$0xff] %v313
      %p315 = scmp.lt.s32.totalorder %s16, 1
      %s316 = scalar_select %p315, %s16, 1
      %s317 = smul.addr %s316, 2
      %s318 = smul.addr %s317, 4
      %s319 = scalar_lea.vmem %s5, %s318
      // Predicated region
      $region41: #{basic_block_forward.5} parent=39 // pred_check
        %p320 = pneg %p149
      $region42: #{basic_block_forward.5} parent=39 // pred_check_branch
        %322 = sbr.rel (%p320) target = $region44
      $region43: #{basic_block_forward.5} parent=39 // pred_region
        _
      $region44: #{basic_block_forward.5} parent=39 // pred_fallthru
        _
    $region40: #{basic_block_forward.5} parent=5 // pred_fallthru
      _
    %p323 = scmp.le.s32.totalorder 2, %s11
    // Predicated region
    $region45: #{basic_block_forward.5} parent=5 // pred_check
      %p324 = pneg %p323
    $region46: #{basic_block_forward.5} parent=5 // pred_check_branch
      %326 = sbr.rel (%p324) target = $region48
    $region47: #{basic_block_forward.5} parent=5 // pred_region
      %s327 = ssub.s32 %s11, 2
      // Predicated region
      $region49: #{basic_block_forward.5} parent=47 // pred_check
        %p328 = pneg %p155
      $region50: #{basic_block_forward.5} parent=47 // pred_check_branch
        %330 = sbr.rel (%p328) target = $region52
      $region51: #{basic_block_forward.5} parent=47 // pred_region
        %p331 = scmp.lt.s32.totalorder %s17, 1
        %s332 = scalar_select %p331, %s17, 1
        %s333 = smul.addr %s332, 2
        %s334 = smul.addr %s333, 4
        %s335 = scalar_lea.vmem %s5, %s334
      $region52: #{basic_block_forward.5} parent=47 // pred_fallthru
        _
    $region48: #{basic_block_forward.5} parent=5 // pred_fallthru
      _
  $region6: #{basic_block_forward.5} parent=0 // loop_footer
    %s15 = sadd.s32 1, %s11
  $region7: #{basic_block_forward.5} parent=0 // loop_footer_branch
    %10 = sbr.rel target = $region3
  $region8: #{basic_block_forward.5} parent=0 // loop_exit
    _

// kernel: basic_block_forward.3
$region0: #{basic_block_forward.3}
  #allocation0 [shape = 'u32[]', space=smem, size = 0x4, offset = 0x4, fixed_abs, tag = 'smem constant byte address 0x4 - core index']
  #allocation1 [shape = 'u32[144,128]{1,0:T(1,128)}', space=vmem, size = 0x12000, scoped, tag = 'internal scratch']
  #allocation2 [shape = 'f32[4,290]{1,0:T(4,128)}', space=vmem, size = 0x1800, scoped, tag = 'scratch operand']
  #allocation3 [shape = 'f32[36,256]{1,0:T(8,128)}', space=vmem, size = 0xa000, scoped, tag = 'scratch operand']
  %s0 = inlined_call_operand.vmem [shape: f32[2,4,256], index: 0, kind: input, shape index: {}]
  %s1 = inlined_call_operand.vmem [shape: f32[4,36], index: 1, kind: input, shape index: {}]
  %s2 = inlined_call_operand.vmem [shape: f32[2,4,256], index: 2, kind: output, shape index: {0}]
  %s3 = inlined_call_operand.vmem [shape: f32[2,4,2], index: 3, kind: output, shape index: {1}]
  %4 = xla_tuple %s2, %s3
  %s5 = sld [smem:[#allocation0]]
  $region49: #{basic_block_forward.3} parent=0
    _
  %s7 = ssub.s32 1, %s5
  %s8 = scalar_select 0, %s7, %s5
  loop: start=0, step=1, limit=4
  $region2: #{basic_block_forward.3} parent=0 // loop_pre_header
    _
  $region3: #{basic_block_forward.3} parent=0 // loop_header
    %s10 = sphi 0, %s14
    %p11 = scmp.ge.s32.totalorder %s10, 4
    %s20 = sphi 0, %s22
    %s23 = sphi 0, %s20
    %s24 = sphi 0, %s23
    %s40 = sphi 0, %s24
    %s44 = sphi 0, %s44
    %s46 = sphi 0, %s44
    %s47 = sphi 0, %s46
    %s61 = sphi 0, %s47
    %s67 = sphi 0, %s69
    %s70 = sphi 0, %s67
    %s71 = sphi 0, %s70
    %s87 = sphi 0, %s71
    %s93 = sphi 0, %s95
    %s96 = sphi 0, %s93
    %s97 = sphi 0, %s96
    %s113 = sphi 0, %s97
  $region4: #{basic_block_forward.3} parent=0 // loop_header_branch
    %13 = sbr.rel (%p11) target = $region8
  $region5: #{basic_block_forward.3} parent=0 // loop_body
    %s15 = ssub.s32 %s10, 1
    %s16 = ssub.s32 %s10, 2
    %s17 = sadd.s32 %s10, 1
    %s18 = ssub.s32 %s10, %s17
    %p19 = scmp.eq.s32.totalorder %s18, 0
    %s21 = sadd.s32 %s20, 1
    %s22 = scalar_select %p19, %s20, %s21
    %p25 = pneg %p19
    %p26 = scmp.eq.s32.totalorder %s10, 1
    %p27 = por %p25, %p26
    %p28 = scmp.ne.s32.totalorder %s20, %s23
    %p29 = scmp.eq.s32.totalorder %s10, 0
    %p30 = por %p28, %p29
    %p31 = scmp.ne.s32.totalorder %s20, %s23
    %p32 = scmp.eq.s32.totalorder %s15, 1
    %p33 = por %p31, %p32
    %p34 = scmp.ne.s32.totalorder %s23, %s24
    %p35 = scmp.eq.s32.totalorder %s15, 0
    %p36 = por %p34, %p35
    %p37 = scmp.ne.s32.totalorder %s23, %s24
    %p38 = scmp.eq.s32.totalorder %s16, 1
    %p39 = por %p37, %p38
    %p41 = scmp.ne.s32.totalorder %s24, %s40
    %p42 = scmp.eq.s32.totalorder %s16, 0
    %p43 = por %p41, %p42
    %s45 = sadd.s32 %s44, 1
    %p48 = scmp.eq.s32.totalorder %s10, 1
    %p49 = scmp.ne.s32.totalorder %s44, %s46
    %p50 = scmp.eq.s32.totalorder %s10, 0
    %p51 = por %p49, %p50
    %p52 = scmp.ne.s32.totalorder %s44, %s46
    %p53 = scmp.eq.s32.totalorder %s15, 1
    %p54 = por %p52, %p53
    %p55 = scmp.ne.s32.totalorder %s46, %s47
    %p56 = scmp.eq.s32.totalorder %s15, 0
    %p57 = por %p55, %p56
    %p58 = scmp.ne.s32.totalorder %s46, %s47
    %p59 = scmp.eq.s32.totalorder %s16, 1
    %p60 = por %p58, %p59
    %p62 = scmp.ne.s32.totalorder %s47, %s61
    %p63 = scmp.eq.s32.totalorder %s16, 0
    %p64 = por %p62, %p63
    %s65 = ssub.s32 %s10, %s17
    %p66 = scmp.eq.s32.totalorder %s65, 0
    %s68 = sadd.s32 %s67, 1
    %s69 = scalar_select %p66, %s67, %s68
    %p72 = pneg %p66
    %p73 = scmp.eq.s32.totalorder %s10, 1
    %p74 = por %p72, %p73
    %p75 = scmp.ne.s32.totalorder %s67, %s70
    %p76 = scmp.eq.s32.totalorder %s10, 0
    %p77 = por %p75, %p76
    %p78 = scmp.ne.s32.totalorder %s67, %s70
    %p79 = scmp.eq.s32.totalorder %s15, 1
    %p80 = por %p78, %p79
    %p81 = scmp.ne.s32.totalorder %s70, %s71
    %p82 = scmp.eq.s32.totalorder %s15, 0
    %p83 = por %p81, %p82
    %p84 = scmp.ne.s32.totalorder %s70, %s71
    %p85 = scmp.eq.s32.totalorder %s16, 1
    %p86 = por %p84, %p85
    %p88 = scmp.ne.s32.totalorder %s71, %s87
    %p89 = scmp.eq.s32.totalorder %s16, 0
    %p90 = por %p88, %p89
    %s91 = ssub.s32 %s10, %s17
    %p92 = scmp.eq.s32.totalorder %s91, 0
    %s94 = sadd.s32 %s93, 1
    %s95 = scalar_select %p92, %s93, %s94
    %p98 = pneg %p92
    %p99 = scmp.eq.s32.totalorder %s10, 1
    %p100 = por %p98, %p99
    %p101 = scmp.ne.s32.totalorder %s93, %s96
    %p102 = scmp.eq.s32.totalorder %s10, 0
    %p103 = por %p101, %p102
    %p104 = scmp.ne.s32.totalorder %s93, %s96
    %p105 = scmp.eq.s32.totalorder %s15, 1
    %p106 = por %p104, %p105
    %p107 = scmp.ne.s32.totalorder %s96, %s97
    %p108 = scmp.eq.s32.totalorder %s15, 0
    %p109 = por %p107, %p108
    %p110 = scmp.ne.s32.totalorder %s96, %s97
    %p111 = scmp.eq.s32.totalorder %s16, 1
    %p112 = por %p110, %p111
    %p114 = scmp.ne.s32.totalorder %s97, %s113
    %p115 = scmp.eq.s32.totalorder %s16, 0
    %p116 = por %p114, %p115
    %p117 = scmp.le.s32.totalorder 1, %s10
    %p118 = scmp.lt.s32.totalorder %s10, 3
    %p119 = pnand %p117, %p118
    %p120 = pneg %p119
    // Predicated region
    $region9: #{basic_block_forward.3} parent=5 // pred_check
      _
    $region10: #{basic_block_forward.3} parent=5 // pred_check_branch
      %122 = sbr.rel (%p119) target = $region12
    $region11: #{basic_block_forward.3} parent=5 // pred_region
      %s123 = ssub.s32 %s10, 1
      // Predicated region
      $region13: #{basic_block_forward.3} parent=11 // pred_check
        %p124 = pneg %p57
      $region14: #{basic_block_forward.3} parent=11 // pred_check_branch
        %126 = sbr.rel (%p124) target = $region16
      $region15: #{basic_block_forward.3} parent=11 // pred_region
        _
      $region16: #{basic_block_forward.3} parent=11 // pred_fallthru
        _
    $region12: #{basic_block_forward.3} parent=5 // pred_fallthru
      _
    %p127 = scmp.lt.s32.totalorder %s10, 2
    // Predicated region
    $region17: #{basic_block_forward.3} parent=5 // pred_check
      %p128 = pneg %p127
    $region18: #{basic_block_forward.3} parent=5 // pred_check_branch
      %130 = sbr.rel (%p128) target = $region20
    $region19: #{basic_block_forward.3} parent=5 // pred_region
      // Predicated region
      $region21: #{basic_block_forward.3} parent=19 // pred_check
        %p131 = pneg %p30
      $region22: #{basic_block_forward.3} parent=19 // pred_check_branch
        %133 = sbr.rel (%p131) target = $region24
      $region23: #{basic_block_forward.3} parent=19 // pred_region
        %p134 = scmp.lt.s32.totalorder %s10, 1
        %s135 = scalar_select %p134, %s10, 1
        %s136 = smul.addr %s135, 2
        %s137 = smul.addr %s136, 4
        %s138 = scalar_lea.vmem %s0, %s137
      $region24: #{basic_block_forward.3} parent=19 // pred_fallthru
        _
    $region20: #{basic_block_forward.3} parent=5 // pred_fallthru
      _
    %p139 = scmp.le.s32.totalorder 1, %s10
    %p140 = scmp.lt.s32.totalorder %s10, 3
    %p141 = pnand %p139, %p140
    %p142 = pneg %p141
    // Predicated region
    $region25: #{basic_block_forward.3} parent=5 // pred_check
      _
    $region26: #{basic_block_forward.3} parent=5 // pred_check_branch
      %144 = sbr.rel (%p141) target = $region28
    $region27: #{basic_block_forward.3} parent=5 // pred_region
      %s145 = ssub.s32 %s10, 1
      %p146 = scmp.lt.s32.totalorder %s15, 1
      %s147 = scalar_select %p146, %s15, 1
      %s148 = smul.addr %s147, 2
      %s149 = smul.addr %s148, 4
      %s150 = scalar_lea.vmem %s0, %s149
      %p151 = pneg %p36
      %p152 = pneg %p33
      %p153 = pneg %p57
      %p154 = pneg %p54
      %p155 = pneg %p83
      %p156 = pneg %p80
      %p157 = scmp.lt.s32.totalorder %s15, 1
      %s158 = scalar_select %p157, %s15, 1
      %s159 = smul.addr %s158, 2
      %s160 = smul.addr %s159, 4
      %s161 = scalar_lea.vmem %s2, %s160
      %p162 = pneg %p109
      %p163 = pneg %p106
      %p164 = scmp.lt.s32.totalorder %s15, 1
      %s165 = scalar_select %p164, %s15, 1
      %s166 = smul.addr %s165, 4
      %s167 = scalar_lea.vmem %s3, %s166
      %p168 = scmp.lt.s32.totalorder %s15, 1
      %s169 = scalar_select %p168, %s15, 1
      %s170 = smul.addr %s169, 2
      %s171 = smul.addr %s170, 4
      %s172 = scalar_lea.vmem %s0, %s171
      %p173 = scmp.lt.s32.totalorder %s15, 1
      %s174 = scalar_select %p173, %s15, 1
      %s175 = smul.addr %s174, 2
      %s176 = smul.addr %s175, 4
      %s177 = scalar_lea.vmem %s2, %s176
      %p178 = scmp.lt.s32.totalorder %s15, 1
      %s179 = scalar_select %p178, %s15, 1
      %s180 = smul.addr %s179, 4
      %s181 = scalar_lea.vmem %s3, %s180
      %v182 = vld [vmem:[%s172] sm:$0xff]
      %vm183 = vcmask 134144
      %184 = vst.msk [vmem:[#allocation2] sm:$0xf] %vm183, 0.0
      %vm185 = vcmask 273544
      %186 = vst.msk [vmem:[#allocation2 + $0x8] sm:$0xf] %vm185, 0.0
      %188 = vrot.lane.b32.xlu0 %v182, 17
      %v189 = vpop.permute.xlu0 %188
      %v190 = vrot.slane %v189, 4
      %vm191 = vcmask 138240
      %v192 = vsel %vm191, %v190, %v189
      %vm195 = vcmask 1043592
      %vm196 = vcmask 1047556
      %vm197 = vmor %vm196, %vm195
      %198 = vst.msk [vmem:[#allocation2] sm:$0xff] %vm197, %v192
      %199 = vst.msk [vmem:[#allocation2 + $0x8] sm:$0xf] %vm183, %v190
      %v200 = vlaneseq
      %v201 = vand.u32 %v200, 127
      %v202 = vadd.s32 %v201, 128
      %vm203 = vcmp.lt.s32.totalorder %v201, 0
      %v204 = vsub.s32 0, %v201
      %v205 = vsel %vm203, %v204, %v201
      %v206 = vshrl.u32 %v205, 4
      %v207 = vand.u32 %v205, 15
      %v208 = vsub.s32 0, %v207
      %v209 = vsel %vm203, %v208, %v207
      %vm210 = vcmp.lt.s32.totalorder %v202, 0
      %v211 = vsub.s32 0, %v202
      %v212 = vsel %vm210, %v211, %v202
      %v213 = vshrl.u32 %v212, 4
      %v214 = vand.u32 %v212, 15
      %v215 = vsub.s32 0, %v214
      %v216 = vsel %vm210, %v215, %v214
      %vm217 = vcmp.ne.s32.totalorder %v209, 0
      %vm218 = vcmp.ne.s32.totalorder %v216, 0
      %vm219 = vcmp.lt.s32.totalorder %v209, 0
      %vm220 = vcmp.lt.s32.totalorder %v216, 0
      %vm221 = vmand %vm219, %vm217
      %vm222 = vmand %vm220, %vm218
      %v223 = vadd.s32 %v209, 16
      %v224 = vadd.s32 %v216, 16
      %v225 = vsel %vm221, %v223, %v209
      %v226 = vsel %vm222, %v224, %v216
      %v227 = vld [vmem:[#allocation2] sm:$0xff]
      %v228 = vadd.s32 %v225, 4294967295
      %v229 = vadd.s32 %v226, 4294967295
      %vm230 = vcmp.ge.s32.totalorder %v228, 0
      %vm231 = vcmp.ge.s32.totalorder %v229, 0
      %vm232 = vcmp.lt.s32.totalorder %v228, 16
      %vm233 = vcmp.lt.s32.totalorder %v229, 16
      %vm234 = vmand %vm230, %vm232
      %vm235 = vmand %vm231, %vm233
      %v236 = vsel %vm234, 1, 0
      %v237 = vsel %vm235, 1, 0
      %vm238 = vcmp.eq.s32.totalorder %v236, 1
      %vm239 = vcmp.eq.s32.totalorder %v237, 1
      %v241 = vcombine.high %v227, %v227
      %v243 = vsel %vm238, %v227, 0.0
      %v244 = vsel %vm239, %v241, 0.0
      %245 = vst [vmem:[#allocation3] sm:$0xf] %v243
      %246 = vst [vmem:[#allocation3 + $0x8] sm:$0xf] %v244
      %v247 = vld [vmem:[#allocation2] sm:$0xff]
      %v248 = vld [vmem:[#allocation2 + $0x8] sm:$0xf]
      %v251 = vcombine.low %v247, %v247
      %v252 = vcombine.low %v248, %v248
      %253 = vrot.lane.b32.xlu0 %v251, 127
      %v254 = vpop.permute.xlu0 %253
      %255 = vrot.lane.b32.xlu0 %v247, 127
      %v256 = vpop.permute.xlu0 %255
      %257 = vrot.lane.b32.xlu0 %v252, 127
      %v258 = vpop.permute.xlu0 %257
      %vm259 = vcmask 1039360
      %v260 = vsel %vm259, %v254, %v256
      %v261 = vsel %vm259, %v256, %v258
      %264 = vst [vmem:[#allocation3] sm:$0xf0] %v260
      %265 = vst [vmem:[#allocation3 + $0x8] sm:$0xf0] %v261
      %v266 = vld [vmem:[#allocation2] sm:$0xff]
      %v267 = vld [vmem:[#allocation2 + $0x8] sm:$0xf]
      %v268 = vadd.s32 %v225, 1
      %v269 = vadd.s32 %v226, 1
      %vm270 = vcmp.ge.s32.totalorder %v268, 0
      %vm271 = vcmp.ge.s32.totalorder %v269, 0
      %vm272 = vcmp.lt.s32.totalorder %v268, 16
      %vm273 = vcmp.lt.s32.totalorder %v269, 16
      %vm274 = vmand %vm270, %vm272
      %vm275 = vmand %vm271, %vm273
      %v276 = vsel %vm274, 1, 0
      %v277 = vsel %vm275, 1, 0
      %vm278 = vcmp.eq.s32.totalorder %v276, 1
      %vm279 = vcmp.eq.s32.totalorder %v277, 1
      %v282 = vcombine.high %v266, %v266
      %283 = vrot.lane.b32.xlu0 %v266, 126
      %v284 = vpop.permute.xlu0 %283
      %285 = vrot.lane.b32.xlu0 %v282, 126
      %v286 = vpop.permute.xlu0 %285
      %287 = vrot.lane.b32.xlu0 %v267, 126
      %v288 = vpop.permute.xlu0 %287
      %vm289 = vcmask 1031168
      %v290 = vsel %vm289, %v284, %v286
      %v291 = vsel %vm289, %v286, %v288
      %v294 = vsel %vm278, %v290, 0.0
      %v295 = vsel %vm279, %v291, 0.0
      %296 = vst [vmem:[#allocation3 + $0x10] sm:$0xf] %v294
      %297 = vst [vmem:[#allocation3 + $0x18] sm:$0xf] %v295
      %v298 = vld [vmem:[#allocation2] sm:$0xff]
      %v299 = vld [vmem:[#allocation2 + $0x8] sm:$0xf]
      %v302 = vcombine.high %v298, %v298
      %303 = vrot.lane.b32.xlu0 %v298, 112
      %v304 = vpop.permute.xlu0 %303
      %305 = vrot.lane.b32.xlu0 %v302, 112
      %v306 = vpop.permute.xlu0 %305
      %307 = vrot.lane.b32.xlu0 %v299, 112
      %v308 = vpop.permute.xlu0 %307
      %vm309 = vcmask 916480
      %v310 = vsel %vm309, %v304, %v306
      %v311 = vsel %vm309, %v306, %v308
      %v314 = vsel %vm238, %v310, 0.0
      %v315 = vsel %vm239, %v311, 0.0
      %v318 = vrot.slane %v314, 4
      %v319 = vrot.slane %v315, 4
      %322 = vst [vmem:[#allocation3 + $0x10] sm:$0xf0] %v318
      %323 = vst [vmem:[#allocation3 + $0x18] sm:$0xf0] %v319
      %v324 = vld [vmem:[#allocation2] sm:$0xff]
      %v325 = vld [vmem:[#allocation2 + $0x8] sm:$0xf]
      %v328 = vcombine.high %v324, %v324
      %329 = vrot.lane.b32.xlu0 %v324, 111
      %v330 = vpop.permute.xlu0 %329
      %331 = vrot.lane.b32.xlu0 %v328, 111
      %v332 = vpop.permute.xlu0 %331
      %333 = vrot.lane.b32.xlu0 %v325, 111
      %v334 = vpop.permute.xlu0 %333
      %vm335 = vcmask 908288
      %v336 = vsel %vm335, %v330, %v332
      %v337 = vsel %vm335, %v332, %v334
      %340 = vst [vmem:[#allocation3 + $0x20] sm:$0xf] %v336
      %341 = vst [vmem:[#allocation3 + $0x28] sm:$0xf] %v337
      %v342 = vld [vmem:[#allocation2] sm:$0xff]
      %v343 = vld [vmem:[#allocation2 + $0x8] sm:$0xf]
      %v346 = vcombine.high %v342, %v342
      %347 = vrot.lane.b32.xlu0 %v342, 110
      %v348 = vpop.permute.xlu0 %347
      %349 = vrot.lane.b32.xlu0 %v346, 110
      %v350 = vpop.permute.xlu0 %349
      %351 = vrot.lane.b32.xlu0 %v343, 110
      %v352 = vpop.permute.xlu0 %351
      %vm353 = vcmask 900096
      %v354 = vsel %vm353, %v348, %v350
      %v355 = vsel %vm353, %v350, %v352
      %v358 = vsel %vm278, %v354, 0.0
      %v359 = vsel %vm279, %v355, 0.0
      %v362 = vrot.slane %v358, 4
      %v363 = vrot.slane %v359, 4
      %366 = vst [vmem:[#allocation3 + $0x20] sm:$0xf0] %v362
      %367 = vst [vmem:[#allocation3 + $0x28] sm:$0xf0] %v363
      %v368 = vld [vmem:[#allocation2] sm:$0xff]
      %v369 = vld [vmem:[#allocation2 + $0x8] sm:$0xf]
      %v372 = vcombine.high %v368, %v368
      %373 = vrot.lane.b32.xlu0 %v368, 96
      %v374 = vpop.permute.xlu0 %373
      %375 = vrot.lane.b32.xlu0 %v372, 96
      %v376 = vpop.permute.xlu0 %375
      %377 = vrot.lane.b32.xlu0 %v369, 96
      %v378 = vpop.permute.xlu0 %377
      %vm379 = vcmask 785408
      %v380 = vsel %vm379, %v374, %v376
      %v381 = vsel %vm379, %v376, %v378
      %v384 = vsel %vm238, %v380, 0.0
      %v385 = vsel %vm239, %v381, 0.0
      %386 = vst [vmem:[#allocation3 + $0x30] sm:$0xf] %v384
      %387 = vst [vmem:[#allocation3 + $0x38] sm:$0xf] %v385
      %v388 = vld [vmem:[#allocation2] sm:$0xff]
      %v389 = vld [vmem:[#allocation2 + $0x8] sm:$0xf]
      %v392 = vcombine.low %v388, %v388
      %v393 = vcombine.low %v389, %v389
      %394 = vrot.lane.b32.xlu0 %v392, 95
      %v395 = vpop.permute.xlu0 %394
      %396 = vrot.lane.b32.xlu0 %v388, 95
      %v397 = vpop.permute.xlu0 %396
      %398 = vrot.lane.b32.xlu0 %v393, 95
      %v399 = vpop.permute.xlu0 %398
      %vm400 = vcmask 777216
      %v401 = vsel %vm400, %v395, %v397
      %v402 = vsel %vm400, %v397, %v399
      %405 = vst [vmem:[#allocation3 + $0x30] sm:$0xf0] %v401
      %406 = vst [vmem:[#allocation3 + $0x38] sm:$0xf0] %v402
      %v407 = vld [vmem:[#allocation2] sm:$0xff]
      %v408 = vld [vmem:[#allocation2 + $0x8] sm:$0xf]
      %v411 = vcombine.high %v407, %v407
      %412 = vrot.lane.b32.xlu0 %v407, 94
      %v413 = vpop.permute.xlu0 %412
      %414 = vrot.lane.b32.xlu0 %v411, 94
      %v415 = vpop.permute.xlu0 %414
      %416 = vrot.lane.b32.xlu0 %v408, 94
      %v417 = vpop.permute.xlu0 %416
      %vm418 = vcmask 769024
      %v419 = vsel %vm418, %v413, %v415
      %v420 = vsel %vm418, %v415, %v417
      %v423 = vsel %vm278, %v419, 0.0
      %v424 = vsel %vm279, %v420, 0.0
      %425 = vst [vmem:[#allocation3 + $0x40] sm:$0xf] %v423
      %426 = vst [vmem:[#allocation3 + $0x48] sm:$0xf] %v424
      %v427 = vld [vmem:[%s1] sm:$0xf]
      %v428 = vld [vmem:[#allocation3] sm:$0xff]
      %v429 = vld [vmem:[#allocation3 + $0x8] sm:$0xff]
      %v430 = vld [vmem:[#allocation3 + $0x10] sm:$0xff]
      %v431 = vld [vmem:[#allocation3 + $0x18] sm:$0xff]
      %v432 = vld [vmem:[#allocation3 + $0x20] sm:$0xff]
      %v433 = vld [vmem:[#allocation3 + $0x28] sm:$0xff]
      %v434 = vld [vmem:[#allocation3 + $0x30] sm:$0xff]
      %v435 = vld [vmem:[#allocation3 + $0x38] sm:$0xff]
      %v436 = vld [vmem:[#allocation3 + $0x40] sm:$0xf]
      %v437 = vld [vmem:[#allocation3 + $0x48] sm:$0xf]
      %vm438 = vcmask 293888
      %v440 = vsel %vm438, %v427, 0
      %vm442 = vcmask 1043456
      %v444 = vsel %vm442, %v436, 0
      %v447 = vsel %vm442, %v437, 0
      %v449 = vand.u32 %v429, 4294901760
      %450 = vmatprep.subr.mxu0 %v449
      %v451 = vand.u32 %v428, 4294901760
      %452 = vmatpush1.msra.mxu0 %v451
      %v453 = vand.u32 %v431, 4294901760
      %454 = vmatprep.subr.mxu0 %v453
      %v455 = vand.u32 %v430, 4294901760
      %456 = vmatpush1.msra.mxu0 %v455
      %v457 = vand.u32 %v433, 4294901760
      %458 = vmatprep.subr.mxu0 %v457
      %v459 = vand.u32 %v432, 4294901760
      %460 = vmatpush1.msra.mxu0 %v459
      %v461 = vand.u32 %v435, 4294901760
      %462 = vmatprep.subr.mxu0 %v461
      %v463 = vand.u32 %v434, 4294901760
      %464 = vmatpush1.msra.mxu0 %v463
      %v465 = vand.u32 %v447, 4294901760
      %466 = vmatprep.subr.mxu0 %v465
      %v467 = vand.u32 %v444, 4294901760
      %468 = vmatpush1.msra.mxu0 %v467
      %469 = vmatprep.subr.mxu0 0.0
      %470 = vmatpush1.msra.mxu0 0.0
      %471 = vmatprep.subr.mxu0 0.0
      %472 = vmatpush1.msra.mxu0 0.0
      %473 = vmatprep.subr.mxu0 0.0
      %474 = vmatpush1.msra.mxu0 0.0
      %475 = vmatprep.subr.mxu0 0.0
      %476 = vmatpush1.msra.mxu0 0.0
      %477 = vmatprep.subr.mxu0 0.0
      %478 = vmatpush1.msra.mxu0 0.0
      %479 = vmatprep.subr.mxu0 0.0
      %480 = vmatpush1.msra.mxu0 0.0
      %481 = vmatprep.subr.mxu0 0.0
      %482 = vmatpush1.msra.mxu0 0.0
      %483 = vmatprep.subr.mxu0 0.0
      %484 = vmatpush1.msra.mxu0 0.0
      %485 = vmatprep.subr.mxu0 0.0
      %486 = vmatpush1.msra.mxu0 0.0
      %487 = vmatprep.subr.mxu0 0.0
      %488 = vmatpush1.msra.mxu0 0.0
      %489 = vmatprep.subr.mxu0 0.0
      %490 = vmatpush1.msra.mxu0 0.0
      %491 = vmatprep.subr.mxu0 0.0
      %492 = vmatpush1.msra.mxu0 0.0
      %493 = vmatprep.subr.mxu0 0.0
      %494 = vmatpush1.msra.mxu0 0.0
      %495 = vmatprep.subr.mxu0 0.0
      %496 = vmatpush1.msra.mxu0 0.0
      %497 = vmatprep.subr.mxu0 0.0
      %498 = vmatpush1.msra.mxu0 0.0
      %499 = vmatprep.subr.mxu0 0.0
      %500 = vmatpush1.msra.mxu0 0.0
      %501 = vmatprep.subr.mxu0 0.0
      %502 = vmatpush1.msra.mxu0 0.0
      %503 = vmatprep.subr.mxu0 0.0
      %504 = vmatpush1.msra.mxu0 0.0
      %505 = vmatprep.subr.mxu0 0.0
      %506 = vmatpush1.msra.mxu0 0.0
      %507 = vmatprep.subr.mxu0 0.0
      %508 = vmatpush1.msra.mxu0 0.0
      %509 = vmatprep.subr.mxu0 0.0
      %510 = vmatpush1.msra.mxu0 0.0
      %511 = vmatprep.subr.mxu0 0.0
      %512 = vmatpush1.msra.mxu0 0.0
      %513 = vmatprep.subr.mxu0 0.0
      %514 = vmatpush1.msra.mxu0 0.0
      %515 = vmatprep.subr.mxu0 0.0
      %516 = vmatpush1.msra.mxu0 0.0
      %517 = vmatprep.subr.mxu0 0.0
      %518 = vmatpush1.msra.mxu0 0.0
      %519 = vmatprep.subr.mxu0 0.0
      %520 = vmatpush1.msra.mxu0 0.0
      %521 = vmatprep.subr.mxu0 0.0
      %522 = vmatpush1.msra.mxu0 0.0
      %523 = vmatprep.mubr.f32.mxu0 0.0
      %v524 = vand.u32 %v440, 4294901760
      %v525 = vsub.f32 %v440, %v524
      %v526 = vand.u32 %v525, 4294901760
      %v527 = vsub.f32 %v525, %v526
      %v528 = vand.u32 %v527, 4294901760
      %529 = vmatmul.mubr.f32.gmra.mrb[0].mxu0 %v528
      %v530 = vpop.f32.mrb[0].mxu0
      %v531 = vadd.f32 0.0, %v530
      %v532 = vpop.f32.mrb[0].mxu0
      %v533 = vadd.f32 0.0, %v532
      %534 = vdwg.mxu0
      %v535 = vand.u32 %v429, 4294901760
      %v536 = vsub.f32 %v429, %v535
      %v537 = vand.u32 %v536, 4294901760
      %v538 = vsub.f32 %v536, %v537
      %v539 = vand.u32 %v538, 4294901760
      %540 = vmatprep.subr.mxu0 %v539
      %v541 = vand.u32 %v428, 4294901760
      %v542 = vsub.f32 %v428, %v541
      %v543 = vand.u32 %v542, 4294901760
      %v544 = vsub.f32 %v542, %v543
      %v545 = vand.u32 %v544, 4294901760
      %546 = vmatpush1.msra.mxu0 %v545
      %v547 = vand.u32 %v431, 4294901760
      %v548 = vsub.f32 %v431, %v547
      %v549 = vand.u32 %v548, 4294901760
      %v550 = vsub.f32 %v548, %v549
      %v551 = vand.u32 %v550, 4294901760
      %552 = vmatprep.subr.mxu0 %v551
      %v553 = vand.u32 %v430, 4294901760
      %v554 = vsub.f32 %v430, %v553
      %v555 = vand.u32 %v554, 4294901760
      %v556 = vsub.f32 %v554, %v555
      %v557 = vand.u32 %v556, 4294901760
      %558 = vmatpush1.msra.mxu0 %v557
      %v559 = vand.u32 %v433, 4294901760
      %v560 = vsub.f32 %v433, %v559
      %v561 = vand.u32 %v560, 4294901760
      %v562 = vsub.f32 %v560, %v561
      %v563 = vand.u32 %v562, 4294901760
      %564 = vmatprep.subr.mxu0 %v563
      %v565 = vand.u32 %v432, 4294901760
      %v566 = vsub.f32 %v432, %v565
      %v567 = vand.u32 %v566, 4294901760
      %v568 = vsub.f32 %v566, %v567
      %v569 = vand.u32 %v568, 4294901760
      %570 = vmatpush1.msra.mxu0 %v569
      %v571 = vand.u32 %v435, 4294901760
      %v572 = vsub.f32 %v435, %v571
      %v573 = vand.u32 %v572, 4294901760
      %v574 = vsub.f32 %v572, %v573
      %v575 = vand.u32 %v574, 4294901760
      %576 = vmatprep.subr.mxu0 %v575
      %v577 = vand.u32 %v434, 4294901760
      %v578 = vsub.f32 %v434, %v577
      %v579 = vand.u32 %v578, 4294901760
      %v580 = vsub.f32 %v578, %v579
      %v581 = vand.u32 %v580, 4294901760
      %582 = vmatpush1.msra.mxu0 %v581
      %v583 = vand.u32 %v447, 4294901760
      %v584 = vsub.f32 %v447, %v583
      %v585 = vand.u32 %v584, 4294901760
      %v586 = vsub.f32 %v584, %v585
      %v587 = vand.u32 %v586, 4294901760
      %588 = vmatprep.subr.mxu0 %v587
      %v589 = vand.u32 %v444, 4294901760
      %v590 = vsub.f32 %v444, %v589
      %v591 = vand.u32 %v590, 4294901760
      %v592 = vsub.f32 %v590, %v591
      %v593 = vand.u32 %v592, 4294901760
      %594 = vmatpush1.msra.mxu0 %v593
      %595 = vmatprep.subr.mxu0 0.0
      %596 = vmatpush1.msra.mxu0 0.0
      %597 = vmatprep.subr.mxu0 0.0
      %598 = vmatpush1.msra.mxu0 0.0
      %599 = vmatprep.subr.mxu0 0.0
      %600 = vmatpush1.msra.mxu0 0.0
      %601 = vmatprep.subr.mxu0 0.0
      %602 = vmatpush1.msra.mxu0 0.0
      %603 = vmatprep.subr.mxu0 0.0
      %604 = vmatpush1.msra.mxu0 0.0
      %605 = vmatprep.subr.mxu0 0.0
      %606 = vmatpush1.msra.mxu0 0.0
      %607 = vmatprep.subr.mxu0 0.0
      %608 = vmatpush1.msra.mxu0 0.0
      %609 = vmatprep.subr.mxu0 0.0
      %610 = vmatpush1.msra.mxu0 0.0
      %611 = vmatprep.subr.mxu0 0.0
      %612 = vmatpush1.msra.mxu0 0.0
      %613 = vmatprep.subr.mxu0 0.0
      %614 = vmatpush1.msra.mxu0 0.0
      %615 = vmatprep.subr.mxu0 0.0
      %616 = vmatpush1.msra.mxu0 0.0
      %617 = vmatprep.subr.mxu0 0.0
      %618 = vmatpush1.msra.mxu0 0.0
      %619 = vmatprep.subr.mxu0 0.0
      %620 = vmatpush1.msra.mxu0 0.0
      %621 = vmatprep.subr.mxu0 0.0
      %622 = vmatpush1.msra.mxu0 0.0
      %623 = vmatprep.subr.mxu0 0.0
      %624 = vmatpush1.msra.mxu0 0.0
      %625 = vmatprep.subr.mxu0 0.0
      %626 = vmatpush1.msra.mxu0 0.0
      %627 = vmatprep.subr.mxu0 0.0
      %628 = vmatpush1.msra.mxu0 0.0
      %629 = vmatprep.subr.mxu0 0.0
      %630 = vmatpush1.msra.mxu0 0.0
      %631 = vmatprep.subr.mxu0 0.0
      %632 = vmatpush1.msra.mxu0 0.0
      %633 = vmatprep.subr.mxu0 0.0
      %634 = vmatpush1.msra.mxu0 0.0
      %635 = vmatprep.subr.mxu0 0.0
      %636 = vmatpush1.msra.mxu0 0.0
      %637 = vmatprep.subr.mxu0 0.0
      %638 = vmatpush1.msra.mxu0 0.0
      %639 = vmatprep.subr.mxu0 0.0
      %640 = vmatpush1.msra.mxu0 0.0
      %641 = vmatprep.subr.mxu0 0.0
      %642 = vmatpush1.msra.mxu0 0.0
      %643 = vmatprep.subr.mxu0 0.0
      %644 = vmatpush1.msra.mxu0 0.0
      %645 = vmatprep.subr.mxu0 0.0
      %646 = vmatpush1.msra.mxu0 0.0
      %647 = vmatprep.subr.mxu0 0.0
      %648 = vmatpush1.msra.mxu0 0.0
      %649 = vmatprep.mubr.f32.mxu0 0.0
      %v650 = vand.u32 %v440, 4294901760
      %651 = vmatmul.mubr.f32.gmra.mrb[0].mxu0 %v650
      %v652 = vpop.f32.mrb[0].mxu0
      %v653 = vadd.f32 %v531, %v652
      %v654 = vpop.f32.mrb[0].mxu0
      %v655 = vadd.f32 %v533, %v654
      %656 = vdwg.mxu0
      %v657 = vand.u32 %v429, 4294901760
      %v658 = vsub.f32 %v429, %v657
      %659 = vmatprep.subr.mxu0 %v658
      %v660 = vand.u32 %v428, 4294901760
      %v661 = vsub.f32 %v428, %v660
      %662 = vmatpush1.msra.mxu0 %v661
      %v663 = vand.u32 %v431, 4294901760
      %v664 = vsub.f32 %v431, %v663
      %665 = vmatprep.subr.mxu0 %v664
      %v666 = vand.u32 %v430, 4294901760
      %v667 = vsub.f32 %v430, %v666
      %668 = vmatpush1.msra.mxu0 %v667
      %v669 = vand.u32 %v433, 4294901760
      %v670 = vsub.f32 %v433, %v669
      %671 = vmatprep.subr.mxu0 %v670
      %v672 = vand.u32 %v432, 4294901760
      %v673 = vsub.f32 %v432, %v672
      %674 = vmatpush1.msra.mxu0 %v673
      %v675 = vand.u32 %v435, 4294901760
      %v676 = vsub.f32 %v435, %v675
      %677 = vmatprep.subr.mxu0 %v676
      %v678 = vand.u32 %v434, 4294901760
      %v679 = vsub.f32 %v434, %v678
      %680 = vmatpush1.msra.mxu0 %v679
      %v681 = vand.u32 %v447, 4294901760
      %v682 = vsub.f32 %v447, %v681
      %683 = vmatprep.subr.mxu0 %v682
      %v684 = vand.u32 %v444, 4294901760
      %v685 = vsub.f32 %v444, %v684
      %686 = vmatpush1.msra.mxu0 %v685
      %687 = vmatprep.subr.mxu0 0.0
      %688 = vmatpush1.msra.mxu0 0.0
      %689 = vmatprep.subr.mxu0 0.0
      %690 = vmatpush1.msra.mxu0 0.0
      %691 = vmatprep.subr.mxu0 0.0
      %692 = vmatpush1.msra.mxu0 0.0
      %693 = vmatprep.subr.mxu0 0.0
      %694 = vmatpush1.msra.mxu0 0.0
      %695 = vmatprep.subr.mxu0 0.0
      %696 = vmatpush1.msra.mxu0 0.0
      %697 = vmatprep.subr.mxu0 0.0
      %698 = vmatpush1.msra.mxu0 0.0
      %699 = vmatprep.subr.mxu0 0.0
      %700 = vmatpush1.msra.mxu0 0.0
      %701 = vmatprep.subr.mxu0 0.0
      %702 = vmatpush1.msra.mxu0 0.0
      %703 = vmatprep.subr.mxu0 0.0
      %704 = vmatpush1.msra.mxu0 0.0
      %705 = vmatprep.subr.mxu0 0.0
      %706 = vmatpush1.msra.mxu0 0.0
      %707 = vmatprep.subr.mxu0 0.0
      %708 = vmatpush1.msra.mxu0 0.0
      %709 = vmatprep.subr.mxu0 0.0
      %710 = vmatpush1.msra.mxu0 0.0
      %711 = vmatprep.subr.mxu0 0.0
      %712 = vmatpush1.msra.mxu0 0.0
      %713 = vmatprep.subr.mxu0 0.0
      %714 = vmatpush1.msra.mxu0 0.0
      %715 = vmatprep.subr.mxu0 0.0
      %716 = vmatpush1.msra.mxu0 0.0
      %717 = vmatprep.subr.mxu0 0.0
      %718 = vmatpush1.msra.mxu0 0.0
      %719 = vmatprep.subr.mxu0 0.0
      %720 = vmatpush1.msra.mxu0 0.0
      %721 = vmatprep.subr.mxu0 0.0
      %722 = vmatpush1.msra.mxu0 0.0
      %723 = vmatprep.subr.mxu0 0.0
      %724 = vmatpush1.msra.mxu0 0.0
      %725 = vmatprep.subr.mxu0 0.0
      %726 = vmatpush1.msra.mxu0 0.0
      %727 = vmatprep.subr.mxu0 0.0
      %728 = vmatpush1.msra.mxu0 0.0
      %729 = vmatprep.subr.mxu0 0.0
      %730 = vmatpush1.msra.mxu0 0.0
      %731 = vmatprep.subr.mxu0 0.0
      %732 = vmatpush1.msra.mxu0 0.0
      %733 = vmatprep.subr.mxu0 0.0
      %734 = vmatpush1.msra.mxu0 0.0
      %735 = vmatprep.subr.mxu0 0.0
      %736 = vmatpush1.msra.mxu0 0.0
      %737 = vmatprep.subr.mxu0 0.0
      %738 = vmatpush1.msra.mxu0 0.0
      %739 = vmatprep.subr.mxu0 0.0
      %740 = vmatpush1.msra.mxu0 0.0
      %741 = vmatprep.mubr.f32.mxu0 0.0
      %v742 = vand.u32 %v440, 4294901760
      %v743 = vsub.f32 %v440, %v742
      %744 = vmatmul.mubr.f32.gmra.mrb[0].mxu0 %v743
      %v745 = vpop.f32.mrb[0].mxu0
      %v746 = vadd.f32 %v653, %v745
      %v747 = vpop.f32.mrb[0].mxu0
      %v748 = vadd.f32 %v655, %v747
      %749 = vdwg.mxu0
      %v750 = vand.u32 %v429, 4294901760
      %751 = vmatprep.subr.mxu0 %v750
      %v752 = vand.u32 %v428, 4294901760
      %753 = vmatpush1.msra.mxu0 %v752
      %v754 = vand.u32 %v431, 4294901760
      %755 = vmatprep.subr.mxu0 %v754
      %v756 = vand.u32 %v430, 4294901760
      %757 = vmatpush1.msra.mxu0 %v756
      %v758 = vand.u32 %v433, 4294901760
      %759 = vmatprep.subr.mxu0 %v758
      %v760 = vand.u32 %v432, 4294901760
      %761 = vmatpush1.msra.mxu0 %v760
      %v762 = vand.u32 %v435, 4294901760
      %763 = vmatprep.subr.mxu0 %v762
      %v764 = vand.u32 %v434, 4294901760
      %765 = vmatpush1.msra.mxu0 %v764
      %v766 = vand.u32 %v447, 4294901760
      %767 = vmatprep.subr.mxu0 %v766
      %v768 = vand.u32 %v444, 4294901760
      %769 = vmatpush1.msra.mxu0 %v768
      %770 = vmatprep.subr.mxu0 0.0
      %771 = vmatpush1.msra.mxu0 0.0
      %772 = vmatprep.subr.mxu0 0.0
      %773 = vmatpush1.msra.mxu0 0.0
      %774 = vmatprep.subr.mxu0 0.0
      %775 = vmatpush1.msra.mxu0 0.0
      %776 = vmatprep.subr.mxu0 0.0
      %777 = vmatpush1.msra.mxu0 0.0
      %778 = vmatprep.subr.mxu0 0.0
      %779 = vmatpush1.msra.mxu0 0.0
      %780 = vmatprep.subr.mxu0 0.0
      %781 = vmatpush1.msra.mxu0 0.0
      %782 = vmatprep.subr.mxu0 0.0
      %783 = vmatpush1.msra.mxu0 0.0
      %784 = vmatprep.subr.mxu0 0.0
      %785 = vmatpush1.msra.mxu0 0.0
      %786 = vmatprep.subr.mxu0 0.0
      %787 = vmatpush1.msra.mxu0 0.0
      %788 = vmatprep.subr.mxu0 0.0
      %789 = vmatpush1.msra.mxu0 0.0
      %790 = vmatprep.subr.mxu0 0.0
      %791 = vmatpush1.msra.mxu0 0.0
      %792 = vmatprep.subr.mxu0 0.0
      %793 = vmatpush1.msra.mxu0 0.0
      %794 = vmatprep.subr.mxu0 0.0
      %795 = vmatpush1.msra.mxu0 0.0
      %796 = vmatprep.subr.mxu0 0.0
      %797 = vmatpush1.msra.mxu0 0.0
      %798 = vmatprep.subr.mxu0 0.0
      %799 = vmatpush1.msra.mxu0 0.0
      %800 = vmatprep.subr.mxu0 0.0
      %801 = vmatpush1.msra.mxu0 0.0
      %802 = vmatprep.subr.mxu0 0.0
      %803 = vmatpush1.msra.mxu0 0.0
      %804 = vmatprep.subr.mxu0 0.0
      %805 = vmatpush1.msra.mxu0 0.0
      %806 = vmatprep.subr.mxu0 0.0
      %807 = vmatpush1.msra.mxu0 0.0
      %808 = vmatprep.subr.mxu0 0.0
      %809 = vmatpush1.msra.mxu0 0.0
      %810 = vmatprep.subr.mxu0 0.0
      %811 = vmatpush1.msra.mxu0 0.0
      %812 = vmatprep.subr.mxu0 0.0
      %813 = vmatpush1.msra.mxu0 0.0
      %814 = vmatprep.subr.mxu0 0.0
      %815 = vmatpush1.msra.mxu0 0.0
      %816 = vmatprep.subr.mxu0 0.0
      %817 = vmatpush1.msra.mxu0 0.0
      %818 = vmatprep.subr.mxu0 0.0
      %819 = vmatpush1.msra.mxu0 0.0
      %820 = vmatprep.subr.mxu0 0.0
      %821 = vmatpush1.msra.mxu0 0.0
      %822 = vmatprep.subr.mxu0 0.0
      %823 = vmatpush1.msra.mxu0 0.0
      %824 = vmatprep.mubr.f32.mxu0 0.0
      %v825 = vand.u32 %v440, 4294901760
      %v826 = vsub.f32 %v440, %v825
      %v827 = vand.u32 %v826, 4294901760
      %828 = vmatmul.mubr.f32.gmra.mrb[0].mxu0 %v827
      %v829 = vpop.f32.mrb[0].mxu0
      %v830 = vadd.f32 %v746, %v829
      %v831 = vpop.f32.mrb[0].mxu0
      %v832 = vadd.f32 %v748, %v831
      %833 = vdwg.mxu0
      %v834 = vand.u32 %v429, 4294901760
      %v835 = vsub.f32 %v429, %v834
      %v836 = vand.u32 %v835, 4294901760
      %837 = vmatprep.subr.mxu0 %v836
      %v838 = vand.u32 %v428, 4294901760
      %v839 = vsub.f32 %v428, %v838
      %v840 = vand.u32 %v839, 4294901760
      %841 = vmatpush1.msra.mxu0 %v840
      %v842 = vand.u32 %v431, 4294901760
      %v843 = vsub.f32 %v431, %v842
      %v844 = vand.u32 %v843, 4294901760
      %845 = vmatprep.subr.mxu0 %v844
      %v846 = vand.u32 %v430, 4294901760
      %v847 = vsub.f32 %v430, %v846
      %v848 = vand.u32 %v847, 4294901760
      %849 = vmatpush1.msra.mxu0 %v848
      %v850 = vand.u32 %v433, 4294901760
      %v851 = vsub.f32 %v433, %v850
      %v852 = vand.u32 %v851, 4294901760
      %853 = vmatprep.subr.mxu0 %v852
      %v854 = vand.u32 %v432, 4294901760
      %v855 = vsub.f32 %v432, %v854
      %v856 = vand.u32 %v855, 4294901760
      %857 = vmatpush1.msra.mxu0 %v856
      %v858 = vand.u32 %v435, 4294901760
      %v859 = vsub.f32 %v435, %v858
      %v860 = vand.u32 %v859, 4294901760
      %861 = vmatprep.subr.mxu0 %v860
      %v862 = vand.u32 %v434, 4294901760
      %v863 = vsub.f32 %v434, %v862
      %v864 = vand.u32 %v863, 4294901760
      %865 = vmatpush1.msra.mxu0 %v864
      %v866 = vand.u32 %v447, 4294901760
      %v867 = vsub.f32 %v447, %v866
      %v868 = vand.u32 %v867, 4294901760
      %869 = vmatprep.subr.mxu0 %v868
      %v870 = vand.u32 %v444, 4294901760
      %v871 = vsub.f32 %v444, %v870
      %v872 = vand.u32 %v871, 4294901760
      %873 = vmatpush1.msra.mxu0 %v872
      %874 = vmatprep.subr.mxu0 0.0
      %875 = vmatpush1.msra.mxu0 0.0
      %876 = vmatprep.subr.mxu0 0.0
      %877 = vmatpush1.msra.mxu0 0.0
      %878 = vmatprep.subr.mxu0 0.0
      %879 = vmatpush1.msra.mxu0 0.0
      %880 = vmatprep.subr.mxu0 0.0
      %881 = vmatpush1.msra.mxu0 0.0
      %882 = vmatprep.subr.mxu0 0.0
      %883 = vmatpush1.msra.mxu0 0.0
      %884 = vmatprep.subr.mxu0 0.0
      %885 = vmatpush1.msra.mxu0 0.0
      %886 = vmatprep.subr.mxu0 0.0
      %887 = vmatpush1.msra.mxu0 0.0
      %888 = vmatprep.subr.mxu0 0.0
      %889 = vmatpush1.msra.mxu0 0.0
      %890 = vmatprep.subr.mxu0 0.0
      %891 = vmatpush1.msra.mxu0 0.0
      %892 = vmatprep.subr.mxu0 0.0
      %893 = vmatpush1.msra.mxu0 0.0
      %894 = vmatprep.subr.mxu0 0.0
      %895 = vmatpush1.msra.mxu0 0.0
      %896 = vmatprep.subr.mxu0 0.0
      %897 = vmatpush1.msra.mxu0 0.0
      %898 = vmatprep.subr.mxu0 0.0
      %899 = vmatpush1.msra.mxu0 0.0
      %900 = vmatprep.subr.mxu0 0.0
      %901 = vmatpush1.msra.mxu0 0.0
      %902 = vmatprep.subr.mxu0 0.0
      %903 = vmatpush1.msra.mxu0 0.0
      %904 = vmatprep.subr.mxu0 0.0
      %905 = vmatpush1.msra.mxu0 0.0
      %906 = vmatprep.subr.mxu0 0.0
      %907 = vmatpush1.msra.mxu0 0.0
      %908 = vmatprep.subr.mxu0 0.0
      %909 = vmatpush1.msra.mxu0 0.0
      %910 = vmatprep.subr.mxu0 0.0
      %911 = vmatpush1.msra.mxu0 0.0
      %912 = vmatprep.subr.mxu0 0.0
      %913 = vmatpush1.msra.mxu0 0.0
      %914 = vmatprep.subr.mxu0 0.0
      %915 = vmatpush1.msra.mxu0 0.0
      %916 = vmatprep.subr.mxu0 0.0
      %917 = vmatpush1.msra.mxu0 0.0
      %918 = vmatprep.subr.mxu0 0.0
      %919 = vmatpush1.msra.mxu0 0.0
      %920 = vmatprep.subr.mxu0 0.0
      %921 = vmatpush1.msra.mxu0 0.0
      %922 = vmatprep.subr.mxu0 0.0
      %923 = vmatpush1.msra.mxu0 0.0
      %924 = vmatprep.subr.mxu0 0.0
      %925 = vmatpush1.msra.mxu0 0.0
      %926 = vmatprep.subr.mxu0 0.0
      %927 = vmatpush1.msra.mxu0 0.0
      %928 = vmatprep.mubr.f32.mxu0 0.0
      %v929 = vand.u32 %v440, 4294901760
      %930 = vmatmul.mubr.f32.gmra.mrb[0].mxu0 %v929
      %v931 = vpop.f32.mrb[0].mxu0
      %v932 = vadd.f32 %v830, %v931
      %v933 = vpop.f32.mrb[0].mxu0
      %v934 = vadd.f32 %v832, %v933
      %935 = vdwg.mxu0
      %v936 = vand.u32 %v429, 4294901760
      %937 = vmatprep.subr.mxu0 %v936
      %v938 = vand.u32 %v428, 4294901760
      %939 = vmatpush1.msra.mxu0 %v938
      %v940 = vand.u32 %v431, 4294901760
      %941 = vmatprep.subr.mxu0 %v940
      %v942 = vand.u32 %v430, 4294901760
      %943 = vmatpush1.msra.mxu0 %v942
      %v944 = vand.u32 %v433, 4294901760
      %945 = vmatprep.subr.mxu0 %v944
      %v946 = vand.u32 %v432, 4294901760
      %947 = vmatpush1.msra.mxu0 %v946
      %v948 = vand.u32 %v435, 4294901760
      %949 = vmatprep.subr.mxu0 %v948
      %v950 = vand.u32 %v434, 4294901760
      %951 = vmatpush1.msra.mxu0 %v950
      %v952 = vand.u32 %v447, 4294901760
      %953 = vmatprep.subr.mxu0 %v952
      %v954 = vand.u32 %v444, 4294901760
      %955 = vmatpush1.msra.mxu0 %v954
      %956 = vmatprep.subr.mxu0 0.0
      %957 = vmatpush1.msra.mxu0 0.0
      %958 = vmatprep.subr.mxu0 0.0
      %959 = vmatpush1.msra.mxu0 0.0
      %960 = vmatprep.subr.mxu0 0.0
      %961 = vmatpush1.msra.mxu0 0.0
      %962 = vmatprep.subr.mxu0 0.0
      %963 = vmatpush1.msra.mxu0 0.0
      %964 = vmatprep.subr.mxu0 0.0
      %965 = vmatpush1.msra.mxu0 0.0
      %966 = vmatprep.subr.mxu0 0.0
      %967 = vmatpush1.msra.mxu0 0.0
      %968 = vmatprep.subr.mxu0 0.0
      %969 = vmatpush1.msra.mxu0 0.0
      %970 = vmatprep.subr.mxu0 0.0
      %971 = vmatpush1.msra.mxu0 0.0
      %972 = vmatprep.subr.mxu0 0.0
      %973 = vmatpush1.msra.mxu0 0.0
      %974 = vmatprep.subr.mxu0 0.0
      %975 = vmatpush1.msra.mxu0 0.0
      %976 = vmatprep.subr.mxu0 0.0
      %977 = vmatpush1.msra.mxu0 0.0
      %978 = vmatprep.subr.mxu0 0.0
      %979 = vmatpush1.msra.mxu0 0.0
      %980 = vmatprep.subr.mxu0 0.0
      %981 = vmatpush1.msra.mxu0 0.0
      %982 = vmatprep.subr.mxu0 0.0
      %983 = vmatpush1.msra.mxu0 0.0
      %984 = vmatprep.subr.mxu0 0.0
      %985 = vmatpush1.msra.mxu0 0.0
      %986 = vmatprep.subr.mxu0 0.0
      %987 = vmatpush1.msra.mxu0 0.0
      %988 = vmatprep.subr.mxu0 0.0
      %989 = vmatpush1.msra.mxu0 0.0
      %990 = vmatprep.subr.mxu0 0.0
      %991 = vmatpush1.msra.mxu0 0.0
      %992 = vmatprep.subr.mxu0 0.0
      %993 = vmatpush1.msra.mxu0 0.0
      %994 = vmatprep.subr.mxu0 0.0
      %995 = vmatpush1.msra.mxu0 0.0
      %996 = vmatprep.subr.mxu0 0.0
      %997 = vmatpush1.msra.mxu0 0.0
      %998 = vmatprep.subr.mxu0 0.0
      %999 = vmatpush1.msra.mxu0 0.0
      %1000 = vmatprep.subr.mxu0 0.0
      %1001 = vmatpush1.msra.mxu0 0.0
      %1002 = vmatprep.subr.mxu0 0.0
      %1003 = vmatpush1.msra.mxu0 0.0
      %1004 = vmatprep.subr.mxu0 0.0
      %1005 = vmatpush1.msra.mxu0 0.0
      %1006 = vmatprep.subr.mxu0 0.0
      %1007 = vmatpush1.msra.mxu0 0.0
      %1008 = vmatprep.subr.mxu0 0.0
      %1009 = vmatpush1.msra.mxu0 0.0
      %1010 = vmatprep.mubr.f32.mxu0 0.0
      %v1011 = vand.u32 %v440, 4294901760
      %1012 = vmatmul.mubr.f32.gmra.mrb[0].mxu0 %v1011
      %v1013 = vpop.f32.mrb[0].mxu0
      %v1014 = vadd.f32 %v932, %v1013
      %v1015 = vpop.f32.mrb[0].mxu0
      %v1016 = vadd.f32 %v934, %v1015
      %1017 = vdwg.mxu0
      %v1018 = vsel %vm442, %v1014, 0.0
      %v1019 = vsel %vm442, %v1016, 0.0
      %v1020 = vadd.f32 %v1018, %v1019
      %1021 = vadd.xlane.f32.xlu0 %v1020
      %v1022 = vpop.xlane.xlu0 %1021
      %v1023 = vmul.f32 %v1022, 0.00390625
      %v1024 = vsub.f32 %v1014, %v1023
      %v1025 = vsub.f32 %v1016, %v1023
      %vm1026 = vcmask 3072
      %1027 = vst.msk [vmem:[%s181] sm:$0xf] %vm1026, %v1022
      %v1028 = vmul.f32 %v1024, %v1024
      %v1029 = vmul.f32 %v1025, %v1025
      %v1030 = vsel %vm442, %v1028, 0.0
      %v1031 = vsel %vm442, %v1029, 0.0
      %v1032 = vadd.f32 %v1030, %v1031
      %1033 = vadd.xlane.f32.xlu0 %v1032
      %v1034 = vpop.xlane.xlu0 %1033
      %vm1035 = vcmask 11272
      %1036 = vst.msk [vmem:[%s181] sm:$0xf] %vm1035, %v1034
      %v1039 = vcombine.low %v1014, %v1016
      %1041 = vst [vmem:[%s177] sm:$0xff] %v1039
      %p1042 = scmp.lt.s32.totalorder %s15, 1
      %s1043 = scalar_select %p1042, %s15, 1
      %s1044 = smul.addr %s1043, 2
      %s1045 = smul.addr %s1044, 4
      %s1046 = scalar_lea.vmem %s2, %s1045
      %p1047 = scmp.lt.s32.totalorder %s15, 1
      %s1048 = scalar_select %p1047, %s15, 1
      %s1049 = smul.addr %s1048, 4
      %s1050 = scalar_lea.vmem %s3, %s1049
      // Predicated region
      $region29: #{basic_block_forward.3} parent=27 // pred_check
        %p1051 = pneg %p80
      $region30: #{basic_block_forward.3} parent=27 // pred_check_branch
        %1053 = sbr.rel (%p1051) target = $region32
      $region31: #{basic_block_forward.3} parent=27 // pred_region
        _
      $region32: #{basic_block_forward.3} parent=27 // pred_fallthru
        _
      // Predicated region
      $region33: #{basic_block_forward.3} parent=27 // pred_check
        %p1054 = pneg %p106
      $region34: #{basic_block_forward.3} parent=27 // pred_check_branch
        %1056 = sbr.rel (%p1054) target = $region36
      $region35: #{basic_block_forward.3} parent=27 // pred_region
        _
      $region36: #{basic_block_forward.3} parent=27 // pred_fallthru
        _
    $region28: #{basic_block_forward.3} parent=5 // pred_fallthru
      _
    %p1057 = scmp.le.s32.totalorder 2, %s10
    // Predicated region
    $region37: #{basic_block_forward.3} parent=5 // pred_check
      %p1058 = pneg %p1057
    $region38: #{basic_block_forward.3} parent=5 // pred_check_branch
      %1060 = sbr.rel (%p1058) target = $region40
    $region39: #{basic_block_forward.3} parent=5 // pred_region
      %s1061 = ssub.s32 %s10, 2
      // Predicated region
      $region41: #{basic_block_forward.3} parent=39 // pred_check
        %p1062 = pneg %p86
      $region42: #{basic_block_forward.3} parent=39 // pred_check_branch
        %1064 = sbr.rel (%p1062) target = $region44
      $region43: #{basic_block_forward.3} parent=39 // pred_region
        %p1065 = scmp.lt.s32.totalorder %s16, 1
        %s1066 = scalar_select %p1065, %s16, 1
        %s1067 = smul.addr %s1066, 2
        %s1068 = smul.addr %s1067, 4
        %s1069 = scalar_lea.vmem %s2, %s1068
      $region44: #{basic_block_forward.3} parent=39 // pred_fallthru
        _
      // Predicated region
      $region45: #{basic_block_forward.3} parent=39 // pred_check
        %p1070 = pneg %p112
      $region46: #{basic_block_forward.3} parent=39 // pred_check_branch
        %1072 = sbr.rel (%p1070) target = $region48
      $region47: #{basic_block_forward.3} parent=39 // pred_region
        %p1073 = scmp.lt.s32.totalorder %s16, 1
        %s1074 = scalar_select %p1073, %s16, 1
        %s1075 = smul.addr %s1074, 4
        %s1076 = scalar_lea.vmem %s3, %s1075
      $region48: #{basic_block_forward.3} parent=39 // pred_fallthru
        _
    $region40: #{basic_block_forward.3} parent=5 // pred_fallthru
      _
  $region6: #{basic_block_forward.3} parent=0 // loop_footer
    %s14 = sadd.s32 1, %s10
  $region7: #{basic_block_forward.3} parent=0 // loop_footer_branch
    %9 = sbr.rel target = $region3
  $region8: #{basic_block_forward.3} parent=0 // loop_exit
    _

// kernel: basic_block_forward.4
$region0: #{basic_block_forward.4}
  #allocation0 [shape = 'u32[]', space=smem, size = 0x4, offset = 0x4, fixed_abs, tag = 'smem constant byte address 0x4 - core index']
  #allocation1 [shape = 'u32[144,128]{1,0:T(1,128)}', space=vmem, size = 0x12000, scoped, tag = 'internal scratch']
  #allocation2 [shape = 'f32[4,290]{1,0:T(4,128)}', space=vmem, size = 0x1800, scoped, tag = 'scratch operand']
  #allocation3 [shape = 'f32[36,256]{1,0:T(8,128)}', space=vmem, size = 0xa000, scoped, tag = 'scratch operand']
  %s0 = inlined_call_operand.vmem [shape: f32[2,4,2], index: 0, kind: input, shape index: {}]
  %s1 = inlined_call_operand.vmem [shape: f32[4,1], index: 1, kind: input, shape index: {}]
  %s2 = inlined_call_operand.vmem [shape: f32[4,1], index: 2, kind: input, shape index: {}]
  %s3 = inlined_call_operand.vmem [shape: f32[2,4,256], index: 3, kind: input, shape index: {}]
  %s4 = inlined_call_operand.vmem [shape: f32[4,36], index: 4, kind: input, shape index: {}]
  %s5 = inlined_call_operand.vmem [shape: f32[2,4,256], index: 5, kind: output, shape index: {0}]
  %s6 = inlined_call_operand.vmem [shape: f32[2,4,2], index: 6, kind: output, shape index: {1}]
  %7 = xla_tuple %s5, %s6
  %s8 = sld [smem:[#allocation0]]
  $region61: #{basic_block_forward.4} parent=0
    _
  %s10 = ssub.s32 1, %s8
  %s11 = scalar_select 0, %s10, %s8
  loop: start=0, step=1, limit=4
  $region2: #{basic_block_forward.4} parent=0 // loop_pre_header
    _
  $region3: #{basic_block_forward.4} parent=0 // loop_header
    %s13 = sphi 0, %s17
    %p14 = scmp.ge.s32.totalorder %s13, 4
    %s21 = sphi 0, %s21
    %s23 = sphi 0, %s21
    %s24 = sphi 0, %s23
    %s38 = sphi 0, %s24
    %s42 = sphi 0, %s42
    %s44 = sphi 0, %s42
    %s45 = sphi 0, %s44
    %s59 = sphi 0, %s45
    %s63 = sphi 0, %s63
    %s65 = sphi 0, %s63
    %s66 = sphi 0, %s65
    %s80 = sphi 0, %s66
    %s86 = sphi 0, %s88
    %s89 = sphi 0, %s86
    %s90 = sphi 0, %s89
    %s106 = sphi 0, %s90
    %s110 = sphi 0, %s110
    %s112 = sphi 0, %s110
    %s113 = sphi 0, %s112
    %s127 = sphi 0, %s113
    %s133 = sphi 0, %s135
    %s136 = sphi 0, %s133
    %s137 = sphi 0, %s136
    %s153 = sphi 0, %s137
    %s159 = sphi 0, %s161
    %s162 = sphi 0, %s159
    %s163 = sphi 0, %s162
    %s179 = sphi 0, %s163
  $region4: #{basic_block_forward.4} parent=0 // loop_header_branch
    %16 = sbr.rel (%p14) target = $region8
  $region5: #{basic_block_forward.4} parent=0 // loop_body
    %s18 = ssub.s32 %s13, 1
    %s19 = ssub.s32 %s13, 2
    %s20 = sadd.s32 %s13, 1
    %s22 = sadd.s32 %s21, 1
    %p25 = scmp.eq.s32.totalorder %s13, 1
    %p26 = scmp.ne.s32.totalorder %s21, %s23
    %p27 = scmp.eq.s32.totalorder %s13, 0
    %p28 = por %p26, %p27
    %p29 = scmp.ne.s32.totalorder %s21, %s23
    %p30 = scmp.eq.s32.totalorder %s18, 1
    %p31 = por %p29, %p30
    %p32 = scmp.ne.s32.totalorder %s23, %s24
    %p33 = scmp.eq.s32.totalorder %s18, 0
    %p34 = por %p32, %p33
    %p35 = scmp.ne.s32.totalorder %s23, %s24
    %p36 = scmp.eq.s32.totalorder %s19, 1
    %p37 = por %p35, %p36
    %p39 = scmp.ne.s32.totalorder %s24, %s38
    %p40 = scmp.eq.s32.totalorder %s19, 0
    %p41 = por %p39, %p40
    %s43 = sadd.s32 %s42, 1
    %p46 = scmp.eq.s32.totalorder %s13, 1
    %p47 = scmp.ne.s32.totalorder %s42, %s44
    %p48 = scmp.eq.s32.totalorder %s13, 0
    %p49 = por %p47, %p48
    %p50 = scmp.ne.s32.totalorder %s42, %s44
    %p51 = scmp.eq.s32.totalorder %s18, 1
    %p52 = por %p50, %p51
    %p53 = scmp.ne.s32.totalorder %s44, %s45
    %p54 = scmp.eq.s32.totalorder %s18, 0
    %p55 = por %p53, %p54
    %p56 = scmp.ne.s32.totalorder %s44, %s45
    %p57 = scmp.eq.s32.totalorder %s19, 1
    %p58 = por %p56, %p57
    %p60 = scmp.ne.s32.totalorder %s45, %s59
    %p61 = scmp.eq.s32.totalorder %s19, 0
    %p62 = por %p60, %p61
    %s64 = sadd.s32 %s63, 1
    %p67 = scmp.eq.s32.totalorder %s13, 1
    %p68 = scmp.ne.s32.totalorder %s63, %s65
    %p69 = scmp.eq.s32.totalorder %s13, 0
    %p70 = por %p68, %p69
    %p71 = scmp.ne.s32.totalorder %s63, %s65
    %p72 = scmp.eq.s32.totalorder %s18, 1
    %p73 = por %p71, %p72
    %p74 = scmp.ne.s32.totalorder %s65, %s66
    %p75 = scmp.eq.s32.totalorder %s18, 0
    %p76 = por %p74, %p75
    %p77 = scmp.ne.s32.totalorder %s65, %s66
    %p78 = scmp.eq.s32.totalorder %s19, 1
    %p79 = por %p77, %p78
    %p81 = scmp.ne.s32.totalorder %s66, %s80
    %p82 = scmp.eq.s32.totalorder %s19, 0
    %p83 = por %p81, %p82
    %s84 = ssub.s32 %s13, %s20
    %p85 = scmp.eq.s32.totalorder %s84, 0
    %s87 = sadd.s32 %s86, 1
    %s88 = scalar_select %p85, %s86, %s87
    %p91 = pneg %p85
    %p92 = scmp.eq.s32.totalorder %s13, 1
    %p93 = por %p91, %p92
    %p94 = scmp.ne.s32.totalorder %s86, %s89
    %p95 = scmp.eq.s32.totalorder %s13, 0
    %p96 = por %p94, %p95
    %p97 = scmp.ne.s32.totalorder %s86, %s89
    %p98 = scmp.eq.s32.totalorder %s18, 1
    %p99 = por %p97, %p98
    %p100 = scmp.ne.s32.totalorder %s89, %s90
    %p101 = scmp.eq.s32.totalorder %s18, 0
    %p102 = por %p100, %p101
    %p103 = scmp.ne.s32.totalorder %s89, %s90
    %p104 = scmp.eq.s32.totalorder %s19, 1
    %p105 = por %p103, %p104
    %p107 = scmp.ne.s32.totalorder %s90, %s106
    %p108 = scmp.eq.s32.totalorder %s19, 0
    %p109 = por %p107, %p108
    %s111 = sadd.s32 %s110, 1
    %p114 = scmp.eq.s32.totalorder %s13, 1
    %p115 = scmp.ne.s32.totalorder %s110, %s112
    %p116 = scmp.eq.s32.totalorder %s13, 0
    %p117 = por %p115, %p116
    %p118 = scmp.ne.s32.totalorder %s110, %s112
    %p119 = scmp.eq.s32.totalorder %s18, 1
    %p120 = por %p118, %p119
    %p121 = scmp.ne.s32.totalorder %s112, %s113
    %p122 = scmp.eq.s32.totalorder %s18, 0
    %p123 = por %p121, %p122
    %p124 = scmp.ne.s32.totalorder %s112, %s113
    %p125 = scmp.eq.s32.totalorder %s19, 1
    %p126 = por %p124, %p125
    %p128 = scmp.ne.s32.totalorder %s113, %s127
    %p129 = scmp.eq.s32.totalorder %s19, 0
    %p130 = por %p128, %p129
    %s131 = ssub.s32 %s13, %s20
    %p132 = scmp.eq.s32.totalorder %s131, 0
    %s134 = sadd.s32 %s133, 1
    %s135 = scalar_select %p132, %s133, %s134
    %p138 = pneg %p132
    %p139 = scmp.eq.s32.totalorder %s13, 1
    %p140 = por %p138, %p139
    %p141 = scmp.ne.s32.totalorder %s133, %s136
    %p142 = scmp.eq.s32.totalorder %s13, 0
    %p143 = por %p141, %p142
    %p144 = scmp.ne.s32.totalorder %s133, %s136
    %p145 = scmp.eq.s32.totalorder %s18, 1
    %p146 = por %p144, %p145
    %p147 = scmp.ne.s32.totalorder %s136, %s137
    %p148 = scmp.eq.s32.totalorder %s18, 0
    %p149 = por %p147, %p148
    %p150 = scmp.ne.s32.totalorder %s136, %s137
    %p151 = scmp.eq.s32.totalorder %s19, 1
    %p152 = por %p150, %p151
    %p154 = scmp.ne.s32.totalorder %s137, %s153
    %p155 = scmp.eq.s32.totalorder %s19, 0
    %p156 = por %p154, %p155
    %s157 = ssub.s32 %s13, %s20
    %p158 = scmp.eq.s32.totalorder %s157, 0
    %s160 = sadd.s32 %s159, 1
    %s161 = scalar_select %p158, %s159, %s160
    %p164 = pneg %p158
    %p165 = scmp.eq.s32.totalorder %s13, 1
    %p166 = por %p164, %p165
    %p167 = scmp.ne.s32.totalorder %s159, %s162
    %p168 = scmp.eq.s32.totalorder %s13, 0
    %p169 = por %p167, %p168
    %p170 = scmp.ne.s32.totalorder %s159, %s162
    %p171 = scmp.eq.s32.totalorder %s18, 1
    %p172 = por %p170, %p171
    %p173 = scmp.ne.s32.totalorder %s162, %s163
    %p174 = scmp.eq.s32.totalorder %s18, 0
    %p175 = por %p173, %p174
    %p176 = scmp.ne.s32.totalorder %s162, %s163
    %p177 = scmp.eq.s32.totalorder %s19, 1
    %p178 = por %p176, %p177
    %p180 = scmp.ne.s32.totalorder %s163, %s179
    %p181 = scmp.eq.s32.totalorder %s19, 0
    %p182 = por %p180, %p181
    %p183 = scmp.le.s32.totalorder 1, %s13
    %p184 = scmp.lt.s32.totalorder %s13, 3
    %p185 = pnand %p183, %p184
    %p186 = pneg %p185
    // Predicated region
    $region9: #{basic_block_forward.4} parent=5 // pred_check
      _
    $region10: #{basic_block_forward.4} parent=5 // pred_check_branch
      %188 = sbr.rel (%p185) target = $region12
    $region11: #{basic_block_forward.4} parent=5 // pred_region
      %s189 = ssub.s32 %s13, 1
      // Predicated region
      $region13: #{basic_block_forward.4} parent=11 // pred_check
        %p190 = pneg %p34
      $region14: #{basic_block_forward.4} parent=11 // pred_check_branch
        %192 = sbr.rel (%p190) target = $region16
      $region15: #{basic_block_forward.4} parent=11 // pred_region
        _
      $region16: #{basic_block_forward.4} parent=11 // pred_fallthru
        _
      // Predicated region
      $region17: #{basic_block_forward.4} parent=11 // pred_check
        %p193 = pneg %p55
      $region18: #{basic_block_forward.4} parent=11 // pred_check_branch
        %195 = sbr.rel (%p193) target = $region20
      $region19: #{basic_block_forward.4} parent=11 // pred_region
        _
      $region20: #{basic_block_forward.4} parent=11 // pred_fallthru
        _
      // Predicated region
      $region21: #{basic_block_forward.4} parent=11 // pred_check
        %p196 = pneg %p76
      $region22: #{basic_block_forward.4} parent=11 // pred_check_branch
        %198 = sbr.rel (%p196) target = $region24
      $region23: #{basic_block_forward.4} parent=11 // pred_region
        _
      $region24: #{basic_block_forward.4} parent=11 // pred_fallthru
        _
      // Predicated region
      $region25: #{basic_block_forward.4} parent=11 // pred_check
        %p199 = pneg %p123
      $region26: #{basic_block_forward.4} parent=11 // pred_check_branch
        %201 = sbr.rel (%p199) target = $region28
      $region27: #{basic_block_forward.4} parent=11 // pred_region
        _
      $region28: #{basic_block_forward.4} parent=11 // pred_fallthru
        _
    $region12: #{basic_block_forward.4} parent=5 // pred_fallthru
      _
    %p202 = scmp.lt.s32.totalorder %s13, 2
    // Predicated region
    $region29: #{basic_block_forward.4} parent=5 // pred_check
      %p203 = pneg %p202
    $region30: #{basic_block_forward.4} parent=5 // pred_check_branch
      %205 = sbr.rel (%p203) target = $region32
    $region31: #{basic_block_forward.4} parent=5 // pred_region
      // Predicated region
      $region33: #{basic_block_forward.4} parent=31 // pred_check
        %p206 = pneg %p96
      $region34: #{basic_block_forward.4} parent=31 // pred_check_branch
        %208 = sbr.rel (%p206) target = $region36
      $region35: #{basic_block_forward.4} parent=31 // pred_region
        %p209 = scmp.lt.s32.totalorder %s13, 1
        %s210 = scalar_select %p209, %s13, 1
        %s211 = smul.addr %s210, 2
        %s212 = smul.addr %s211, 4
        %s213 = scalar_lea.vmem %s3, %s212
      $region36: #{basic_block_forward.4} parent=31 // pred_fallthru
        _
    $region32: #{basic_block_forward.4} parent=5 // pred_fallthru
      _
    %p214 = scmp.le.s32.totalorder 1, %s13
    %p215 = scmp.lt.s32.totalorder %s13, 3
    %p216 = pnand %p214, %p215
    %p217 = pneg %p216
    // Predicated region
    $region37: #{basic_block_forward.4} parent=5 // pred_check
      _
    $region38: #{basic_block_forward.4} parent=5 // pred_check_branch
      %219 = sbr.rel (%p216) target = $region40
    $region39: #{basic_block_forward.4} parent=5 // pred_region
      %s220 = ssub.s32 %s13, 1
      %p221 = pneg %p34
      %p222 = pneg %p31
      %p223 = pneg %p55
      %p224 = pneg %p52
      %p225 = pneg %p76
      %p226 = pneg %p73
      %p227 = scmp.lt.s32.totalorder %s18, 1
      %s228 = scalar_select %p227, %s18, 1
      %s229 = smul.addr %s228, 2
      %s230 = smul.addr %s229, 4
      %s231 = scalar_lea.vmem %s3, %s230
      %p232 = pneg %p102
      %p233 = pneg %p99
      %p234 = pneg %p123
      %p235 = pneg %p120
      %p236 = pneg %p149
      %p237 = pneg %p146
      %p238 = scmp.lt.s32.totalorder %s18, 1
      %s239 = scalar_select %p238, %s18, 1
      %s240 = smul.addr %s239, 2
      %s241 = smul.addr %s240, 4
      %s242 = scalar_lea.vmem %s5, %s241
      %p243 = pneg %p175
      %p244 = pneg %p172
      %p245 = scmp.lt.s32.totalorder %s18, 1
      %s246 = scalar_select %p245, %s18, 1
      %s247 = smul.addr %s246, 4
      %s248 = scalar_lea.vmem %s6, %s247
      %p249 = scmp.lt.s32.totalorder %s18, 1
      %s250 = scalar_select %p249, %s18, 1
      %s251 = smul.addr %s250, 2
      %s252 = smul.addr %s251, 4
      %s253 = scalar_lea.vmem %s3, %s252
      %p254 = scmp.lt.s32.totalorder %s18, 1
      %s255 = scalar_select %p254, %s18, 1
      %s256 = smul.addr %s255, 2
      %s257 = smul.addr %s256, 4
      %s258 = scalar_lea.vmem %s5, %s257
      %p259 = scmp.lt.s32.totalorder %s18, 1
      %s260 = scalar_select %p259, %s18, 1
      %s261 = smul.addr %s260, 4
      %s262 = scalar_lea.vmem %s6, %s261
      %v263 = vld [vmem:[%s0] sm:$0xf]
      %v264 = vld [vmem:[%s0 + $0x4] sm:$0xf]
      %v265 = vld [vmem:[%s1] sm:$0xf]
      %v266 = vld [vmem:[%s2] sm:$0xf]
      %vm267 = vcmask 3072
      %v268 = vsel %vm267, %v263, 0.0
      %v269 = vsel %vm267, %v264, 0.0
      %v270 = vadd.f32 %v268, %v269
      %v271 = vmul.f32 %v270, 0.001953125
      %v272 = vmul.f32 %v263, 0.00390625
      %v273 = vmul.f32 %v264, 0.00390625
      %vm274 = vcmask 11272
      %v275 = vsel %vm274, %v263, 0.0
      %v276 = vsel %vm274, %v264, 0.0
      %v277 = vadd.f32 %v275, %v276
      %v278 = vsub.f32 %v272, %v271
      %v279 = vsub.f32 %v273, %v271
      %v280 = vmul.f32 %v278, %v278
      %v281 = vmul.f32 %v279, %v279
      %v282 = vsel %vm267, %v280, 0.0
      %v283 = vsel %vm267, %v281, 0.0
      %v284 = vadd.f32 %v282, %v283
      %v285 = vmul.f32 %v284, 256.0
      %287 = vrot.lane.b32.xlu0 %v285, 1
      %v288 = vpop.permute.xlu0 %287
      %v290 = vadd.f32 %v277, %v288
      %v291 = vmul.f32 %v290, 0.001953125
      %v292 = vmax.f32 %v291, 0.0
      %v293 = vadd.f32 %v292, 1e-05
      %v294 = vrsqrt.pop %v293
      %296 = vrot.lane.b32.xlu0 %v294, 127
      %v297 = vpop.permute.xlu0 %296
      %v299 = vmul.f32 %v265, %v297
      %v300 = vmul.f32 %v271, %v299
      %v301 = vsub.f32 %v266, %v300
      %v302 = vld [vmem:[%s253] sm:$0xff]
      %304 = vset.pattern.permute.xlu0 0
      %305 = vperm.xlu0 %304, %v299
      %v306 = vpop.permute.xlu0 %305
      %v308 = vunpack.c.l.s4 839922192
      %v309 = vunpack.c.0.s8 %v308
      %v310 = vlaneseq
      %v311 = vshrl.u32 %v310, 7
      %v312 = vsub.s32 %v309, %v311
      %v313 = vrot.slane %v306, %v312
      %v315 = vmul.f32 %v302, %v313
      %317 = vset.pattern.permute.xlu0 0
      %318 = vperm.xlu0 %317, %v301
      %v319 = vpop.permute.xlu0 %318
      %v321 = vunpack.c.l.s4 839922192
      %v322 = vunpack.c.0.s8 %v321
      %v323 = vlaneseq
      %v324 = vshrl.u32 %v323, 7
      %v325 = vsub.s32 %v322, %v324
      %v326 = vrot.slane %v319, %v325
      %v328 = vadd.f32 %v315, %v326
      %v329 = vmax.f32 %v328, 0.0
      %vm330 = vcmask 134144
      %331 = vst.msk [vmem:[#allocation2] sm:$0xf] %vm330, 0.0
      %vm332 = vcmask 273544
      %333 = vst.msk [vmem:[#allocation2 + $0x8] sm:$0xf] %vm332, 0.0
      %335 = vrot.lane.b32.xlu0 %v329, 17
      %v336 = vpop.permute.xlu0 %335
      %v337 = vrot.slane %v336, 4
      %vm338 = vcmask 138240
      %v339 = vsel %vm338, %v337, %v336
      %vm342 = vcmask 1043592
      %vm343 = vcmask 1047556
      %vm344 = vmor %vm343, %vm342
      %345 = vst.msk [vmem:[#allocation2] sm:$0xff] %vm344, %v339
      %346 = vst.msk [vmem:[#allocation2 + $0x8] sm:$0xf] %vm330, %v337
      %v347 = vlaneseq
      %v348 = vand.u32 %v347, 127
      %v349 = vadd.s32 %v348, 128
      %vm350 = vcmp.lt.s32.totalorder %v348, 0
      %v351 = vsub.s32 0, %v348
      %v352 = vsel %vm350, %v351, %v348
      %v353 = vshrl.u32 %v352, 4
      %v354 = vand.u32 %v352, 15
      %v355 = vsub.s32 0, %v354
      %v356 = vsel %vm350, %v355, %v354
      %vm357 = vcmp.lt.s32.totalorder %v349, 0
      %v358 = vsub.s32 0, %v349
      %v359 = vsel %vm357, %v358, %v349
      %v360 = vshrl.u32 %v359, 4
      %v361 = vand.u32 %v359, 15
      %v362 = vsub.s32 0, %v361
      %v363 = vsel %vm357, %v362, %v361
      %vm364 = vcmp.ne.s32.totalorder %v356, 0
      %vm365 = vcmp.ne.s32.totalorder %v363, 0
      %vm366 = vcmp.lt.s32.totalorder %v356, 0
      %vm367 = vcmp.lt.s32.totalorder %v363, 0
      %vm368 = vmand %vm366, %vm364
      %vm369 = vmand %vm367, %vm365
      %v370 = vadd.s32 %v356, 16
      %v371 = vadd.s32 %v363, 16
      %v372 = vsel %vm368, %v370, %v356
      %v373 = vsel %vm369, %v371, %v363
      %v374 = vld [vmem:[#allocation2] sm:$0xff]
      %v375 = vadd.s32 %v372, 4294967295
      %v376 = vadd.s32 %v373, 4294967295
      %vm377 = vcmp.ge.s32.totalorder %v375, 0
      %vm378 = vcmp.ge.s32.totalorder %v376, 0
      %vm379 = vcmp.lt.s32.totalorder %v375, 16
      %vm380 = vcmp.lt.s32.totalorder %v376, 16
      %vm381 = vmand %vm377, %vm379
      %vm382 = vmand %vm378, %vm380
      %v383 = vsel %vm381, 1, 0
      %v384 = vsel %vm382, 1, 0
      %vm385 = vcmp.eq.s32.totalorder %v383, 1
      %vm386 = vcmp.eq.s32.totalorder %v384, 1
      %v388 = vcombine.high %v374, %v374
      %v390 = vsel %vm385, %v374, 0.0
      %v391 = vsel %vm386, %v388, 0.0
      %392 = vst [vmem:[#allocation3] sm:$0xf] %v390
      %393 = vst [vmem:[#allocation3 + $0x8] sm:$0xf] %v391
      %v394 = vld [vmem:[#allocation2] sm:$0xff]
      %v395 = vld [vmem:[#allocation2 + $0x8] sm:$0xf]
      %v398 = vcombine.low %v394, %v394
      %v399 = vcombine.low %v395, %v395
      %400 = vrot.lane.b32.xlu0 %v398, 127
      %v401 = vpop.permute.xlu0 %400
      %402 = vrot.lane.b32.xlu0 %v394, 127
      %v403 = vpop.permute.xlu0 %402
      %404 = vrot.lane.b32.xlu0 %v399, 127
      %v405 = vpop.permute.xlu0 %404
      %vm406 = vcmask 1039360
      %v407 = vsel %vm406, %v401, %v403
      %v408 = vsel %vm406, %v403, %v405
      %411 = vst [vmem:[#allocation3] sm:$0xf0] %v407
      %412 = vst [vmem:[#allocation3 + $0x8] sm:$0xf0] %v408
      %v413 = vld [vmem:[#allocation2] sm:$0xff]
      %v414 = vld [vmem:[#allocation2 + $0x8] sm:$0xf]
      %v415 = vadd.s32 %v372, 1
      %v416 = vadd.s32 %v373, 1
      %vm417 = vcmp.ge.s32.totalorder %v415, 0
      %vm418 = vcmp.ge.s32.totalorder %v416, 0
      %vm419 = vcmp.lt.s32.totalorder %v415, 16
      %vm420 = vcmp.lt.s32.totalorder %v416, 16
      %vm421 = vmand %vm417, %vm419
      %vm422 = vmand %vm418, %vm420
      %v423 = vsel %vm421, 1, 0
      %v424 = vsel %vm422, 1, 0
      %vm425 = vcmp.eq.s32.totalorder %v423, 1
      %vm426 = vcmp.eq.s32.totalorder %v424, 1
      %v429 = vcombine.high %v413, %v413
      %430 = vrot.lane.b32.xlu0 %v413, 126
      %v431 = vpop.permute.xlu0 %430
      %432 = vrot.lane.b32.xlu0 %v429, 126
      %v433 = vpop.permute.xlu0 %432
      %434 = vrot.lane.b32.xlu0 %v414, 126
      %v435 = vpop.permute.xlu0 %434
      %vm436 = vcmask 1031168
      %v437 = vsel %vm436, %v431, %v433
      %v438 = vsel %vm436, %v433, %v435
      %v441 = vsel %vm425, %v437, 0.0
      %v442 = vsel %vm426, %v438, 0.0
      %443 = vst [vmem:[#allocation3 + $0x10] sm:$0xf] %v441
      %444 = vst [vmem:[#allocation3 + $0x18] sm:$0xf] %v442
      %v445 = vld [vmem:[#allocation2] sm:$0xff]
      %v446 = vld [vmem:[#allocation2 + $0x8] sm:$0xf]
      %v449 = vcombine.high %v445, %v445
      %450 = vrot.lane.b32.xlu0 %v445, 112
      %v451 = vpop.permute.xlu0 %450
      %452 = vrot.lane.b32.xlu0 %v449, 112
      %v453 = vpop.permute.xlu0 %452
      %454 = vrot.lane.b32.xlu0 %v446, 112
      %v455 = vpop.permute.xlu0 %454
      %vm456 = vcmask 916480
      %v457 = vsel %vm456, %v451, %v453
      %v458 = vsel %vm456, %v453, %v455
      %v461 = vsel %vm385, %v457, 0.0
      %v462 = vsel %vm386, %v458, 0.0
      %v465 = vrot.slane %v461, 4
      %v466 = vrot.slane %v462, 4
      %469 = vst [vmem:[#allocation3 + $0x10] sm:$0xf0] %v465
      %470 = vst [vmem:[#allocation3 + $0x18] sm:$0xf0] %v466
      %v471 = vld [vmem:[#allocation2] sm:$0xff]
      %v472 = vld [vmem:[#allocation2 + $0x8] sm:$0xf]
      %v475 = vcombine.high %v471, %v471
      %476 = vrot.lane.b32.xlu0 %v471, 111
      %v477 = vpop.permute.xlu0 %476
      %478 = vrot.lane.b32.xlu0 %v475, 111
      %v479 = vpop.permute.xlu0 %478
      %480 = vrot.lane.b32.xlu0 %v472, 111
      %v481 = vpop.permute.xlu0 %480
      %vm482 = vcmask 908288
      %v483 = vsel %vm482, %v477, %v479
      %v484 = vsel %vm482, %v479, %v481
      %487 = vst [vmem:[#allocation3 + $0x20] sm:$0xf] %v483
      %488 = vst [vmem:[#allocation3 + $0x28] sm:$0xf] %v484
      %v489 = vld [vmem:[#allocation2] sm:$0xff]
      %v490 = vld [vmem:[#allocation2 + $0x8] sm:$0xf]
      %v493 = vcombine.high %v489, %v489
      %494 = vrot.lane.b32.xlu0 %v489, 110
      %v495 = vpop.permute.xlu0 %494
      %496 = vrot.lane.b32.xlu0 %v493, 110
      %v497 = vpop.permute.xlu0 %496
      %498 = vrot.lane.b32.xlu0 %v490, 110
      %v499 = vpop.permute.xlu0 %498
      %vm500 = vcmask 900096
      %v501 = vsel %vm500, %v495, %v497
      %v502 = vsel %vm500, %v497, %v499
      %v505 = vsel %vm425, %v501, 0.0
      %v506 = vsel %vm426, %v502, 0.0
      %v509 = vrot.slane %v505, 4
      %v510 = vrot.slane %v506, 4
      %513 = vst [vmem:[#allocation3 + $0x20] sm:$0xf0] %v509
      %514 = vst [vmem:[#allocation3 + $0x28] sm:$0xf0] %v510
      %v515 = vld [vmem:[#allocation2] sm:$0xff]
      %v516 = vld [vmem:[#allocation2 + $0x8] sm:$0xf]
      %v519 = vcombine.high %v515, %v515
      %520 = vrot.lane.b32.xlu0 %v515, 96
      %v521 = vpop.permute.xlu0 %520
      %522 = vrot.lane.b32.xlu0 %v519, 96
      %v523 = vpop.permute.xlu0 %522
      %524 = vrot.lane.b32.xlu0 %v516, 96
      %v525 = vpop.permute.xlu0 %524
      %vm526 = vcmask 785408
      %v527 = vsel %vm526, %v521, %v523
      %v528 = vsel %vm526, %v523, %v525
      %v531 = vsel %vm385, %v527, 0.0
      %v532 = vsel %vm386, %v528, 0.0
      %533 = vst [vmem:[#allocation3 + $0x30] sm:$0xf] %v531
      %534 = vst [vmem:[#allocation3 + $0x38] sm:$0xf] %v532
      %v535 = vld [vmem:[#allocation2] sm:$0xff]
      %v536 = vld [vmem:[#allocation2 + $0x8] sm:$0xf]
      %v539 = vcombine.low %v535, %v535
      %v540 = vcombine.low %v536, %v536
      %541 = vrot.lane.b32.xlu0 %v539, 95
      %v542 = vpop.permute.xlu0 %541
      %543 = vrot.lane.b32.xlu0 %v535, 95
      %v544 = vpop.permute.xlu0 %543
      %545 = vrot.lane.b32.xlu0 %v540, 95
      %v546 = vpop.permute.xlu0 %545
      %vm547 = vcmask 777216
      %v548 = vsel %vm547, %v542, %v544
      %v549 = vsel %vm547, %v544, %v546
      %552 = vst [vmem:[#allocation3 + $0x30] sm:$0xf0] %v548
      %553 = vst [vmem:[#allocation3 + $0x38] sm:$0xf0] %v549
      %v554 = vld [vmem:[#allocation2] sm:$0xff]
      %v555 = vld [vmem:[#allocation2 + $0x8] sm:$0xf]
      %v558 = vcombine.high %v554, %v554
      %559 = vrot.lane.b32.xlu0 %v554, 94
      %v560 = vpop.permute.xlu0 %559
      %561 = vrot.lane.b32.xlu0 %v558, 94
      %v562 = vpop.permute.xlu0 %561
      %563 = vrot.lane.b32.xlu0 %v555, 94
      %v564 = vpop.permute.xlu0 %563
      %vm565 = vcmask 769024
      %v566 = vsel %vm565, %v560, %v562
      %v567 = vsel %vm565, %v562, %v564
      %v570 = vsel %vm425, %v566, 0.0
      %v571 = vsel %vm426, %v567, 0.0
      %572 = vst [vmem:[#allocation3 + $0x40] sm:$0xf] %v570
      %573 = vst [vmem:[#allocation3 + $0x48] sm:$0xf] %v571
      %v574 = vld [vmem:[%s4] sm:$0xf]
      %v575 = vld [vmem:[#allocation3] sm:$0xff]
      %v576 = vld [vmem:[#allocation3 + $0x8] sm:$0xff]
      %v577 = vld [vmem:[#allocation3 + $0x10] sm:$0xff]
      %v578 = vld [vmem:[#allocation3 + $0x18] sm:$0xff]
      %v579 = vld [vmem:[#allocation3 + $0x20] sm:$0xff]
      %v580 = vld [vmem:[#allocation3 + $0x28] sm:$0xff]
      %v581 = vld [vmem:[#allocation3 + $0x30] sm:$0xff]
      %v582 = vld [vmem:[#allocation3 + $0x38] sm:$0xff]
      %v583 = vld [vmem:[#allocation3 + $0x40] sm:$0xf]
      %v584 = vld [vmem:[#allocation3 + $0x48] sm:$0xf]
      %vm585 = vcmask 293888
      %v587 = vsel %vm585, %v574, 0
      %vm589 = vcmask 1043456
      %v591 = vsel %vm589, %v583, 0
      %v594 = vsel %vm589, %v584, 0
      %v596 = vand.u32 %v576, 4294901760
      %597 = vmatprep.subr.mxu0 %v596
      %v598 = vand.u32 %v575, 4294901760
      %599 = vmatpush1.msra.mxu0 %v598
      %v600 = vand.u32 %v578, 4294901760
      %601 = vmatprep.subr.mxu0 %v600
      %v602 = vand.u32 %v577, 4294901760
      %603 = vmatpush1.msra.mxu0 %v602
      %v604 = vand.u32 %v580, 4294901760
      %605 = vmatprep.subr.mxu0 %v604
      %v606 = vand.u32 %v579, 4294901760
      %607 = vmatpush1.msra.mxu0 %v606
      %v608 = vand.u32 %v582, 4294901760
      %609 = vmatprep.subr.mxu0 %v608
      %v610 = vand.u32 %v581, 4294901760
      %611 = vmatpush1.msra.mxu0 %v610
      %v612 = vand.u32 %v594, 4294901760
      %613 = vmatprep.subr.mxu0 %v612
      %v614 = vand.u32 %v591, 4294901760
      %615 = vmatpush1.msra.mxu0 %v614
      %616 = vmatprep.subr.mxu0 0.0
      %617 = vmatpush1.msra.mxu0 0.0
      %618 = vmatprep.subr.mxu0 0.0
      %619 = vmatpush1.msra.mxu0 0.0
      %620 = vmatprep.subr.mxu0 0.0
      %621 = vmatpush1.msra.mxu0 0.0
      %622 = vmatprep.subr.mxu0 0.0
      %623 = vmatpush1.msra.mxu0 0.0
      %624 = vmatprep.subr.mxu0 0.0
      %625 = vmatpush1.msra.mxu0 0.0
      %626 = vmatprep.subr.mxu0 0.0
      %627 = vmatpush1.msra.mxu0 0.0
      %628 = vmatprep.subr.mxu0 0.0
      %629 = vmatpush1.msra.mxu0 0.0
      %630 = vmatprep.subr.mxu0 0.0
      %631 = vmatpush1.msra.mxu0 0.0
      %632 = vmatprep.subr.mxu0 0.0
      %633 = vmatpush1.msra.mxu0 0.0
      %634 = vmatprep.subr.mxu0 0.0
      %635 = vmatpush1.msra.mxu0 0.0
      %636 = vmatprep.subr.mxu0 0.0
      %637 = vmatpush1.msra.mxu0 0.0
      %638 = vmatprep.subr.mxu0 0.0
      %639 = vmatpush1.msra.mxu0 0.0
      %640 = vmatprep.subr.mxu0 0.0
      %641 = vmatpush1.msra.mxu0 0.0
      %642 = vmatprep.subr.mxu0 0.0
      %643 = vmatpush1.msra.mxu0 0.0
      %644 = vmatprep.subr.mxu0 0.0
      %645 = vmatpush1.msra.mxu0 0.0
      %646 = vmatprep.subr.mxu0 0.0
      %647 = vmatpush1.msra.mxu0 0.0
      %648 = vmatprep.subr.mxu0 0.0
      %649 = vmatpush1.msra.mxu0 0.0
      %650 = vmatprep.subr.mxu0 0.0
      %651 = vmatpush1.msra.mxu0 0.0
      %652 = vmatprep.subr.mxu0 0.0
      %653 = vmatpush1.msra.mxu0 0.0
      %654 = vmatprep.subr.mxu0 0.0
      %655 = vmatpush1.msra.mxu0 0.0
      %656 = vmatprep.subr.mxu0 0.0
      %657 = vmatpush1.msra.mxu0 0.0
      %658 = vmatprep.subr.mxu0 0.0
      %659 = vmatpush1.msra.mxu0 0.0
      %660 = vmatprep.subr.mxu0 0.0
      %661 = vmatpush1.msra.mxu0 0.0
      %662 = vmatprep.subr.mxu0 0.0
      %663 = vmatpush1.msra.mxu0 0.0
      %664 = vmatprep.subr.mxu0 0.0
      %665 = vmatpush1.msra.mxu0 0.0
      %666 = vmatprep.subr.mxu0 0.0
      %667 = vmatpush1.msra.mxu0 0.0
      %668 = vmatprep.subr.mxu0 0.0
      %669 = vmatpush1.msra.mxu0 0.0
      %670 = vmatprep.mubr.f32.mxu0 0.0
      %v671 = vand.u32 %v587, 4294901760
      %v672 = vsub.f32 %v587, %v671
      %v673 = vand.u32 %v672, 4294901760
      %v674 = vsub.f32 %v672, %v673
      %v675 = vand.u32 %v674, 4294901760
      %676 = vmatmul.mubr.f32.gmra.mrb[0].mxu0 %v675
      %v677 = vpop.f32.mrb[0].mxu0
      %v678 = vadd.f32 0.0, %v677
      %v679 = vpop.f32.mrb[0].mxu0
      %v680 = vadd.f32 0.0, %v679
      %681 = vdwg.mxu0
      %v682 = vand.u32 %v576, 4294901760
      %v683 = vsub.f32 %v576, %v682
      %v684 = vand.u32 %v683, 4294901760
      %v685 = vsub.f32 %v683, %v684
      %v686 = vand.u32 %v685, 4294901760
      %687 = vmatprep.subr.mxu0 %v686
      %v688 = vand.u32 %v575, 4294901760
      %v689 = vsub.f32 %v575, %v688
      %v690 = vand.u32 %v689, 4294901760
      %v691 = vsub.f32 %v689, %v690
      %v692 = vand.u32 %v691, 4294901760
      %693 = vmatpush1.msra.mxu0 %v692
      %v694 = vand.u32 %v578, 4294901760
      %v695 = vsub.f32 %v578, %v694
      %v696 = vand.u32 %v695, 4294901760
      %v697 = vsub.f32 %v695, %v696
      %v698 = vand.u32 %v697, 4294901760
      %699 = vmatprep.subr.mxu0 %v698
      %v700 = vand.u32 %v577, 4294901760
      %v701 = vsub.f32 %v577, %v700
      %v702 = vand.u32 %v701, 4294901760
      %v703 = vsub.f32 %v701, %v702
      %v704 = vand.u32 %v703, 4294901760
      %705 = vmatpush1.msra.mxu0 %v704
      %v706 = vand.u32 %v580, 4294901760
      %v707 = vsub.f32 %v580, %v706
      %v708 = vand.u32 %v707, 4294901760
      %v709 = vsub.f32 %v707, %v708
      %v710 = vand.u32 %v709, 4294901760
      %711 = vmatprep.subr.mxu0 %v710
      %v712 = vand.u32 %v579, 4294901760
      %v713 = vsub.f32 %v579, %v712
      %v714 = vand.u32 %v713, 4294901760
      %v715 = vsub.f32 %v713, %v714
      %v716 = vand.u32 %v715, 4294901760
      %717 = vmatpush1.msra.mxu0 %v716
      %v718 = vand.u32 %v582, 4294901760
      %v719 = vsub.f32 %v582, %v718
      %v720 = vand.u32 %v719, 4294901760
      %v721 = vsub.f32 %v719, %v720
      %v722 = vand.u32 %v721, 4294901760
      %723 = vmatprep.subr.mxu0 %v722
      %v724 = vand.u32 %v581, 4294901760
      %v725 = vsub.f32 %v581, %v724
      %v726 = vand.u32 %v725, 4294901760
      %v727 = vsub.f32 %v725, %v726
      %v728 = vand.u32 %v727, 4294901760
      %729 = vmatpush1.msra.mxu0 %v728
      %v730 = vand.u32 %v594, 4294901760
      %v731 = vsub.f32 %v594, %v730
      %v732 = vand.u32 %v731, 4294901760
      %v733 = vsub.f32 %v731, %v732
      %v734 = vand.u32 %v733, 4294901760
      %735 = vmatprep.subr.mxu0 %v734
      %v736 = vand.u32 %v591, 4294901760
      %v737 = vsub.f32 %v591, %v736
      %v738 = vand.u32 %v737, 4294901760
      %v739 = vsub.f32 %v737, %v738
      %v740 = vand.u32 %v739, 4294901760
      %741 = vmatpush1.msra.mxu0 %v740
      %742 = vmatprep.subr.mxu0 0.0
      %743 = vmatpush1.msra.mxu0 0.0
      %744 = vmatprep.subr.mxu0 0.0
      %745 = vmatpush1.msra.mxu0 0.0
      %746 = vmatprep.subr.mxu0 0.0
      %747 = vmatpush1.msra.mxu0 0.0
      %748 = vmatprep.subr.mxu0 0.0
      %749 = vmatpush1.msra.mxu0 0.0
      %750 = vmatprep.subr.mxu0 0.0
      %751 = vmatpush1.msra.mxu0 0.0
      %752 = vmatprep.subr.mxu0 0.0
      %753 = vmatpush1.msra.mxu0 0.0
      %754 = vmatprep.subr.mxu0 0.0
      %755 = vmatpush1.msra.mxu0 0.0
      %756 = vmatprep.subr.mxu0 0.0
      %757 = vmatpush1.msra.mxu0 0.0
      %758 = vmatprep.subr.mxu0 0.0
      %759 = vmatpush1.msra.mxu0 0.0
      %760 = vmatprep.subr.mxu0 0.0
      %761 = vmatpush1.msra.mxu0 0.0
      %762 = vmatprep.subr.mxu0 0.0
      %763 = vmatpush1.msra.mxu0 0.0
      %764 = vmatprep.subr.mxu0 0.0
      %765 = vmatpush1.msra.mxu0 0.0
      %766 = vmatprep.subr.mxu0 0.0
      %767 = vmatpush1.msra.mxu0 0.0
      %768 = vmatprep.subr.mxu0 0.0
      %769 = vmatpush1.msra.mxu0 0.0
      %770 = vmatprep.subr.mxu0 0.0
      %771 = vmatpush1.msra.mxu0 0.0
      %772 = vmatprep.subr.mxu0 0.0
      %773 = vmatpush1.msra.mxu0 0.0
      %774 = vmatprep.subr.mxu0 0.0
      %775 = vmatpush1.msra.mxu0 0.0
      %776 = vmatprep.subr.mxu0 0.0
      %777 = vmatpush1.msra.mxu0 0.0
      %778 = vmatprep.subr.mxu0 0.0
      %779 = vmatpush1.msra.mxu0 0.0
      %780 = vmatprep.subr.mxu0 0.0
      %781 = vmatpush1.msra.mxu0 0.0
      %782 = vmatprep.subr.mxu0 0.0
      %783 = vmatpush1.msra.mxu0 0.0
      %784 = vmatprep.subr.mxu0 0.0
      %785 = vmatpush1.msra.mxu0 0.0
      %786 = vmatprep.subr.mxu0 0.0
      %787 = vmatpush1.msra.mxu0 0.0
      %788 = vmatprep.subr.mxu0 0.0
      %789 = vmatpush1.msra.mxu0 0.0
      %790 = vmatprep.subr.mxu0 0.0
      %791 = vmatpush1.msra.mxu0 0.0
      %792 = vmatprep.subr.mxu0 0.0
      %793 = vmatpush1.msra.mxu0 0.0
      %794 = vmatprep.subr.mxu0 0.0
      %795 = vmatpush1.msra.mxu0 0.0
      %796 = vmatprep.mubr.f32.mxu0 0.0
      %v797 = vand.u32 %v587, 4294901760
      %798 = vmatmul.mubr.f32.gmra.mrb[0].mxu0 %v797
      %v799 = vpop.f32.mrb[0].mxu0
      %v800 = vadd.f32 %v678, %v799
      %v801 = vpop.f32.mrb[0].mxu0
      %v802 = vadd.f32 %v680, %v801
      %803 = vdwg.mxu0
      %v804 = vand.u32 %v576, 4294901760
      %v805 = vsub.f32 %v576, %v804
      %806 = vmatprep.subr.mxu0 %v805
      %v807 = vand.u32 %v575, 4294901760
      %v808 = vsub.f32 %v575, %v807
      %809 = vmatpush1.msra.mxu0 %v808
      %v810 = vand.u32 %v578, 4294901760
      %v811 = vsub.f32 %v578, %v810
      %812 = vmatprep.subr.mxu0 %v811
      %v813 = vand.u32 %v577, 4294901760
      %v814 = vsub.f32 %v577, %v813
      %815 = vmatpush1.msra.mxu0 %v814
      %v816 = vand.u32 %v580, 4294901760
      %v817 = vsub.f32 %v580, %v816
      %818 = vmatprep.subr.mxu0 %v817
      %v819 = vand.u32 %v579, 4294901760
      %v820 = vsub.f32 %v579, %v819
      %821 = vmatpush1.msra.mxu0 %v820
      %v822 = vand.u32 %v582, 4294901760
      %v823 = vsub.f32 %v582, %v822
      %824 = vmatprep.subr.mxu0 %v823
      %v825 = vand.u32 %v581, 4294901760
      %v826 = vsub.f32 %v581, %v825
      %827 = vmatpush1.msra.mxu0 %v826
      %v828 = vand.u32 %v594, 4294901760
      %v829 = vsub.f32 %v594, %v828
      %830 = vmatprep.subr.mxu0 %v829
      %v831 = vand.u32 %v591, 4294901760
      %v832 = vsub.f32 %v591, %v831
      %833 = vmatpush1.msra.mxu0 %v832
      %834 = vmatprep.subr.mxu0 0.0
      %835 = vmatpush1.msra.mxu0 0.0
      %836 = vmatprep.subr.mxu0 0.0
      %837 = vmatpush1.msra.mxu0 0.0
      %838 = vmatprep.subr.mxu0 0.0
      %839 = vmatpush1.msra.mxu0 0.0
      %840 = vmatprep.subr.mxu0 0.0
      %841 = vmatpush1.msra.mxu0 0.0
      %842 = vmatprep.subr.mxu0 0.0
      %843 = vmatpush1.msra.mxu0 0.0
      %844 = vmatprep.subr.mxu0 0.0
      %845 = vmatpush1.msra.mxu0 0.0
      %846 = vmatprep.subr.mxu0 0.0
      %847 = vmatpush1.msra.mxu0 0.0
      %848 = vmatprep.subr.mxu0 0.0
      %849 = vmatpush1.msra.mxu0 0.0
      %850 = vmatprep.subr.mxu0 0.0
      %851 = vmatpush1.msra.mxu0 0.0
      %852 = vmatprep.subr.mxu0 0.0
      %853 = vmatpush1.msra.mxu0 0.0
      %854 = vmatprep.subr.mxu0 0.0
      %855 = vmatpush1.msra.mxu0 0.0
      %856 = vmatprep.subr.mxu0 0.0
      %857 = vmatpush1.msra.mxu0 0.0
      %858 = vmatprep.subr.mxu0 0.0
      %859 = vmatpush1.msra.mxu0 0.0
      %860 = vmatprep.subr.mxu0 0.0
      %861 = vmatpush1.msra.mxu0 0.0
      %862 = vmatprep.subr.mxu0 0.0
      %863 = vmatpush1.msra.mxu0 0.0
      %864 = vmatprep.subr.mxu0 0.0
      %865 = vmatpush1.msra.mxu0 0.0
      %866 = vmatprep.subr.mxu0 0.0
      %867 = vmatpush1.msra.mxu0 0.0
      %868 = vmatprep.subr.mxu0 0.0
      %869 = vmatpush1.msra.mxu0 0.0
      %870 = vmatprep.subr.mxu0 0.0
      %871 = vmatpush1.msra.mxu0 0.0
      %872 = vmatprep.subr.mxu0 0.0
      %873 = vmatpush1.msra.mxu0 0.0
      %874 = vmatprep.subr.mxu0 0.0
      %875 = vmatpush1.msra.mxu0 0.0
      %876 = vmatprep.subr.mxu0 0.0
      %877 = vmatpush1.msra.mxu0 0.0
      %878 = vmatprep.subr.mxu0 0.0
      %879 = vmatpush1.msra.mxu0 0.0
      %880 = vmatprep.subr.mxu0 0.0
      %881 = vmatpush1.msra.mxu0 0.0
      %882 = vmatprep.subr.mxu0 0.0
      %883 = vmatpush1.msra.mxu0 0.0
      %884 = vmatprep.subr.mxu0 0.0
      %885 = vmatpush1.msra.mxu0 0.0
      %886 = vmatprep.subr.mxu0 0.0
      %887 = vmatpush1.msra.mxu0 0.0
      %888 = vmatprep.mubr.f32.mxu0 0.0
      %v889 = vand.u32 %v587, 4294901760
      %v890 = vsub.f32 %v587, %v889
      %891 = vmatmul.mubr.f32.gmra.mrb[0].mxu0 %v890
      %v892 = vpop.f32.mrb[0].mxu0
      %v893 = vadd.f32 %v800, %v892
      %v894 = vpop.f32.mrb[0].mxu0
      %v895 = vadd.f32 %v802, %v894
      %896 = vdwg.mxu0
      %v897 = vand.u32 %v576, 4294901760
      %898 = vmatprep.subr.mxu0 %v897
      %v899 = vand.u32 %v575, 4294901760
      %900 = vmatpush1.msra.mxu0 %v899
      %v901 = vand.u32 %v578, 4294901760
      %902 = vmatprep.subr.mxu0 %v901
      %v903 = vand.u32 %v577, 4294901760
      %904 = vmatpush1.msra.mxu0 %v903
      %v905 = vand.u32 %v580, 4294901760
      %906 = vmatprep.subr.mxu0 %v905
      %v907 = vand.u32 %v579, 4294901760
      %908 = vmatpush1.msra.mxu0 %v907
      %v909 = vand.u32 %v582, 4294901760
      %910 = vmatprep.subr.mxu0 %v909
      %v911 = vand.u32 %v581, 4294901760
      %912 = vmatpush1.msra.mxu0 %v911
      %v913 = vand.u32 %v594, 4294901760
      %914 = vmatprep.subr.mxu0 %v913
      %v915 = vand.u32 %v591, 4294901760
      %916 = vmatpush1.msra.mxu0 %v915
      %917 = vmatprep.subr.mxu0 0.0
      %918 = vmatpush1.msra.mxu0 0.0
      %919 = vmatprep.subr.mxu0 0.0
      %920 = vmatpush1.msra.mxu0 0.0
      %921 = vmatprep.subr.mxu0 0.0
      %922 = vmatpush1.msra.mxu0 0.0
      %923 = vmatprep.subr.mxu0 0.0
      %924 = vmatpush1.msra.mxu0 0.0
      %925 = vmatprep.subr.mxu0 0.0
      %926 = vmatpush1.msra.mxu0 0.0
      %927 = vmatprep.subr.mxu0 0.0
      %928 = vmatpush1.msra.mxu0 0.0
      %929 = vmatprep.subr.mxu0 0.0
      %930 = vmatpush1.msra.mxu0 0.0
      %931 = vmatprep.subr.mxu0 0.0
      %932 = vmatpush1.msra.mxu0 0.0
      %933 = vmatprep.subr.mxu0 0.0
      %934 = vmatpush1.msra.mxu0 0.0
      %935 = vmatprep.subr.mxu0 0.0
      %936 = vmatpush1.msra.mxu0 0.0
      %937 = vmatprep.subr.mxu0 0.0
      %938 = vmatpush1.msra.mxu0 0.0
      %939 = vmatprep.subr.mxu0 0.0
      %940 = vmatpush1.msra.mxu0 0.0
      %941 = vmatprep.subr.mxu0 0.0
      %942 = vmatpush1.msra.mxu0 0.0
      %943 = vmatprep.subr.mxu0 0.0
      %944 = vmatpush1.msra.mxu0 0.0
      %945 = vmatprep.subr.mxu0 0.0
      %946 = vmatpush1.msra.mxu0 0.0
      %947 = vmatprep.subr.mxu0 0.0
      %948 = vmatpush1.msra.mxu0 0.0
      %949 = vmatprep.subr.mxu0 0.0
      %950 = vmatpush1.msra.mxu0 0.0
      %951 = vmatprep.subr.mxu0 0.0
      %952 = vmatpush1.msra.mxu0 0.0
      %953 = vmatprep.subr.mxu0 0.0
      %954 = vmatpush1.msra.mxu0 0.0
      %955 = vmatprep.subr.mxu0 0.0
      %956 = vmatpush1.msra.mxu0 0.0
      %957 = vmatprep.subr.mxu0 0.0
      %958 = vmatpush1.msra.mxu0 0.0
      %959 = vmatprep.subr.mxu0 0.0
      %960 = vmatpush1.msra.mxu0 0.0
      %961 = vmatprep.subr.mxu0 0.0
      %962 = vmatpush1.msra.mxu0 0.0
      %963 = vmatprep.subr.mxu0 0.0
      %964 = vmatpush1.msra.mxu0 0.0
      %965 = vmatprep.subr.mxu0 0.0
      %966 = vmatpush1.msra.mxu0 0.0
      %967 = vmatprep.subr.mxu0 0.0
      %968 = vmatpush1.msra.mxu0 0.0
      %969 = vmatprep.subr.mxu0 0.0
      %970 = vmatpush1.msra.mxu0 0.0
      %971 = vmatprep.mubr.f32.mxu0 0.0
      %v972 = vand.u32 %v587, 4294901760
      %v973 = vsub.f32 %v587, %v972
      %v974 = vand.u32 %v973, 4294901760
      %975 = vmatmul.mubr.f32.gmra.mrb[0].mxu0 %v974
      %v976 = vpop.f32.mrb[0].mxu0
      %v977 = vadd.f32 %v893, %v976
      %v978 = vpop.f32.mrb[0].mxu0
      %v979 = vadd.f32 %v895, %v978
      %980 = vdwg.mxu0
      %v981 = vand.u32 %v576, 4294901760
      %v982 = vsub.f32 %v576, %v981
      %v983 = vand.u32 %v982, 4294901760
      %984 = vmatprep.subr.mxu0 %v983
      %v985 = vand.u32 %v575, 4294901760
      %v986 = vsub.f32 %v575, %v985
      %v987 = vand.u32 %v986, 4294901760
      %988 = vmatpush1.msra.mxu0 %v987
      %v989 = vand.u32 %v578, 4294901760
      %v990 = vsub.f32 %v578, %v989
      %v991 = vand.u32 %v990, 4294901760
      %992 = vmatprep.subr.mxu0 %v991
      %v993 = vand.u32 %v577, 4294901760
      %v994 = vsub.f32 %v577, %v993
      %v995 = vand.u32 %v994, 4294901760
      %996 = vmatpush1.msra.mxu0 %v995
      %v997 = vand.u32 %v580, 4294901760
      %v998 = vsub.f32 %v580, %v997
      %v999 = vand.u32 %v998, 4294901760
      %1000 = vmatprep.subr.mxu0 %v999
      %v1001 = vand.u32 %v579, 4294901760
      %v1002 = vsub.f32 %v579, %v1001
      %v1003 = vand.u32 %v1002, 4294901760
      %1004 = vmatpush1.msra.mxu0 %v1003
      %v1005 = vand.u32 %v582, 4294901760
      %v1006 = vsub.f32 %v582, %v1005
      %v1007 = vand.u32 %v1006, 4294901760
      %1008 = vmatprep.subr.mxu0 %v1007
      %v1009 = vand.u32 %v581, 4294901760
      %v1010 = vsub.f32 %v581, %v1009
      %v1011 = vand.u32 %v1010, 4294901760
      %1012 = vmatpush1.msra.mxu0 %v1011
      %v1013 = vand.u32 %v594, 4294901760
      %v1014 = vsub.f32 %v594, %v1013
      %v1015 = vand.u32 %v1014, 4294901760
      %1016 = vmatprep.subr.mxu0 %v1015
      %v1017 = vand.u32 %v591, 4294901760
      %v1018 = vsub.f32 %v591, %v1017
      %v1019 = vand.u32 %v1018, 4294901760
      %1020 = vmatpush1.msra.mxu0 %v1019
      %1021 = vmatprep.subr.mxu0 0.0
      %1022 = vmatpush1.msra.mxu0 0.0
      %1023 = vmatprep.subr.mxu0 0.0
      %1024 = vmatpush1.msra.mxu0 0.0
      %1025 = vmatprep.subr.mxu0 0.0
      %1026 = vmatpush1.msra.mxu0 0.0
      %1027 = vmatprep.subr.mxu0 0.0
      %1028 = vmatpush1.msra.mxu0 0.0
      %1029 = vmatprep.subr.mxu0 0.0
      %1030 = vmatpush1.msra.mxu0 0.0
      %1031 = vmatprep.subr.mxu0 0.0
      %1032 = vmatpush1.msra.mxu0 0.0
      %1033 = vmatprep.subr.mxu0 0.0
      %1034 = vmatpush1.msra.mxu0 0.0
      %1035 = vmatprep.subr.mxu0 0.0
      %1036 = vmatpush1.msra.mxu0 0.0
      %1037 = vmatprep.subr.mxu0 0.0
      %1038 = vmatpush1.msra.mxu0 0.0
      %1039 = vmatprep.subr.mxu0 0.0
      %1040 = vmatpush1.msra.mxu0 0.0
      %1041 = vmatprep.subr.mxu0 0.0
      %1042 = vmatpush1.msra.mxu0 0.0
      %1043 = vmatprep.subr.mxu0 0.0
      %1044 = vmatpush1.msra.mxu0 0.0
      %1045 = vmatprep.subr.mxu0 0.0
      %1046 = vmatpush1.msra.mxu0 0.0
      %1047 = vmatprep.subr.mxu0 0.0
      %1048 = vmatpush1.msra.mxu0 0.0
      %1049 = vmatprep.subr.mxu0 0.0
      %1050 = vmatpush1.msra.mxu0 0.0
      %1051 = vmatprep.subr.mxu0 0.0
      %1052 = vmatpush1.msra.mxu0 0.0
      %1053 = vmatprep.subr.mxu0 0.0
      %1054 = vmatpush1.msra.mxu0 0.0
      %1055 = vmatprep.subr.mxu0 0.0
      %1056 = vmatpush1.msra.mxu0 0.0
      %1057 = vmatprep.subr.mxu0 0.0
      %1058 = vmatpush1.msra.mxu0 0.0
      %1059 = vmatprep.subr.mxu0 0.0
      %1060 = vmatpush1.msra.mxu0 0.0
      %1061 = vmatprep.subr.mxu0 0.0
      %1062 = vmatpush1.msra.mxu0 0.0
      %1063 = vmatprep.subr.mxu0 0.0
      %1064 = vmatpush1.msra.mxu0 0.0
      %1065 = vmatprep.subr.mxu0 0.0
      %1066 = vmatpush1.msra.mxu0 0.0
      %1067 = vmatprep.subr.mxu0 0.0
      %1068 = vmatpush1.msra.mxu0 0.0
      %1069 = vmatprep.subr.mxu0 0.0
      %1070 = vmatpush1.msra.mxu0 0.0
      %1071 = vmatprep.subr.mxu0 0.0
      %1072 = vmatpush1.msra.mxu0 0.0
      %1073 = vmatprep.subr.mxu0 0.0
      %1074 = vmatpush1.msra.mxu0 0.0
      %1075 = vmatprep.mubr.f32.mxu0 0.0
      %v1076 = vand.u32 %v587, 4294901760
      %1077 = vmatmul.mubr.f32.gmra.mrb[0].mxu0 %v1076
      %v1078 = vpop.f32.mrb[0].mxu0
      %v1079 = vadd.f32 %v977, %v1078
      %v1080 = vpop.f32.mrb[0].mxu0
      %v1081 = vadd.f32 %v979, %v1080
      %1082 = vdwg.mxu0
      %v1083 = vand.u32 %v576, 4294901760
      %1084 = vmatprep.subr.mxu0 %v1083
      %v1085 = vand.u32 %v575, 4294901760
      %1086 = vmatpush1.msra.mxu0 %v1085
      %v1087 = vand.u32 %v578, 4294901760
      %1088 = vmatprep.subr.mxu0 %v1087
      %v1089 = vand.u32 %v577, 4294901760
      %1090 = vmatpush1.msra.mxu0 %v1089
      %v1091 = vand.u32 %v580, 4294901760
      %1092 = vmatprep.subr.mxu0 %v1091
      %v1093 = vand.u32 %v579, 4294901760
      %1094 = vmatpush1.msra.mxu0 %v1093
      %v1095 = vand.u32 %v582, 4294901760
      %1096 = vmatprep.subr.mxu0 %v1095
      %v1097 = vand.u32 %v581, 4294901760
      %1098 = vmatpush1.msra.mxu0 %v1097
      %v1099 = vand.u32 %v594, 4294901760
      %1100 = vmatprep.subr.mxu0 %v1099
      %v1101 = vand.u32 %v591, 4294901760
      %1102 = vmatpush1.msra.mxu0 %v1101
      %1103 = vmatprep.subr.mxu0 0.0
      %1104 = vmatpush1.msra.mxu0 0.0
      %1105 = vmatprep.subr.mxu0 0.0
      %1106 = vmatpush1.msra.mxu0 0.0
      %1107 = vmatprep.subr.mxu0 0.0
      %1108 = vmatpush1.msra.mxu0 0.0
      %1109 = vmatprep.subr.mxu0 0.0
      %1110 = vmatpush1.msra.mxu0 0.0
      %1111 = vmatprep.subr.mxu0 0.0
      %1112 = vmatpush1.msra.mxu0 0.0
      %1113 = vmatprep.subr.mxu0 0.0
      %1114 = vmatpush1.msra.mxu0 0.0
      %1115 = vmatprep.subr.mxu0 0.0
      %1116 = vmatpush1.msra.mxu0 0.0
      %1117 = vmatprep.subr.mxu0 0.0
      %1118 = vmatpush1.msra.mxu0 0.0
      %1119 = vmatprep.subr.mxu0 0.0
      %1120 = vmatpush1.msra.mxu0 0.0
      %1121 = vmatprep.subr.mxu0 0.0
      %1122 = vmatpush1.msra.mxu0 0.0
      %1123 = vmatprep.subr.mxu0 0.0
      %1124 = vmatpush1.msra.mxu0 0.0
      %1125 = vmatprep.subr.mxu0 0.0
      %1126 = vmatpush1.msra.mxu0 0.0
      %1127 = vmatprep.subr.mxu0 0.0
      %1128 = vmatpush1.msra.mxu0 0.0
      %1129 = vmatprep.subr.mxu0 0.0
      %1130 = vmatpush1.msra.mxu0 0.0
      %1131 = vmatprep.subr.mxu0 0.0
      %1132 = vmatpush1.msra.mxu0 0.0
      %1133 = vmatprep.subr.mxu0 0.0
      %1134 = vmatpush1.msra.mxu0 0.0
      %1135 = vmatprep.subr.mxu0 0.0
      %1136 = vmatpush1.msra.mxu0 0.0
      %1137 = vmatprep.subr.mxu0 0.0
      %1138 = vmatpush1.msra.mxu0 0.0
      %1139 = vmatprep.subr.mxu0 0.0
      %1140 = vmatpush1.msra.mxu0 0.0
      %1141 = vmatprep.subr.mxu0 0.0
      %1142 = vmatpush1.msra.mxu0 0.0
      %1143 = vmatprep.subr.mxu0 0.0
      %1144 = vmatpush1.msra.mxu0 0.0
      %1145 = vmatprep.subr.mxu0 0.0
      %1146 = vmatpush1.msra.mxu0 0.0
      %1147 = vmatprep.subr.mxu0 0.0
      %1148 = vmatpush1.msra.mxu0 0.0
      %1149 = vmatprep.subr.mxu0 0.0
      %1150 = vmatpush1.msra.mxu0 0.0
      %1151 = vmatprep.subr.mxu0 0.0
      %1152 = vmatpush1.msra.mxu0 0.0
      %1153 = vmatprep.subr.mxu0 0.0
      %1154 = vmatpush1.msra.mxu0 0.0
      %1155 = vmatprep.subr.mxu0 0.0
      %1156 = vmatpush1.msra.mxu0 0.0
      %1157 = vmatprep.mubr.f32.mxu0 0.0
      %v1158 = vand.u32 %v587, 4294901760
      %1159 = vmatmul.mubr.f32.gmra.mrb[0].mxu0 %v1158
      %v1160 = vpop.f32.mrb[0].mxu0
      %v1161 = vadd.f32 %v1079, %v1160
      %v1162 = vpop.f32.mrb[0].mxu0
      %v1163 = vadd.f32 %v1081, %v1162
      %1164 = vdwg.mxu0
      %v1165 = vsel %vm589, %v1161, 0.0
      %v1166 = vsel %vm589, %v1163, 0.0
      %v1167 = vadd.f32 %v1165, %v1166
      %1168 = vadd.xlane.f32.xlu0 %v1167
      %v1169 = vpop.xlane.xlu0 %1168
      %v1170 = vmul.f32 %v1169, 0.00390625
      %v1171 = vsub.f32 %v1161, %v1170
      %v1172 = vsub.f32 %v1163, %v1170
      %1173 = vst.msk [vmem:[%s262] sm:$0xf] %vm267, %v1169
      %v1174 = vmul.f32 %v1171, %v1171
      %v1175 = vmul.f32 %v1172, %v1172
      %v1176 = vsel %vm589, %v1174, 0.0
      %v1177 = vsel %vm589, %v1175, 0.0
      %v1178 = vadd.f32 %v1176, %v1177
      %1179 = vadd.xlane.f32.xlu0 %v1178
      %v1180 = vpop.xlane.xlu0 %1179
      %1181 = vst.msk [vmem:[%s262] sm:$0xf] %vm274, %v1180
      %v1184 = vcombine.low %v1161, %v1163
      %1186 = vst [vmem:[%s258] sm:$0xff] %v1184
      %p1187 = scmp.lt.s32.totalorder %s18, 1
      %s1188 = scalar_select %p1187, %s18, 1
      %s1189 = smul.addr %s1188, 2
      %s1190 = smul.addr %s1189, 4
      %s1191 = scalar_lea.vmem %s5, %s1190
      %p1192 = scmp.lt.s32.totalorder %s18, 1
      %s1193 = scalar_select %p1192, %s18, 1
      %s1194 = smul.addr %s1193, 4
      %s1195 = scalar_lea.vmem %s6, %s1194
      // Predicated region
      $region41: #{basic_block_forward.4} parent=39 // pred_check
        %p1196 = pneg %p146
      $region42: #{basic_block_forward.4} parent=39 // pred_check_branch
        %1198 = sbr.rel (%p1196) target = $region44
      $region43: #{basic_block_forward.4} parent=39 // pred_region
        _
      $region44: #{basic_block_forward.4} parent=39 // pred_fallthru
        _
      // Predicated region
      $region45: #{basic_block_forward.4} parent=39 // pred_check
        %p1199 = pneg %p172
      $region46: #{basic_block_forward.4} parent=39 // pred_check_branch
        %1201 = sbr.rel (%p1199) target = $region48
      $region47: #{basic_block_forward.4} parent=39 // pred_region
        _
      $region48: #{basic_block_forward.4} parent=39 // pred_fallthru
        _
    $region40: #{basic_block_forward.4} parent=5 // pred_fallthru
      _
    %p1202 = scmp.le.s32.totalorder 2, %s13
    // Predicated region
    $region49: #{basic_block_forward.4} parent=5 // pred_check
      %p1203 = pneg %p1202
    $region50: #{basic_block_forward.4} parent=5 // pred_check_branch
      %1205 = sbr.rel (%p1203) target = $region52
    $region51: #{basic_block_forward.4} parent=5 // pred_region
      %s1206 = ssub.s32 %s13, 2
      // Predicated region
      $region53: #{basic_block_forward.4} parent=51 // pred_check
        %p1207 = pneg %p152
      $region54: #{basic_block_forward.4} parent=51 // pred_check_branch
        %1209 = sbr.rel (%p1207) target = $region56
      $region55: #{basic_block_forward.4} parent=51 // pred_region
        %p1210 = scmp.lt.s32.totalorder %s19, 1
        %s1211 = scalar_select %p1210, %s19, 1
        %s1212 = smul.addr %s1211, 2
        %s1213 = smul.addr %s1212, 4
        %s1214 = scalar_lea.vmem %s5, %s1213
      $region56: #{basic_block_forward.4} parent=51 // pred_fallthru
        _
      // Predicated region
      $region57: #{basic_block_forward.4} parent=51 // pred_check
        %p1215 = pneg %p178
      $region58: #{basic_block_forward.4} parent=51 // pred_check_branch
        %1217 = sbr.rel (%p1215) target = $region60
      $region59: #{basic_block_forward.4} parent=51 // pred_region
        %p1218 = scmp.lt.s32.totalorder %s19, 1
        %s1219 = scalar_select %p1218, %s19, 1
        %s1220 = smul.addr %s1219, 4
        %s1221 = scalar_lea.vmem %s6, %s1220
      $region60: #{basic_block_forward.4} parent=51 // pred_fallthru
        _
    $region52: #{basic_block_forward.4} parent=5 // pred_fallthru
      _
  $region6: #{basic_block_forward.4} parent=0 // loop_footer
    %s17 = sadd.s32 1, %s13
  $region7: #{basic_block_forward.4} parent=0 // loop_footer_branch
    %12 = sbr.rel target = $region3
  $region8: #{basic_block_forward.4} parent=0 // loop_exit
    _

</llo_original>
